<compile_context>
chip_gen: v5e
topology: v5e:2x2
jax: 0.10.0
libtpu: 0.0.40
codegen_flags: <defaults>
</compile_context>

<pallas_src>
import jax
import jax.numpy as jnp
from jax.experimental import pallas as pl
from jax.experimental.pallas import tpu as pltpu

_BN_EPS = 1e-5
_PAD = 128  # decoder hidden-channel padding -> lane-dense vregs for the matmul chain


# --------------------------------------------------------------------------- #
# Kernels
# --------------------------------------------------------------------------- #
def _encoder_pool_kernel(x_ref, w1t, b1, w2t, b2, w3t, b3, pooled_ref):
    """Transposed PointNetfeat trunk on one point tile + running max-pool.

    Grid = (split, B, tiles_per_split); the tile axis is a reduction ("arbitrary")
    with the pooled (1024, 1) output block resident across it.
    """
    t = pl.program_id(2)

    x = x_ref[0]                                                      # (3, tile) f32
    h = jnp.maximum(
        jnp.dot(w1t[...], x, preferred_element_type=jnp.float32) + b1[...], 0.0)
    h = jnp.maximum(
        jnp.dot(w2t[...], h.astype(jnp.bfloat16),
                preferred_element_type=jnp.float32) + b2[...], 0.0)
    h = jnp.dot(w3t[...], h.astype(jnp.bfloat16),
                preferred_element_type=jnp.float32) + b3[...]         # (1024, tile) f32

    tile_max = jnp.max(h, axis=1, keepdims=True)                      # (1024, 1)

    @pl.when(t == 0)
    def _():
        pooled_ref[0, 0] = jnp.full_like(pooled_ref[0, 0], -jnp.inf)

    pooled_ref[0, 0] = jnp.maximum(pooled_ref[0, 0], tile_max)


def _decoder_kernel(rg_ref, fr_ref, v1g, c1, v2, c2, v3, c3, v4, c4, out_ref):
    """PointGenCon with the concat folded into a split first layer.

    layer1 pre-activation = rand_grid-FMA + (feat @ V1[2:]) + bias; the feature
    contribution (fr_ref) is one row per (primitive, batch), broadcast over points.
    Hidden channels are zero-padded to 128 (padded lanes stay exactly 0); only the
    3 real output channels are stored to HBM.
    """
    rg = rg_ref[0, 0]                                                 # (tile, 2) f32
    fc = fr_ref[0, 0]                                                 # (1, 128)  f32
    v1 = v1g[0]                                                       # (2, 128)  f32

    # K=2 "matmul" as two VPU broadcast-FMAs (MXU would waste nearly all its passes).
    d = rg[:, 0:1] * v1[0:1, :] + rg[:, 1:2] * v1[1:2, :] + fc + c1[0]
    d = jnp.maximum(d, 0.0)                                           # (tile, 128)
    d = jnp.maximum(
        jnp.dot(d.astype(jnp.bfloat16), v2[0],
                preferred_element_type=jnp.float32) + c2[0], 0.0)
    d = jnp.maximum(
        jnp.dot(d.astype(jnp.bfloat16), v3[0],
                preferred_element_type=jnp.float32) + c3[0], 0.0)
    d = jnp.tanh(
        jnp.dot(d.astype(jnp.bfloat16), v4[0],
                preferred_element_type=jnp.float32) + c4[0])          # (tile, 128)

    out_ref[0] = d[:, :3]                                             # only real channels


# --------------------------------------------------------------------------- #
# Wrappers (pallas_call plumbing)
# --------------------------------------------------------------------------- #
def _pick_tile(n, cap):
    """Largest tile <= cap that divides n and is a multiple of 8."""
    assert n % 8 == 0, f"points per primitive must be a multiple of 8, got {n}"
    t = min(n, (cap // 8) * 8)
    while n % t:
        t -= 8
    return t


def encode_pooled(x_b3n, enc, *, tile_n=1024):
    """x_b3n: (B, 3, N) (PyTorch NCL) -> per-batch max-pooled (B, 1024) feature."""
    B, C, N = x_b3n.shape
    assert C == 3

    if N <= tile_n:
        tile, n_pad = N, N                      # single block == full dim (always legal)
    else:
        tile = (tile_n // 128) * 128            # tile < N: last block dim must be %128
        n_pad = -(-N // tile) * tile
    if n_pad != N:
        # pad with copies of the first point so the max-pool is unaffected
        pad = jnp.broadcast_to(x_b3n[:, :, :1], (B, 3, n_pad - N))
        x_b3n = jnp.concatenate([x_b3n, pad], axis=2)

    tiles = n_pad // tile
    split = 2 if (tiles % 2 == 0 and tiles >= 2) else 1   # keep both v7x TCs busy
    tps = tiles // split

    weights = [enc[k] for k in ("w1t", "b1", "w2t", "b2", "w3t", "b3")]

    pooled = pl.pallas_call(
        _encoder_pool_kernel,
        out_shape=jax.ShapeDtypeStruct((split, B, 1024, 1), jnp.float32),
        grid=(split, B, tps),
        in_specs=[pl.BlockSpec((1, 3, tile), lambda s, b, t: (b, 0, s * tps + t))]
                 + [pl.BlockSpec(w.shape, lambda s, b, t: (0, 0)) for w in weights],
        out_specs=pl.BlockSpec((1, 1, 1024, 1), lambda s, b, t: (s, b, 0, 0)),
        compiler_params=pltpu.CompilerParams(
            dimension_semantics=("parallel", "parallel", "arbitrary")),
    )(x_b3n, *weights)

    return jnp.max(pooled, axis=0)[:, :, 0]                           # (B, 1024)


def decode(rand_grid, feat_row, dec, *, tile_n=1024):
    """rand_grid: (P, B, Np, 2); feat_row: (P, B, 1, 128) -> (B, P*Np, 3)."""
    P, B, Np, _ = rand_grid.shape
    tile = _pick_tile(Np, tile_n)
    nt = Np // tile
    wkeys = ("v1g", "c1", "v2", "c2", "v3", "c3", "v4", "c4")
    weights = [dec[k] for k in wkeys]

    out = pl.pallas_call(
        _decoder_kernel,
        out_shape=jax.ShapeDtypeStruct((B, P * Np, 3), jnp.float32),
        grid=(P, B, nt),
        in_specs=[pl.BlockSpec((1, 1, tile, 2), lambda p, b, t: (p, b, t, 0)),
                  pl.BlockSpec((1, 1, 1, _PAD), lambda p, b, t: (p, b, 0, 0))]
                 + [pl.BlockSpec((1,) + dec[k].shape[1:],
                                 lambda p, b, t: (p, 0, 0)) for k in wkeys],
        # primitive-major concat + final (2,1) transpose folded into the out_spec
        out_specs=pl.BlockSpec((1, tile, 3), lambda p, b, t: (b, p * nt + t, 0)),
        compiler_params=pltpu.CompilerParams(
            dimension_semantics=("parallel", "parallel", "parallel")),
    )(rand_grid, feat_row, *weights)
    return out


def svr_surskenet_forward(x_b3n, rand_grid, params):
    """x_b3n: (B, 3, N) point cloud (PyTorch NCL); rand_grid: (P, B, Np, 2) in [0,1)."""
    enc, dec = params["enc"], params["dec"]

    pooled = encode_pooled(x_b3n, enc)                                # (B, 1024)
    # Final encoder Linear+BN+ReLU on all B rows at once (tiny M=B matmul -> plain XLA).
    feat = jax.nn.relu(pooled @ enc["wl"] + enc["bl"])                # (B, bottleneck)

    # Split first decoder matmul:  y@V1 == rand_grid-part + feat @ V1[2:]
    feat_row = jnp.einsum("bc,pcd->pbd", feat, dec["v1f"])            # (P, B, 128)
    P, B = feat_row.shape[:2]

    # (B, nb_primitives * Np, 3): torch.cat(outs, dim=2).transpose(2, 1) layout.
    return decode(rand_grid, feat_row.reshape(P, B, 1, _PAD), dec)


# --------------------------------------------------------------------------- #
# Deterministic parameter construction (synthetic weights; BN folded, padded, bf16)
# --------------------------------------------------------------------------- #
def init_params(key, bottleneck_size=64, nb_primitives=2):
    keys = iter(jax.random.split(key, 256))

    def conv_w(cin, cout):
        return jax.random.normal(next(keys), (cin, cout), jnp.float32) / (cin ** 0.5)

    def bias(c):
        return 0.1 * jax.random.normal(next(keys), (c,), jnp.float32)

    def bn(c):
        gamma = 1.0 + 0.1 * jax.random.normal(next(keys), (c,), jnp.float32)
        beta = 0.1 * jax.random.normal(next(keys), (c,), jnp.float32)
        mean = 0.1 * jax.random.normal(next(keys), (c,), jnp.float32)
        var = 0.5 + jnp.abs(jax.random.normal(next(keys), (c,), jnp.float32))
        return gamma, beta, mean, var

    def fold(w, conv_bias, bn_p):
        # inference Conv1d(k=1)+BN -> single affine: x@W_f + b_f  (scale folded into W)
        gamma, beta, mean, var = bn_p
        scale = gamma / jnp.sqrt(var + _BN_EPS)
        return w * scale[None, :], beta - mean * scale + conv_bias * scale

    def pad2(a, rows, cols):
        return jnp.zeros((rows, cols), a.dtype).at[:a.shape[0], :a.shape[1]].set(a)

    # ----- encoder (transposed layout: out-channels on sublanes) -----
    enc = {}
    w, b = fold(conv_w(3, 64), bias(64), bn(64))
    enc["w1t"], enc["b1"] = w.T, b[:, None]                           # K=3 layer: keep f32
    w, b = fold(conv_w(64, 128), bias(128), bn(128))
    enc["w2t"], enc["b2"] = w.T.astype(jnp.bfloat16), b[:, None]
    w, b = fold(conv_w(128, 1024), bias(1024), bn(1024))
    enc["w3t"], enc["b3"] = w.T.astype(jnp.bfloat16), b[:, None]
    w, b = fold(conv_w(1024, bottleneck_size), bias(bottleneck_size), bn(bottleneck_size))
    enc["wl"], enc["bl"] = w, b[None, :]                              # plain XLA dot

    # ----- decoders: PointGenCon(bottleneck = 2 + bottleneck_size), padded to 128 -----
    bneck = 2 + bottleneck_size
    ch2, ch3 = bneck // 2, bneck // 4
    lists = {k: [] for k in ("v1g", "v1f", "c1", "v2", "c2", "v3", "c3", "v4", "c4")}
    for _ in range(nb_primitives):
        w, b = fold(conv_w(bneck, bneck), bias(bneck), bn(bneck))
        lists["v1g"].append(pad2(w[:2, :], 2, _PAD))                  # grid part (K=2, f32)
        lists["v1f"].append(pad2(w[2:, :], bottleneck_size, _PAD))    # feature part (XLA)
        lists["c1"].append(pad2(b[None, :], 1, _PAD))
        w, b = fold(conv_w(bneck, ch2), bias(ch2), bn(ch2))
        lists["v2"].append(pad2(w, _PAD, _PAD).astype(jnp.bfloat16))
        lists["c2"].append(pad2(b[None, :], 1, _PAD))
        w, b = fold(conv_w(ch2, ch3), bias(ch3), bn(ch3))
        lists["v3"].append(pad2(w, _PAD, _PAD).astype(jnp.bfloat16))
        lists["c3"].append(pad2(b[None, :], 1, _PAD))
        lists["v4"].append(pad2(conv_w(ch3, 3), _PAD, _PAD).astype(jnp.bfloat16))
        lists["c4"].append(pad2(bias(3)[None, :], 1, _PAD))
    dec = {k: jnp.stack(v) for k, v in lists.items()}

    return {"enc": enc, "dec": dec}


# --------------------------------------------------------------------------- #
if __name__ == "__main__":
    # small shapes: batch=2, 64 encoder points, bottleneck=64, 2 primitives x 64 points
    B, N_in, bottleneck, P, Np = 2, 64, 64, 2, 64
    key = jax.random.PRNGKey(0)
    kx, kg, kp = jax.random.split(key, 3)

    x = jax.random.normal(kx, (B, 3, N_in), jnp.float32)              # PyTorch NCL layout
    # torch.cuda.FloatTensor(B, 2, Np).uniform_(0, 1) per primitive -> deterministic jax uniform
    rand_grid = jax.random.uniform(kg, (P, B, Np, 2), jnp.float32)
    params = init_params(kp, bottleneck_size=bottleneck, nb_primitives=P)

    fwd = jax.jit(lambda a, g: svr_surskenet_forward(a, g, params))
    out = jax.block_until_ready(fwd(x, rand_grid))

    assert out.shape == (B, P * Np, 3), out.shape
    assert bool(jnp.all(jnp.isfinite(out)))
    print("KERNEL_OK")
</pallas_src>

<mosaic_0001>
module attributes {stable_mosaic.version = 11 : i64} {
  func.func @_encoder_pool_kernel(%arg0: i32, %arg1: i32, %arg2: i32, %arg3: memref<1x3x64xf32, #tpu.memory_space<vmem>>, %arg4: memref<64x3xf32, #tpu.memory_space<vmem>>, %arg5: memref<64x1xf32, #tpu.memory_space<vmem>>, %arg6: memref<128x64xbf16, #tpu.memory_space<vmem>>, %arg7: memref<128x1xf32, #tpu.memory_space<vmem>>, %arg8: memref<1024x128xbf16, #tpu.memory_space<vmem>>, %arg9: memref<1024x1xf32, #tpu.memory_space<vmem>>, %arg10: memref<1x1x1024x1xf32, #tpu.memory_space<vmem>>) attributes {dimension_semantics = [#tpu.dimension_semantics<parallel>, #tpu.dimension_semantics<parallel>, #tpu.dimension_semantics<arbitrary>], iteration_bounds = array<i64: 1, 2, 1>, scalar_prefetch = 0 : i64, scratch_operands = 0 : i64, tpu.core_type = #tpu.core_type<tc>, window_params = [{transform_indices = @transform_0, window_bounds = array<i64: 1, 3, 64>}, {pipeline_mode = #tpu.pipeline_mode<synchronous>, transform_indices = @transform_1, window_bounds = array<i64: 64, 3>}, {pipeline_mode = #tpu.pipeline_mode<synchronous>, transform_indices = @transform_2, window_bounds = array<i64: 64, 1>}, {pipeline_mode = #tpu.pipeline_mode<synchronous>, transform_indices = @transform_3, window_bounds = array<i64: 128, 64>}, {pipeline_mode = #tpu.pipeline_mode<synchronous>, transform_indices = @transform_4, window_bounds = array<i64: 128, 1>}, {pipeline_mode = #tpu.pipeline_mode<synchronous>, transform_indices = @transform_5, window_bounds = array<i64: 1024, 128>}, {pipeline_mode = #tpu.pipeline_mode<synchronous>, transform_indices = @transform_6, window_bounds = array<i64: 1024, 1>}, {transform_indices = @transform_7, window_bounds = array<i64: 1, 1, 1024, 1>}]} {
    %c0 = arith.constant 0 : index
    %c0_0 = arith.constant 0 : index
    %c0_1 = arith.constant 0 : index
    %0 = vector.load %arg3[%c0, %c0_0, %c0_1] : memref<1x3x64xf32, #tpu.memory_space<vmem>>, vector<1x3x64xf32>
    %1 = vector.shape_cast %0 : vector<1x3x64xf32> to vector<3x64xf32>
    %c0_2 = arith.constant 0 : index
    %c0_3 = arith.constant 0 : index
    %2 = vector.load %arg4[%c0_2, %c0_3] : memref<64x3xf32, #tpu.memory_space<vmem>>, vector<64x3xf32>
    %cst = arith.constant dense<0.000000e+00> : vector<64x64xf32>
    %3 = tpu.matmul %2, %1, %cst {dimension_numbers = #tpu.dot_dimension_numbers<[1], [0], [0], [1], [0, 0, 1, 1], [], []>} : vector<64x3xf32>, vector<3x64xf32>, vector<64x64xf32> -> vector<64x64xf32>
    %c0_4 = arith.constant 0 : index
    %c0_5 = arith.constant 0 : index
    %4 = vector.load %arg5[%c0_4, %c0_5] : memref<64x1xf32, #tpu.memory_space<vmem>>, vector<64x1xf32>
    %5 = vector.broadcast %4 : vector<64x1xf32> to vector<64x64xf32>
    %6 = arith.addf %3, %5 : vector<64x64xf32>
    %cst_6 = arith.constant 0.000000e+00 : f32
    %7 = vector.broadcast %cst_6 : f32 to vector<64x64xf32>
    %8 = arith.maximumf %6, %7 : vector<64x64xf32>
    %c0_7 = arith.constant 0 : index
    %c0_8 = arith.constant 0 : index
    %9 = vector.load %arg6[%c0_7, %c0_8] : memref<128x64xbf16, #tpu.memory_space<vmem>>, vector<128x64xbf16>
    %10 = arith.truncf %8 : vector<64x64xf32> to vector<64x64xbf16>
    %cst_9 = arith.constant dense<0.000000e+00> : vector<128x64xf32>
    %11 = tpu.matmul %9, %10, %cst_9 {dimension_numbers = #tpu.dot_dimension_numbers<[1], [0], [0], [1], [0, 0, 1, 1], [], []>} : vector<128x64xbf16>, vector<64x64xbf16>, vector<128x64xf32> -> vector<128x64xf32>
    %c0_10 = arith.constant 0 : index
    %c0_11 = arith.constant 0 : index
    %12 = vector.load %arg7[%c0_10, %c0_11] : memref<128x1xf32, #tpu.memory_space<vmem>>, vector<128x1xf32>
    %13 = vector.broadcast %12 : vector<128x1xf32> to vector<128x64xf32>
    %14 = arith.addf %11, %13 : vector<128x64xf32>
    %cst_12 = arith.constant 0.000000e+00 : f32
    %15 = vector.broadcast %cst_12 : f32 to vector<128x64xf32>
    %16 = arith.maximumf %14, %15 : vector<128x64xf32>
    %c0_13 = arith.constant 0 : index
    %c0_14 = arith.constant 0 : index
    %17 = vector.load %arg8[%c0_13, %c0_14] : memref<1024x128xbf16, #tpu.memory_space<vmem>>, vector<1024x128xbf16>
    %18 = arith.truncf %16 : vector<128x64xf32> to vector<128x64xbf16>
    %cst_15 = arith.constant dense<0.000000e+00> : vector<1024x64xf32>
    %19 = tpu.matmul %17, %18, %cst_15 {dimension_numbers = #tpu.dot_dimension_numbers<[1], [0], [0], [1], [0, 0, 1, 1], [], []>} : vector<1024x128xbf16>, vector<128x64xbf16>, vector<1024x64xf32> -> vector<1024x64xf32>
    %c0_16 = arith.constant 0 : index
    %c0_17 = arith.constant 0 : index
    %20 = vector.load %arg9[%c0_16, %c0_17] : memref<1024x1xf32, #tpu.memory_space<vmem>>, vector<1024x1xf32>
    %21 = vector.broadcast %20 : vector<1024x1xf32> to vector<1024x64xf32>
    %22 = arith.addf %19, %21 : vector<1024x64xf32>
    %cst_18 = arith.constant dense<0xFF800000> : vector<1024xf32>
    %23 = vector.multi_reduction <maximumf>, %22, %cst_18 [1] : vector<1024x64xf32> to vector<1024xf32>
    %24 = vector.shape_cast %23 : vector<1024xf32> to vector<1024x1xf32>
    %c0_i32 = arith.constant 0 : i32
    %25 = arith.cmpi eq, %arg2, %c0_i32 : i32
    %26 = arith.extui %25 : i1 to i32
    %c0_i32_19 = arith.constant 0 : i32
    %27 = arith.cmpi ne, %26, %c0_i32_19 : i32
    scf.if %27 {
      %cst_28 = arith.constant 0xFF800000 : f32
      %34 = vector.broadcast %cst_28 : f32 to vector<1024x1xf32>
      %c0_29 = arith.constant 0 : index
      %c0_30 = arith.constant 0 : index
      %c0_31 = arith.constant 0 : index
      %c0_32 = arith.constant 0 : index
      %35 = vector.load %arg10[%c0_29, %c0_30, %c0_31, %c0_32] : memref<1x1x1024x1xf32, #tpu.memory_space<vmem>>, vector<1x1x1024x1xf32>
      %36 = vector.shape_cast %35 : vector<1x1x1024x1xf32> to vector<1024x1xf32>
      %37 = vector.shape_cast %34 : vector<1024x1xf32> to vector<1x1x1024x1xf32>
      tpu.vector_store %arg10[%c0_29, %c0_30, %c0_31, %c0_32], %37 {strides = array<i32>} : memref<1x1x1024x1xf32, #tpu.memory_space<vmem>>, vector<1x1x1024x1xf32>,
    } else {
    }
    %c0_20 = arith.constant 0 : index
    %c0_21 = arith.constant 0 : index
    %c0_22 = arith.constant 0 : index
    %c0_23 = arith.constant 0 : index
    %28 = vector.load %arg10[%c0_20, %c0_21, %c0_22, %c0_23] : memref<1x1x1024x1xf32, #tpu.memory_space<vmem>>, vector<1x1x1024x1xf32>
    %29 = vector.shape_cast %28 : vector<1x1x1024x1xf32> to vector<1024x1xf32>
    %30 = arith.maximumf %29, %24 : vector<1024x1xf32>
    %c0_24 = arith.constant 0 : index
    %c0_25 = arith.constant 0 : index
    %c0_26 = arith.constant 0 : index
    %c0_27 = arith.constant 0 : index
    %31 = vector.load %arg10[%c0_24, %c0_25, %c0_26, %c0_27] : memref<1x1x1024x1xf32, #tpu.memory_space<vmem>>, vector<1x1x1024x1xf32>
    %32 = vector.shape_cast %31 : vector<1x1x1024x1xf32> to vector<1024x1xf32>
    %33 = vector.shape_cast %30 : vector<1024x1xf32> to vector<1x1x1024x1xf32>
    tpu.vector_store %arg10[%c0_24, %c0_25, %c0_26, %c0_27], %33 {strides = array<i32>} : memref<1x1x1024x1xf32, #tpu.memory_space<vmem>>, vector<1x1x1024x1xf32>,
    return
  }
  func.func @transform_0(%arg0: i32, %arg1: i32, %arg2: i32) -> (i32, i32, i32) {
    %c1_i32 = arith.constant 1 : i32
    %0 = arith.muli %arg0, %c1_i32 : i32
    %1 = arith.addi %0, %arg2 : i32
    %c0_i32 = arith.constant 0 : i32
    %c0_i32_0 = arith.constant 0 : i32
    return %arg1, %c0_i32, %1 : i32, i32, i32
  }
  func.func @transform_1(%arg0: i32, %arg1: i32, %arg2: i32) -> (i32, i32) {
    %c0_i32 = arith.constant 0 : i32
    %c0_i32_0 = arith.constant 0 : i32
    %c0_i32_1 = arith.constant 0 : i32
    return %c0_i32, %c0_i32_0 : i32, i32
  }
  func.func @transform_2(%arg0: i32, %arg1: i32, %arg2: i32) -> (i32, i32) {
    %c0_i32 = arith.constant 0 : i32
    %c0_i32_0 = arith.constant 0 : i32
    %c0_i32_1 = arith.constant 0 : i32
    return %c0_i32, %c0_i32_0 : i32, i32
  }
  func.func @transform_3(%arg0: i32, %arg1: i32, %arg2: i32) -> (i32, i32) {
    %c0_i32 = arith.constant 0 : i32
    %c0_i32_0 = arith.constant 0 : i32
    %c0_i32_1 = arith.constant 0 : i32
    return %c0_i32, %c0_i32_0 : i32, i32
  }
  func.func @transform_4(%arg0: i32, %arg1: i32, %arg2: i32) -> (i32, i32) {
    %c0_i32 = arith.constant 0 : i32
    %c0_i32_0 = arith.constant 0 : i32
    %c0_i32_1 = arith.constant 0 : i32
    return %c0_i32, %c0_i32_0 : i32, i32
  }
  func.func @transform_5(%arg0: i32, %arg1: i32, %arg2: i32) -> (i32, i32) {
    %c0_i32 = arith.constant 0 : i32
    %c0_i32_0 = arith.constant 0 : i32
    %c0_i32_1 = arith.constant 0 : i32
    return %c0_i32, %c0_i32_0 : i32, i32
  }
  func.func @transform_6(%arg0: i32, %arg1: i32, %arg2: i32) -> (i32, i32) {
    %c0_i32 = arith.constant 0 : i32
    %c0_i32_0 = arith.constant 0 : i32
    %c0_i32_1 = arith.constant 0 : i32
    return %c0_i32, %c0_i32_0 : i32, i32
  }
  func.func @transform_7(%arg0: i32, %arg1: i32, %arg2: i32) -> (i32, i32, i32, i32) {
    %c0_i32 = arith.constant 0 : i32
    %c0_i32_0 = arith.constant 0 : i32
    %c0_i32_1 = arith.constant 0 : i32
    return %arg0, %arg1, %c0_i32, %c0_i32_0 : i32, i32, i32, i32
  }
}

module attributes {stable_mosaic.version = 11 : i64} {
  func.func @_decoder_kernel(%arg0: i32, %arg1: i32, %arg2: i32, %arg3: memref<1x1x64x2xf32, #tpu.memory_space<vmem>>, %arg4: memref<1x1x1x128xf32, #tpu.memory_space<vmem>>, %arg5: memref<1x2x128xf32, #tpu.memory_space<vmem>>, %arg6: memref<1x1x128xf32, #tpu.memory_space<vmem>>, %arg7: memref<1x128x128xbf16, #tpu.memory_space<vmem>>, %arg8: memref<1x1x128xf32, #tpu.memory_space<vmem>>, %arg9: memref<1x128x128xbf16, #tpu.memory_space<vmem>>, %arg10: memref<1x1x128xf32, #tpu.memory_space<vmem>>, %arg11: memref<1x128x128xbf16, #tpu.memory_space<vmem>>, %arg12: memref<1x1x128xf32, #tpu.memory_space<vmem>>, %arg13: memref<1x64x3xf32, #tpu.memory_space<vmem>>) attributes {dimension_semantics = [#tpu.dimension_semantics<parallel>, #tpu.dimension_semantics<parallel>, #tpu.dimension_semantics<parallel>], iteration_bounds = array<i64: 2, 2, 1>, scalar_prefetch = 0 : i64, scratch_operands = 0 : i64, tpu.core_type = #tpu.core_type<tc>, window_params = [{transform_indices = @transform_0, window_bounds = array<i64: 1, 1, 64, 2>}, {transform_indices = @transform_1, window_bounds = array<i64: 1, 1, 1, 128>}, {transform_indices = @transform_2, window_bounds = array<i64: 1, 2, 128>}, {transform_indices = @transform_3, window_bounds = array<i64: 1, 1, 128>}, {transform_indices = @transform_4, window_bounds = array<i64: 1, 128, 128>}, {transform_indices = @transform_5, window_bounds = array<i64: 1, 1, 128>}, {transform_indices = @transform_6, window_bounds = array<i64: 1, 128, 128>}, {transform_indices = @transform_7, window_bounds = array<i64: 1, 1, 128>}, {transform_indices = @transform_8, window_bounds = array<i64: 1, 128, 128>}, {transform_indices = @transform_9, window_bounds = array<i64: 1, 1, 128>}, {transform_indices = @transform_10, window_bounds = array<i64: 1, 64, 3>}]} {
    %c0 = arith.constant 0 : index
    %c0_0 = arith.constant 0 : index
    %c0_1 = arith.constant 0 : index
    %c0_2 = arith.constant 0 : index
    %0 = vector.load %arg3[%c0, %c0_0, %c0_1, %c0_2] : memref<1x1x64x2xf32, #tpu.memory_space<vmem>>, vector<1x1x64x2xf32>
    %1 = vector.shape_cast %0 : vector<1x1x64x2xf32> to vector<64x2xf32>
    %c0_3 = arith.constant 0 : index
    %c0_4 = arith.constant 0 : index
    %c0_5 = arith.constant 0 : index
    %c0_6 = arith.constant 0 : index
    %2 = vector.load %arg4[%c0_3, %c0_4, %c0_5, %c0_6] : memref<1x1x1x128xf32, #tpu.memory_space<vmem>>, vector<1x1x1x128xf32>
    %3 = vector.shape_cast %2 : vector<1x1x1x128xf32> to vector<1x128xf32>
    %c0_7 = arith.constant 0 : index
    %c0_8 = arith.constant 0 : index
    %c0_9 = arith.constant 0 : index
    %4 = vector.load %arg5[%c0_7, %c0_8, %c0_9] : memref<1x2x128xf32, #tpu.memory_space<vmem>>, vector<1x2x128xf32>
    %5 = vector.shape_cast %4 : vector<1x2x128xf32> to vector<2x128xf32>
    %6 = vector.extract_strided_slice %1 {offsets = [0, 0], sizes = [64, 1], strides = [1, 1]} : vector<64x2xf32> to vector<64x1xf32>
    %7 = vector.extract_strided_slice %5 {offsets = [0, 0], sizes = [1, 128], strides = [1, 1]} : vector<2x128xf32> to vector<1x128xf32>
    %8 = vector.broadcast %6 : vector<64x1xf32> to vector<64x128xf32>
    %9 = vector.broadcast %7 : vector<1x128xf32> to vector<64x128xf32>
    %10 = arith.mulf %8, %9 : vector<64x128xf32>
    %11 = vector.extract_strided_slice %1 {offsets = [0, 1], sizes = [64, 1], strides = [1, 1]} : vector<64x2xf32> to vector<64x1xf32>
    %12 = vector.extract_strided_slice %5 {offsets = [1, 0], sizes = [1, 128], strides = [1, 1]} : vector<2x128xf32> to vector<1x128xf32>
    %13 = vector.broadcast %11 : vector<64x1xf32> to vector<64x128xf32>
    %14 = vector.broadcast %12 : vector<1x128xf32> to vector<64x128xf32>
    %15 = arith.mulf %13, %14 : vector<64x128xf32>
    %16 = arith.addf %10, %15 : vector<64x128xf32>
    %17 = vector.broadcast %3 : vector<1x128xf32> to vector<64x128xf32>
    %18 = arith.addf %16, %17 : vector<64x128xf32>
    %c0_10 = arith.constant 0 : index
    %c0_11 = arith.constant 0 : index
    %c0_12 = arith.constant 0 : index
    %19 = vector.load %arg6[%c0_10, %c0_11, %c0_12] : memref<1x1x128xf32, #tpu.memory_space<vmem>>, vector<1x1x128xf32>
    %20 = vector.shape_cast %19 : vector<1x1x128xf32> to vector<1x128xf32>
    %21 = vector.broadcast %20 : vector<1x128xf32> to vector<64x128xf32>
    %22 = arith.addf %18, %21 : vector<64x128xf32>
    %cst = arith.constant 0.000000e+00 : f32
    %23 = vector.broadcast %cst : f32 to vector<64x128xf32>
    %24 = arith.maximumf %22, %23 : vector<64x128xf32>
    %25 = arith.truncf %24 : vector<64x128xf32> to vector<64x128xbf16>
    %c0_13 = arith.constant 0 : index
    %c0_14 = arith.constant 0 : index
    %c0_15 = arith.constant 0 : index
    %26 = vector.load %arg7[%c0_13, %c0_14, %c0_15] : memref<1x128x128xbf16, #tpu.memory_space<vmem>>, vector<1x128x128xbf16>
    %27 = vector.shape_cast %26 : vector<1x128x128xbf16> to vector<128x128xbf16>
    %cst_16 = arith.constant dense<0.000000e+00> : vector<64x128xf32>
    %28 = tpu.matmul %25, %27, %cst_16 {dimension_numbers = #tpu.dot_dimension_numbers<[1], [0], [0], [1], [0, 0, 1, 1], [], []>} : vector<64x128xbf16>, vector<128x128xbf16>, vector<64x128xf32> -> vector<64x128xf32>
    %c0_17 = arith.constant 0 : index
    %c0_18 = arith.constant 0 : index
    %c0_19 = arith.constant 0 : index
    %29 = vector.load %arg8[%c0_17, %c0_18, %c0_19] : memref<1x1x128xf32, #tpu.memory_space<vmem>>, vector<1x1x128xf32>
    %30 = vector.shape_cast %29 : vector<1x1x128xf32> to vector<1x128xf32>
    %31 = vector.broadcast %30 : vector<1x128xf32> to vector<64x128xf32>
    %32 = arith.addf %28, %31 : vector<64x128xf32>
    %cst_20 = arith.constant 0.000000e+00 : f32
    %33 = vector.broadcast %cst_20 : f32 to vector<64x128xf32>
    %34 = arith.maximumf %32, %33 : vector<64x128xf32>
    %35 = arith.truncf %34 : vector<64x128xf32> to vector<64x128xbf16>
    %c0_21 = arith.constant 0 : index
    %c0_22 = arith.constant 0 : index
    %c0_23 = arith.constant 0 : index
    %36 = vector.load %arg9[%c0_21, %c0_22, %c0_23] : memref<1x128x128xbf16, #tpu.memory_space<vmem>>, vector<1x128x128xbf16>
    %37 = vector.shape_cast %36 : vector<1x128x128xbf16> to vector<128x128xbf16>
    %cst_24 = arith.constant dense<0.000000e+00> : vector<64x128xf32>
    %38 = tpu.matmul %35, %37, %cst_24 {dimension_numbers = #tpu.dot_dimension_numbers<[1], [0], [0], [1], [0, 0, 1, 1], [], []>} : vector<64x128xbf16>, vector<128x128xbf16>, vector<64x128xf32> -> vector<64x128xf32>
    %c0_25 = arith.constant 0 : index
    %c0_26 = arith.constant 0 : index
    %c0_27 = arith.constant 0 : index
    %39 = vector.load %arg10[%c0_25, %c0_26, %c0_27] : memref<1x1x128xf32, #tpu.memory_space<vmem>>, vector<1x1x128xf32>
    %40 = vector.shape_cast %39 : vector<1x1x128xf32> to vector<1x128xf32>
    %41 = vector.broadcast %40 : vector<1x128xf32> to vector<64x128xf32>
    %42 = arith.addf %38, %41 : vector<64x128xf32>
    %cst_28 = arith.constant 0.000000e+00 : f32
    %43 = vector.broadcast %cst_28 : f32 to vector<64x128xf32>
    %44 = arith.maximumf %42, %43 : vector<64x128xf32>
    %45 = arith.truncf %44 : vector<64x128xf32> to vector<64x128xbf16>
    %c0_29 = arith.constant 0 : index
    %c0_30 = arith.constant 0 : index
    %c0_31 = arith.constant 0 : index
    %46 = vector.load %arg11[%c0_29, %c0_30, %c0_31] : memref<1x128x128xbf16, #tpu.memory_space<vmem>>, vector<1x128x128xbf16>
    %47 = vector.shape_cast %46 : vector<1x128x128xbf16> to vector<128x128xbf16>
    %cst_32 = arith.constant dense<0.000000e+00> : vector<64x128xf32>
    %48 = tpu.matmul %45, %47, %cst_32 {dimension_numbers = #tpu.dot_dimension_numbers<[1], [0], [0], [1], [0, 0, 1, 1], [], []>} : vector<64x128xbf16>, vector<128x128xbf16>, vector<64x128xf32> -> vector<64x128xf32>
    %c0_33 = arith.constant 0 : index
    %c0_34 = arith.constant 0 : index
    %c0_35 = arith.constant 0 : index
    %49 = vector.load %arg12[%c0_33, %c0_34, %c0_35] : memref<1x1x128xf32, #tpu.memory_space<vmem>>, vector<1x1x128xf32>
    %50 = vector.shape_cast %49 : vector<1x1x128xf32> to vector<1x128xf32>
    %51 = vector.broadcast %50 : vector<1x128xf32> to vector<64x128xf32>
    %52 = arith.addf %48, %51 : vector<64x128xf32>
    %53 = math.tanh %52 : vector<64x128xf32>
    %54 = vector.extract_strided_slice %53 {offsets = [0, 0], sizes = [64, 3], strides = [1, 1]} : vector<64x128xf32> to vector<64x3xf32>
    %c0_36 = arith.constant 0 : index
    %c0_37 = arith.constant 0 : index
    %c0_38 = arith.constant 0 : index
    %55 = vector.load %arg13[%c0_36, %c0_37, %c0_38] : memref<1x64x3xf32, #tpu.memory_space<vmem>>, vector<1x64x3xf32>
    %56 = vector.shape_cast %55 : vector<1x64x3xf32> to vector<64x3xf32>
    %57 = vector.shape_cast %54 : vector<64x3xf32> to vector<1x64x3xf32>
    tpu.vector_store %arg13[%c0_36, %c0_37, %c0_38], %57 {strides = array<i32>} : memref<1x64x3xf32, #tpu.memory_space<vmem>>, vector<1x64x3xf32>,
    return
  }
  func.func @transform_0(%arg0: i32, %arg1: i32, %arg2: i32) -> (i32, i32, i32, i32) {
    %c0_i32 = arith.constant 0 : i32
    %c0_i32_0 = arith.constant 0 : i32
    return %arg0, %arg1, %arg2, %c0_i32 : i32, i32, i32, i32
  }
  func.func @transform_1(%arg0: i32, %arg1: i32, %arg2: i32) -> (i32, i32, i32, i32) {
    %c0_i32 = arith.constant 0 : i32
    %c0_i32_0 = arith.constant 0 : i32
    %c0_i32_1 = arith.constant 0 : i32
    return %arg0, %arg1, %c0_i32, %c0_i32_0 : i32, i32, i32, i32
  }
  func.func @transform_2(%arg0: i32, %arg1: i32, %arg2: i32) -> (i32, i32, i32) {
    %c0_i32 = arith.constant 0 : i32
    %c0_i32_0 = arith.constant 0 : i32
    %c0_i32_1 = arith.constant 0 : i32
    return %arg0, %c0_i32, %c0_i32_0 : i32, i32, i32
  }
  func.func @transform_3(%arg0: i32, %arg1: i32, %arg2: i32) -> (i32, i32, i32) {
    %c0_i32 = arith.constant 0 : i32
    %c0_i32_0 = arith.constant 0 : i32
    %c0_i32_1 = arith.constant 0 : i32
    return %arg0, %c0_i32, %c0_i32_0 : i32, i32, i32
  }
  func.func @transform_4(%arg0: i32, %arg1: i32, %arg2: i32) -> (i32, i32, i32) {
    %c0_i32 = arith.constant 0 : i32
    %c0_i32_0 = arith.constant 0 : i32
    %c0_i32_1 = arith.constant 0 : i32
    return %arg0, %c0_i32, %c0_i32_0 : i32, i32, i32
  }
  func.func @transform_5(%arg0: i32, %arg1: i32, %arg2: i32) -> (i32, i32, i32) {
    %c0_i32 = arith.constant 0 : i32
    %c0_i32_0 = arith.constant 0 : i32
    %c0_i32_1 = arith.constant 0 : i32
    return %arg0, %c0_i32, %c0_i32_0 : i32, i32, i32
  }
  func.func @transform_6(%arg0: i32, %arg1: i32, %arg2: i32) -> (i32, i32, i32) {
    %c0_i32 = arith.constant 0 : i32
    %c0_i32_0 = arith.constant 0 : i32
    %c0_i32_1 = arith.constant 0 : i32
    return %arg0, %c0_i32, %c0_i32_0 : i32, i32, i32
  }
  func.func @transform_7(%arg0: i32, %arg1: i32, %arg2: i32) -> (i32, i32, i32) {
    %c0_i32 = arith.constant 0 : i32
    %c0_i32_0 = arith.constant 0 : i32
    %c0_i32_1 = arith.constant 0 : i32
    return %arg0, %c0_i32, %c0_i32_0 : i32, i32, i32
  }
  func.func @transform_8(%arg0: i32, %arg1: i32, %arg2: i32) -> (i32, i32, i32) {
    %c0_i32 = arith.constant 0 : i32
    %c0_i32_0 = arith.constant 0 : i32
    %c0_i32_1 = arith.constant 0 : i32
    return %arg0, %c0_i32, %c0_i32_0 : i32, i32, i32
  }
  func.func @transform_9(%arg0: i32, %arg1: i32, %arg2: i32) -> (i32, i32, i32) {
    %c0_i32 = arith.constant 0 : i32
    %c0_i32_0 = arith.constant 0 : i32
    %c0_i32_1 = arith.constant 0 : i32
    return %arg0, %c0_i32, %c0_i32_0 : i32, i32, i32
  }
  func.func @transform_10(%arg0: i32, %arg1: i32, %arg2: i32) -> (i32, i32, i32) {
    %c1_i32 = arith.constant 1 : i32
    %0 = arith.muli %arg0, %c1_i32 : i32
    %1 = arith.addi %0, %arg2 : i32
    %c0_i32 = arith.constant 0 : i32
    %c0_i32_0 = arith.constant 0 : i32
    return %arg1, %1, %c0_i32 : i32, i32, i32
  }
}

</mosaic_0001>

<llo_original>
// kernel: _lambda_.3
$region0: #{_lambda_.3}
  #allocation0 [shape = 'u32[]', space=smem, size = 0x4, offset = 0x4, fixed_abs, tag = 'smem constant byte address 0x4 - core index']
  #allocation1 [shape = 'u32[72,128]{1,0:T(1,128)}', space=vmem, size = 0x9000, scoped, tag = 'internal scratch']
  %s0 = inlined_call_operand.vmem [shape: f32[2,2,64,2], index: 0, kind: input, shape index: {}]
  %s1 = inlined_call_operand.vmem [shape: f32[2,2,1,128], index: 1, kind: input, shape index: {}]
  %s2 = inlined_call_operand.vmem [shape: f32[2,2,128], index: 2, kind: input, shape index: {}]
  %s3 = inlined_call_operand.vmem [shape: f32[2,1,128], index: 3, kind: input, shape index: {}]
  %s4 = inlined_call_operand.vmem [shape: bf16[2,128,128], index: 4, kind: input, shape index: {}]
  %s5 = inlined_call_operand.vmem [shape: f32[2,1,128], index: 5, kind: input, shape index: {}]
  %s6 = inlined_call_operand.vmem [shape: bf16[2,128,128], index: 6, kind: input, shape index: {}]
  %s7 = inlined_call_operand.vmem [shape: f32[2,1,128], index: 7, kind: input, shape index: {}]
  %s8 = inlined_call_operand.vmem [shape: bf16[2,128,128], index: 8, kind: input, shape index: {}]
  %s9 = inlined_call_operand.vmem [shape: f32[2,1,128], index: 9, kind: input, shape index: {}]
  %s10 = inlined_call_operand.vmem [shape: f32[2,128,3], index: 10, kind: output, shape index: {}]
  %s11 = sld [smem:[#allocation0]]
  $region73: #{_lambda_.3} parent=0
    _
  %s13 = ssub.s32 1, %s11
  %s14 = scalar_select 0, %s13, %s11
  loop: start=0, step=1, limit=6
  $region2: #{_lambda_.3} parent=0 // loop_pre_header
    _
  $region3: #{_lambda_.3} parent=0 // loop_header
    %s16 = sphi 0, %s20
    %p17 = scmp.ge.s32.totalorder %s16, 6
    %s23 = sphi 0, %s42
    %s24 = sphi 0, %s38
    %s25 = sphi 0, %s34
    %s26 = sphi 0, %s23
    %s27 = sphi 0, %s24
    %s28 = sphi 0, %s25
    %s29 = sphi 0, %s26
    %s30 = sphi 0, %s27
    %s31 = sphi 0, %s28
    %s49 = sphi 0, %s51
    %s52 = sphi 0, %s49
    %s53 = sphi 0, %s52
    %s69 = sphi 0, %s53
    %s77 = sphi 0, %s79
    %s80 = sphi 0, %s77
    %s81 = sphi 0, %s80
    %s97 = sphi 0, %s81
    %s103 = sphi 0, %s105
    %s106 = sphi 0, %s103
    %s107 = sphi 0, %s106
    %s123 = sphi 0, %s107
    %s129 = sphi 0, %s131
    %s132 = sphi 0, %s129
    %s133 = sphi 0, %s132
    %s149 = sphi 0, %s133
    %s155 = sphi 0, %s157
    %s158 = sphi 0, %s155
    %s159 = sphi 0, %s158
    %s175 = sphi 0, %s159
    %s181 = sphi 0, %s183
    %s184 = sphi 0, %s181
    %s185 = sphi 0, %s184
    %s201 = sphi 0, %s185
    %s207 = sphi 0, %s209
    %s210 = sphi 0, %s207
    %s211 = sphi 0, %s210
    %s227 = sphi 0, %s211
    %s233 = sphi 0, %s235
    %s236 = sphi 0, %s233
    %s237 = sphi 0, %s236
    %s253 = sphi 0, %s237
    %s259 = sphi 0, %s261
    %s262 = sphi 0, %s259
    %s263 = sphi 0, %s262
    %s279 = sphi 0, %s263
    %s285 = sphi 0, %s287
    %s288 = sphi 0, %s285
    %s289 = sphi 0, %s288
    %s305 = sphi 0, %s289
    %s315 = sphi 0, %s317
    %s318 = sphi 0, %s315
    %s319 = sphi 0, %s318
    %s335 = sphi 0, %s319
  $region4: #{_lambda_.3} parent=0 // loop_header_branch
    %19 = sbr.rel (%p17) target = $region8
  $region5: #{_lambda_.3} parent=0 // loop_body
    %s21 = ssub.s32 %s16, 1
    %s22 = ssub.s32 %s16, 2
    %s32 = sadd.s32 1, %s25
    %p33 = scmp.ge.s32.totalorder %s32, 1
    %s34 = scalar_select %p33, 0, %s32
    %s35 = sadd.s32 1, %s24
    %s36 = scalar_select %p33, %s35, %s24
    %p37 = scmp.ge.s32.totalorder %s36, 2
    %s38 = scalar_select %p37, 0, %s36
    %s39 = sadd.s32 1, %s23
    %s40 = scalar_select %p37, %s39, %s23
    %p41 = scmp.ge.s32.totalorder %s40, 2
    %s42 = scalar_select %p41, 0, %s40
    %s43 = ssub.s32 %s23, %s42
    %s44 = ssub.s32 %s24, %s38
    %s45 = sor.u32 %s43, %s44
    %s46 = ssub.s32 %s25, %s34
    %s47 = sor.u32 %s45, %s46
    %p48 = scmp.eq.s32.totalorder %s47, 0
    %s50 = sadd.s32 %s49, 1
    %s51 = scalar_select %p48, %s49, %s50
    %p54 = pneg %p48
    %p55 = scmp.eq.s32.totalorder %s16, 3
    %p56 = por %p54, %p55
    %p57 = scmp.ne.s32.totalorder %s49, %s52
    %p58 = scmp.eq.s32.totalorder %s16, 0
    %p59 = por %p57, %p58
    %p60 = scmp.ne.s32.totalorder %s49, %s52
    %p61 = scmp.eq.s32.totalorder %s21, 3
    %p62 = por %p60, %p61
    %p63 = scmp.ne.s32.totalorder %s52, %s53
    %p64 = scmp.eq.s32.totalorder %s21, 0
    %p65 = por %p63, %p64
    %p66 = scmp.ne.s32.totalorder %s52, %s53
    %p67 = scmp.eq.s32.totalorder %s22, 3
    %p68 = por %p66, %p67
    %p70 = scmp.ne.s32.totalorder %s53, %s69
    %p71 = scmp.eq.s32.totalorder %s22, 0
    %p72 = por %p70, %p71
    %s73 = ssub.s32 %s23, %s42
    %s74 = ssub.s32 %s24, %s38
    %s75 = sor.u32 %s73, %s74
    %p76 = scmp.eq.s32.totalorder %s75, 0
    %s78 = sadd.s32 %s77, 1
    %s79 = scalar_select %p76, %s77, %s78
    %p82 = pneg %p76
    %p83 = scmp.eq.s32.totalorder %s16, 3
    %p84 = por %p82, %p83
    %p85 = scmp.ne.s32.totalorder %s77, %s80
    %p86 = scmp.eq.s32.totalorder %s16, 0
    %p87 = por %p85, %p86
    %p88 = scmp.ne.s32.totalorder %s77, %s80
    %p89 = scmp.eq.s32.totalorder %s21, 3
    %p90 = por %p88, %p89
    %p91 = scmp.ne.s32.totalorder %s80, %s81
    %p92 = scmp.eq.s32.totalorder %s21, 0
    %p93 = por %p91, %p92
    %p94 = scmp.ne.s32.totalorder %s80, %s81
    %p95 = scmp.eq.s32.totalorder %s22, 3
    %p96 = por %p94, %p95
    %p98 = scmp.ne.s32.totalorder %s81, %s97
    %p99 = scmp.eq.s32.totalorder %s22, 0
    %p100 = por %p98, %p99
    %s101 = ssub.s32 %s23, %s42
    %p102 = scmp.eq.s32.totalorder %s101, 0
    %s104 = sadd.s32 %s103, 1
    %s105 = scalar_select %p102, %s103, %s104
    %p108 = pneg %p102
    %p109 = scmp.eq.s32.totalorder %s16, 3
    %p110 = por %p108, %p109
    %p111 = scmp.ne.s32.totalorder %s103, %s106
    %p112 = scmp.eq.s32.totalorder %s16, 0
    %p113 = por %p111, %p112
    %p114 = scmp.ne.s32.totalorder %s103, %s106
    %p115 = scmp.eq.s32.totalorder %s21, 3
    %p116 = por %p114, %p115
    %p117 = scmp.ne.s32.totalorder %s106, %s107
    %p118 = scmp.eq.s32.totalorder %s21, 0
    %p119 = por %p117, %p118
    %p120 = scmp.ne.s32.totalorder %s106, %s107
    %p121 = scmp.eq.s32.totalorder %s22, 3
    %p122 = por %p120, %p121
    %p124 = scmp.ne.s32.totalorder %s107, %s123
    %p125 = scmp.eq.s32.totalorder %s22, 0
    %p126 = por %p124, %p125
    %s127 = ssub.s32 %s23, %s42
    %p128 = scmp.eq.s32.totalorder %s127, 0
    %s130 = sadd.s32 %s129, 1
    %s131 = scalar_select %p128, %s129, %s130
    %p134 = pneg %p128
    %p135 = scmp.eq.s32.totalorder %s16, 3
    %p136 = por %p134, %p135
    %p137 = scmp.ne.s32.totalorder %s129, %s132
    %p138 = scmp.eq.s32.totalorder %s16, 0
    %p139 = por %p137, %p138
    %p140 = scmp.ne.s32.totalorder %s129, %s132
    %p141 = scmp.eq.s32.totalorder %s21, 3
    %p142 = por %p140, %p141
    %p143 = scmp.ne.s32.totalorder %s132, %s133
    %p144 = scmp.eq.s32.totalorder %s21, 0
    %p145 = por %p143, %p144
    %p146 = scmp.ne.s32.totalorder %s132, %s133
    %p147 = scmp.eq.s32.totalorder %s22, 3
    %p148 = por %p146, %p147
    %p150 = scmp.ne.s32.totalorder %s133, %s149
    %p151 = scmp.eq.s32.totalorder %s22, 0
    %p152 = por %p150, %p151
    %s153 = ssub.s32 %s23, %s42
    %p154 = scmp.eq.s32.totalorder %s153, 0
    %s156 = sadd.s32 %s155, 1
    %s157 = scalar_select %p154, %s155, %s156
    %p160 = pneg %p154
    %p161 = scmp.eq.s32.totalorder %s16, 3
    %p162 = por %p160, %p161
    %p163 = scmp.ne.s32.totalorder %s155, %s158
    %p164 = scmp.eq.s32.totalorder %s16, 0
    %p165 = por %p163, %p164
    %p166 = scmp.ne.s32.totalorder %s155, %s158
    %p167 = scmp.eq.s32.totalorder %s21, 3
    %p168 = por %p166, %p167
    %p169 = scmp.ne.s32.totalorder %s158, %s159
    %p170 = scmp.eq.s32.totalorder %s21, 0
    %p171 = por %p169, %p170
    %p172 = scmp.ne.s32.totalorder %s158, %s159
    %p173 = scmp.eq.s32.totalorder %s22, 3
    %p174 = por %p172, %p173
    %p176 = scmp.ne.s32.totalorder %s159, %s175
    %p177 = scmp.eq.s32.totalorder %s22, 0
    %p178 = por %p176, %p177
    %s179 = ssub.s32 %s23, %s42
    %p180 = scmp.eq.s32.totalorder %s179, 0
    %s182 = sadd.s32 %s181, 1
    %s183 = scalar_select %p180, %s181, %s182
    %p186 = pneg %p180
    %p187 = scmp.eq.s32.totalorder %s16, 3
    %p188 = por %p186, %p187
    %p189 = scmp.ne.s32.totalorder %s181, %s184
    %p190 = scmp.eq.s32.totalorder %s16, 0
    %p191 = por %p189, %p190
    %p192 = scmp.ne.s32.totalorder %s181, %s184
    %p193 = scmp.eq.s32.totalorder %s21, 3
    %p194 = por %p192, %p193
    %p195 = scmp.ne.s32.totalorder %s184, %s185
    %p196 = scmp.eq.s32.totalorder %s21, 0
    %p197 = por %p195, %p196
    %p198 = scmp.ne.s32.totalorder %s184, %s185
    %p199 = scmp.eq.s32.totalorder %s22, 3
    %p200 = por %p198, %p199
    %p202 = scmp.ne.s32.totalorder %s185, %s201
    %p203 = scmp.eq.s32.totalorder %s22, 0
    %p204 = por %p202, %p203
    %s205 = ssub.s32 %s23, %s42
    %p206 = scmp.eq.s32.totalorder %s205, 0
    %s208 = sadd.s32 %s207, 1
    %s209 = scalar_select %p206, %s207, %s208
    %p212 = pneg %p206
    %p213 = scmp.eq.s32.totalorder %s16, 3
    %p214 = por %p212, %p213
    %p215 = scmp.ne.s32.totalorder %s207, %s210
    %p216 = scmp.eq.s32.totalorder %s16, 0
    %p217 = por %p215, %p216
    %p218 = scmp.ne.s32.totalorder %s207, %s210
    %p219 = scmp.eq.s32.totalorder %s21, 3
    %p220 = por %p218, %p219
    %p221 = scmp.ne.s32.totalorder %s210, %s211
    %p222 = scmp.eq.s32.totalorder %s21, 0
    %p223 = por %p221, %p222
    %p224 = scmp.ne.s32.totalorder %s210, %s211
    %p225 = scmp.eq.s32.totalorder %s22, 3
    %p226 = por %p224, %p225
    %p228 = scmp.ne.s32.totalorder %s211, %s227
    %p229 = scmp.eq.s32.totalorder %s22, 0
    %p230 = por %p228, %p229
    %s231 = ssub.s32 %s23, %s42
    %p232 = scmp.eq.s32.totalorder %s231, 0
    %s234 = sadd.s32 %s233, 1
    %s235 = scalar_select %p232, %s233, %s234
    %p238 = pneg %p232
    %p239 = scmp.eq.s32.totalorder %s16, 3
    %p240 = por %p238, %p239
    %p241 = scmp.ne.s32.totalorder %s233, %s236
    %p242 = scmp.eq.s32.totalorder %s16, 0
    %p243 = por %p241, %p242
    %p244 = scmp.ne.s32.totalorder %s233, %s236
    %p245 = scmp.eq.s32.totalorder %s21, 3
    %p246 = por %p244, %p245
    %p247 = scmp.ne.s32.totalorder %s236, %s237
    %p248 = scmp.eq.s32.totalorder %s21, 0
    %p249 = por %p247, %p248
    %p250 = scmp.ne.s32.totalorder %s236, %s237
    %p251 = scmp.eq.s32.totalorder %s22, 3
    %p252 = por %p250, %p251
    %p254 = scmp.ne.s32.totalorder %s237, %s253
    %p255 = scmp.eq.s32.totalorder %s22, 0
    %p256 = por %p254, %p255
    %s257 = ssub.s32 %s23, %s42
    %p258 = scmp.eq.s32.totalorder %s257, 0
    %s260 = sadd.s32 %s259, 1
    %s261 = scalar_select %p258, %s259, %s260
    %p264 = pneg %p258
    %p265 = scmp.eq.s32.totalorder %s16, 3
    %p266 = por %p264, %p265
    %p267 = scmp.ne.s32.totalorder %s259, %s262
    %p268 = scmp.eq.s32.totalorder %s16, 0
    %p269 = por %p267, %p268
    %p270 = scmp.ne.s32.totalorder %s259, %s262
    %p271 = scmp.eq.s32.totalorder %s21, 3
    %p272 = por %p270, %p271
    %p273 = scmp.ne.s32.totalorder %s262, %s263
    %p274 = scmp.eq.s32.totalorder %s21, 0
    %p275 = por %p273, %p274
    %p276 = scmp.ne.s32.totalorder %s262, %s263
    %p277 = scmp.eq.s32.totalorder %s22, 3
    %p278 = por %p276, %p277
    %p280 = scmp.ne.s32.totalorder %s263, %s279
    %p281 = scmp.eq.s32.totalorder %s22, 0
    %p282 = por %p280, %p281
    %s283 = ssub.s32 %s23, %s42
    %p284 = scmp.eq.s32.totalorder %s283, 0
    %s286 = sadd.s32 %s285, 1
    %s287 = scalar_select %p284, %s285, %s286
    %p290 = pneg %p284
    %p291 = scmp.eq.s32.totalorder %s16, 3
    %p292 = por %p290, %p291
    %p293 = scmp.ne.s32.totalorder %s285, %s288
    %p294 = scmp.eq.s32.totalorder %s16, 0
    %p295 = por %p293, %p294
    %p296 = scmp.ne.s32.totalorder %s285, %s288
    %p297 = scmp.eq.s32.totalorder %s21, 3
    %p298 = por %p296, %p297
    %p299 = scmp.ne.s32.totalorder %s288, %s289
    %p300 = scmp.eq.s32.totalorder %s21, 0
    %p301 = por %p299, %p300
    %p302 = scmp.ne.s32.totalorder %s288, %s289
    %p303 = scmp.eq.s32.totalorder %s22, 3
    %p304 = por %p302, %p303
    %p306 = scmp.ne.s32.totalorder %s289, %s305
    %p307 = scmp.eq.s32.totalorder %s22, 0
    %p308 = por %p306, %p307
    %s309 = sadd.s32 %s23, %s25
    %s310 = sadd.s32 %s42, %s34
    %s311 = ssub.s32 %s24, %s38
    %s312 = ssub.s32 %s309, %s310
    %s313 = sor.u32 %s311, %s312
    %p314 = scmp.eq.s32.totalorder %s313, 0
    %s316 = sadd.s32 %s315, 1
    %s317 = scalar_select %p314, %s315, %s316
    %p320 = pneg %p314
    %p321 = scmp.eq.s32.totalorder %s16, 3
    %p322 = por %p320, %p321
    %p323 = scmp.ne.s32.totalorder %s315, %s318
    %p324 = scmp.eq.s32.totalorder %s16, 0
    %p325 = por %p323, %p324
    %p326 = scmp.ne.s32.totalorder %s315, %s318
    %p327 = scmp.eq.s32.totalorder %s21, 3
    %p328 = por %p326, %p327
    %p329 = scmp.ne.s32.totalorder %s318, %s319
    %p330 = scmp.eq.s32.totalorder %s21, 0
    %p331 = por %p329, %p330
    %p332 = scmp.ne.s32.totalorder %s318, %s319
    %p333 = scmp.eq.s32.totalorder %s22, 3
    %p334 = por %p332, %p333
    %p336 = scmp.ne.s32.totalorder %s319, %s335
    %p337 = scmp.eq.s32.totalorder %s22, 0
    %p338 = por %p336, %p337
    %p339 = scmp.le.s32.totalorder 1, %s16
    %p340 = scmp.lt.s32.totalorder %s16, 5
    %p341 = pnand %p339, %p340
    %p342 = pneg %p341
    // Predicated region
    $region9: #{_lambda_.3} parent=5 // pred_check
      _
    $region10: #{_lambda_.3} parent=5 // pred_check_branch
      %344 = sbr.rel (%p341) target = $region12
    $region11: #{_lambda_.3} parent=5 // pred_region
      %s345 = ssub.s32 %s16, 1
    $region12: #{_lambda_.3} parent=5 // pred_fallthru
      _
    %p346 = scmp.lt.s32.totalorder %s16, 4
    // Predicated region
    $region13: #{_lambda_.3} parent=5 // pred_check
      %p347 = pneg %p346
    $region14: #{_lambda_.3} parent=5 // pred_check_branch
      %349 = sbr.rel (%p347) target = $region16
    $region15: #{_lambda_.3} parent=5 // pred_region
      // Predicated region
      $region17: #{_lambda_.3} parent=15 // pred_check
        %p350 = pneg %p59
      $region18: #{_lambda_.3} parent=15 // pred_check_branch
        %352 = sbr.rel (%p350) target = $region20
      $region19: #{_lambda_.3} parent=15 // pred_region
        %s353 = smul.u32 8, %s25
        %p354 = scmp.lt.s32.totalorder %s23, 1
        %s355 = scalar_select %p354, %s23, 1
        %p356 = scmp.lt.s32.totalorder %s24, 1
        %s357 = scalar_select %p356, %s24, 1
        %p358 = scmp.lt.s32.totalorder %s353, 7
        %s359 = scalar_select %p358, %s353, 7
        %s360 = smul.addr %s357, 8
        %s361 = sadd.s32 %s359, %s360
        %s362 = smul.addr %s355, 16
        %s363 = sadd.s32 %s361, %s362
        %s364 = smul.addr %s363, 8
        %s365 = scalar_lea.vmem %s0, %s364
        %s366 = smul.u32 8, %s25
      $region20: #{_lambda_.3} parent=15 // pred_fallthru
        _
      // Predicated region
      $region21: #{_lambda_.3} parent=15 // pred_check
        %p367 = pneg %p87
      $region22: #{_lambda_.3} parent=15 // pred_check_branch
        %369 = sbr.rel (%p367) target = $region24
      $region23: #{_lambda_.3} parent=15 // pred_region
        %p370 = scmp.lt.s32.totalorder %s23, 1
        %s371 = scalar_select %p370, %s23, 1
        %p372 = scmp.lt.s32.totalorder %s24, 1
        %s373 = scalar_select %p372, %s24, 1
        %s374 = smul.addr %s371, 2
        %s375 = sadd.s32 %s373, %s374
        %s376 = scalar_lea.vmem %s1, %s375
      $region24: #{_lambda_.3} parent=15 // pred_fallthru
        _
      // Predicated region
      $region25: #{_lambda_.3} parent=15 // pred_check
        %p377 = pneg %p113
      $region26: #{_lambda_.3} parent=15 // pred_check_branch
        %379 = sbr.rel (%p377) target = $region28
      $region27: #{_lambda_.3} parent=15 // pred_region
        %p380 = scmp.lt.s32.totalorder %s23, 1
        %s381 = scalar_select %p380, %s23, 1
        %s382 = smul.addr %s381, 2
        %s383 = scalar_lea.vmem %s2, %s382
      $region28: #{_lambda_.3} parent=15 // pred_fallthru
        _
      // Predicated region
      $region29: #{_lambda_.3} parent=15 // pred_check
        %p384 = pneg %p139
      $region30: #{_lambda_.3} parent=15 // pred_check_branch
        %386 = sbr.rel (%p384) target = $region32
      $region31: #{_lambda_.3} parent=15 // pred_region
        %p387 = scmp.lt.s32.totalorder %s23, 1
        %s388 = scalar_select %p387, %s23, 1
        %s389 = scalar_lea.vmem %s3, %s388
      $region32: #{_lambda_.3} parent=15 // pred_fallthru
        _
      // Predicated region
      $region33: #{_lambda_.3} parent=15 // pred_check
        %p390 = pneg %p165
      $region34: #{_lambda_.3} parent=15 // pred_check_branch
        %392 = sbr.rel (%p390) target = $region36
      $region35: #{_lambda_.3} parent=15 // pred_region
        %p393 = scmp.lt.s32.totalorder %s23, 1
        %s394 = scalar_select %p393, %s23, 1
        %s395 = smul.addr %s394, 16
        %s396 = smul.addr %s395, 4
        %s397 = scalar_lea.vmem %s4, %s396
      $region36: #{_lambda_.3} parent=15 // pred_fallthru
        _
      // Predicated region
      $region37: #{_lambda_.3} parent=15 // pred_check
        %p398 = pneg %p191
      $region38: #{_lambda_.3} parent=15 // pred_check_branch
        %400 = sbr.rel (%p398) target = $region40
      $region39: #{_lambda_.3} parent=15 // pred_region
        %p401 = scmp.lt.s32.totalorder %s23, 1
        %s402 = scalar_select %p401, %s23, 1
        %s403 = scalar_lea.vmem %s5, %s402
      $region40: #{_lambda_.3} parent=15 // pred_fallthru
        _
      // Predicated region
      $region41: #{_lambda_.3} parent=15 // pred_check
        %p404 = pneg %p217
      $region42: #{_lambda_.3} parent=15 // pred_check_branch
        %406 = sbr.rel (%p404) target = $region44
      $region43: #{_lambda_.3} parent=15 // pred_region
        %p407 = scmp.lt.s32.totalorder %s23, 1
        %s408 = scalar_select %p407, %s23, 1
        %s409 = smul.addr %s408, 16
        %s410 = smul.addr %s409, 4
        %s411 = scalar_lea.vmem %s6, %s410
      $region44: #{_lambda_.3} parent=15 // pred_fallthru
        _
      // Predicated region
      $region45: #{_lambda_.3} parent=15 // pred_check
        %p412 = pneg %p243
      $region46: #{_lambda_.3} parent=15 // pred_check_branch
        %414 = sbr.rel (%p412) target = $region48
      $region47: #{_lambda_.3} parent=15 // pred_region
        %p415 = scmp.lt.s32.totalorder %s23, 1
        %s416 = scalar_select %p415, %s23, 1
        %s417 = scalar_lea.vmem %s7, %s416
      $region48: #{_lambda_.3} parent=15 // pred_fallthru
        _
      // Predicated region
      $region49: #{_lambda_.3} parent=15 // pred_check
        %p418 = pneg %p269
      $region50: #{_lambda_.3} parent=15 // pred_check_branch
        %420 = sbr.rel (%p418) target = $region52
      $region51: #{_lambda_.3} parent=15 // pred_region
        %p421 = scmp.lt.s32.totalorder %s23, 1
        %s422 = scalar_select %p421, %s23, 1
        %s423 = smul.addr %s422, 16
        %s424 = smul.addr %s423, 4
        %s425 = scalar_lea.vmem %s8, %s424
      $region52: #{_lambda_.3} parent=15 // pred_fallthru
        _
      // Predicated region
      $region53: #{_lambda_.3} parent=15 // pred_check
        %p426 = pneg %p295
      $region54: #{_lambda_.3} parent=15 // pred_check_branch
        %428 = sbr.rel (%p426) target = $region56
      $region55: #{_lambda_.3} parent=15 // pred_region
        %p429 = scmp.lt.s32.totalorder %s23, 1
        %s430 = scalar_select %p429, %s23, 1
        %s431 = scalar_lea.vmem %s9, %s430
      $region56: #{_lambda_.3} parent=15 // pred_fallthru
        _
    $region16: #{_lambda_.3} parent=5 // pred_fallthru
      _
    %p432 = scmp.le.s32.totalorder 1, %s16
    %p433 = scmp.lt.s32.totalorder %s16, 5
    %p434 = pnand %p432, %p433
    %p435 = pneg %p434
    // Predicated region
    $region57: #{_lambda_.3} parent=5 // pred_check
      _
    $region58: #{_lambda_.3} parent=5 // pred_check_branch
      %437 = sbr.rel (%p434) target = $region60
    $region59: #{_lambda_.3} parent=5 // pred_region
      %s438 = ssub.s32 %s16, 1
      %s439 = smul.u32 8, %s28
      %p440 = scmp.lt.s32.totalorder %s26, 1
      %s441 = scalar_select %p440, %s26, 1
      %p442 = scmp.lt.s32.totalorder %s27, 1
      %s443 = scalar_select %p442, %s27, 1
      %p444 = scmp.lt.s32.totalorder %s439, 7
      %s445 = scalar_select %p444, %s439, 7
      %s446 = smul.addr %s443, 8
      %s447 = sadd.s32 %s445, %s446
      %s448 = smul.addr %s441, 16
      %s449 = sadd.s32 %s447, %s448
      %s450 = smul.addr %s449, 8
      %s451 = scalar_lea.vmem %s0, %s450
      %p452 = pneg %p65
      %p453 = pneg %p62
      %p454 = scmp.lt.s32.totalorder %s26, 1
      %s455 = scalar_select %p454, %s26, 1
      %p456 = scmp.lt.s32.totalorder %s27, 1
      %s457 = scalar_select %p456, %s27, 1
      %s458 = smul.addr %s455, 2
      %s459 = sadd.s32 %s457, %s458
      %s460 = scalar_lea.vmem %s1, %s459
      %p461 = pneg %p93
      %p462 = pneg %p90
      %p463 = scmp.lt.s32.totalorder %s26, 1
      %s464 = scalar_select %p463, %s26, 1
      %s465 = smul.addr %s464, 2
      %s466 = scalar_lea.vmem %s2, %s465
      %p467 = pneg %p119
      %p468 = pneg %p116
      %p469 = scmp.lt.s32.totalorder %s26, 1
      %s470 = scalar_select %p469, %s26, 1
      %s471 = scalar_lea.vmem %s3, %s470
      %p472 = pneg %p145
      %p473 = pneg %p142
      %p474 = scmp.lt.s32.totalorder %s26, 1
      %s475 = scalar_select %p474, %s26, 1
      %s476 = smul.addr %s475, 16
      %s477 = smul.addr %s476, 4
      %s478 = scalar_lea.vmem %s4, %s477
      %p479 = pneg %p171
      %p480 = pneg %p168
      %p481 = scmp.lt.s32.totalorder %s26, 1
      %s482 = scalar_select %p481, %s26, 1
      %s483 = scalar_lea.vmem %s5, %s482
      %p484 = pneg %p197
      %p485 = pneg %p194
      %p486 = scmp.lt.s32.totalorder %s26, 1
      %s487 = scalar_select %p486, %s26, 1
      %s488 = smul.addr %s487, 16
      %s489 = smul.addr %s488, 4
      %s490 = scalar_lea.vmem %s6, %s489
      %p491 = pneg %p223
      %p492 = pneg %p220
      %p493 = scmp.lt.s32.totalorder %s26, 1
      %s494 = scalar_select %p493, %s26, 1
      %s495 = scalar_lea.vmem %s7, %s494
      %p496 = pneg %p249
      %p497 = pneg %p246
      %p498 = scmp.lt.s32.totalorder %s26, 1
      %s499 = scalar_select %p498, %s26, 1
      %s500 = smul.addr %s499, 16
      %s501 = smul.addr %s500, 4
      %s502 = scalar_lea.vmem %s8, %s501
      %p503 = pneg %p275
      %p504 = pneg %p272
      %p505 = scmp.lt.s32.totalorder %s26, 1
      %s506 = scalar_select %p505, %s26, 1
      %s507 = scalar_lea.vmem %s9, %s506
      %p508 = pneg %p301
      %p509 = pneg %p298
      %p510 = pneg %p331
      %p511 = pneg %p328
      %s512 = sadd.s32 %s26, %s28
      %s513 = smul.u32 8, %s512
      %p514 = scmp.lt.s32.totalorder %s27, 1
      %s515 = scalar_select %p514, %s27, 1
      %p516 = scmp.lt.s32.totalorder %s513, 15
      %s517 = scalar_select %p516, %s513, 15
      %s518 = smul.addr %s515, 16
      %s519 = sadd.s32 %s517, %s518
      %s520 = smul.addr %s519, 8
      %s521 = scalar_lea.vmem %s10, %s520
      %s522 = smul.u32 8, %s28
      %p523 = scmp.lt.s32.totalorder %s26, 1
      %s524 = scalar_select %p523, %s26, 1
      %p525 = scmp.lt.s32.totalorder %s27, 1
      %s526 = scalar_select %p525, %s27, 1
      %p527 = scmp.lt.s32.totalorder %s522, 7
      %s528 = scalar_select %p527, %s522, 7
      %s529 = smul.addr %s526, 8
      %s530 = sadd.s32 %s528, %s529
      %s531 = smul.addr %s524, 16
      %s532 = sadd.s32 %s530, %s531
      %s533 = smul.addr %s532, 8
      %s534 = scalar_lea.vmem %s0, %s533
      %s535 = smul.u32 8, %s28
      %p536 = scmp.lt.s32.totalorder %s26, 1
      %s537 = scalar_select %p536, %s26, 1
      %p538 = scmp.lt.s32.totalorder %s27, 1
      %s539 = scalar_select %p538, %s27, 1
      %s540 = smul.addr %s537, 2
      %s541 = sadd.s32 %s539, %s540
      %s542 = scalar_lea.vmem %s1, %s541
      %p543 = scmp.lt.s32.totalorder %s26, 1
      %s544 = scalar_select %p543, %s26, 1
      %s545 = smul.addr %s544, 2
      %s546 = scalar_lea.vmem %s2, %s545
      %p547 = scmp.lt.s32.totalorder %s26, 1
      %s548 = scalar_select %p547, %s26, 1
      %s549 = scalar_lea.vmem %s3, %s548
      %p550 = scmp.lt.s32.totalorder %s26, 1
      %s551 = scalar_select %p550, %s26, 1
      %s552 = smul.addr %s551, 16
      %s553 = smul.addr %s552, 4
      %s554 = scalar_lea.vmem %s4, %s553
      %p555 = scmp.lt.s32.totalorder %s26, 1
      %s556 = scalar_select %p555, %s26, 1
      %s557 = scalar_lea.vmem %s5, %s556
      %p558 = scmp.lt.s32.totalorder %s26, 1
      %s559 = scalar_select %p558, %s26, 1
      %s560 = smul.addr %s559, 16
      %s561 = smul.addr %s560, 4
      %s562 = scalar_lea.vmem %s6, %s561
      %p563 = scmp.lt.s32.totalorder %s26, 1
      %s564 = scalar_select %p563, %s26, 1
      %s565 = scalar_lea.vmem %s7, %s564
      %p566 = scmp.lt.s32.totalorder %s26, 1
      %s567 = scalar_select %p566, %s26, 1
      %s568 = smul.addr %s567, 16
      %s569 = smul.addr %s568, 4
      %s570 = scalar_lea.vmem %s8, %s569
      %p571 = scmp.lt.s32.totalorder %s26, 1
      %s572 = scalar_select %p571, %s26, 1
      %s573 = scalar_lea.vmem %s9, %s572
      %s574 = sadd.s32 %s26, %s28
      %s575 = smul.u32 8, %s574
      %p576 = scmp.lt.s32.totalorder %s27, 1
      %s577 = scalar_select %p576, %s27, 1
      %p578 = scmp.lt.s32.totalorder %s575, 15
      %s579 = scalar_select %p578, %s575, 15
      %s580 = smul.addr %s577, 16
      %s581 = sadd.s32 %s579, %s580
      %s582 = smul.addr %s581, 8
      %s583 = scalar_lea.vmem %s10, %s582
      %s584 = sadd.s32 %s26, %s28
      %s585 = smul.u32 8, %s584
      %v586 = vld [vmem:[%s534] sm:$0xff]
      %v587 = vld [vmem:[%s534 + $0x8] sm:$0xff]
      %v588 = vld [vmem:[%s534 + $0x10] sm:$0xff]
      %v589 = vld [vmem:[%s534 + $0x18] sm:$0xff]
      %v590 = vld [vmem:[%s534 + $0x20] sm:$0xff]
      %v591 = vld [vmem:[%s534 + $0x28] sm:$0xff]
      %v592 = vld [vmem:[%s534 + $0x30] sm:$0xff]
      %v593 = vld [vmem:[%s534 + $0x38] sm:$0xff]
      %v594 = vld [vmem:[%s542] sm:$0x1]
      %v595 = vld [vmem:[%s546] sm:$0x3]
      %597 = vset.pattern.permute.xlu0 0
      %598 = vperm.xlu0 %597, %v586
      %v599 = vpop.permute.xlu0 %598
      %602 = vset.pattern.permute.xlu0 0
      %603 = vperm.xlu0 %602, %v587
      %v604 = vpop.permute.xlu0 %603
      %607 = vset.pattern.permute.xlu0 0
      %608 = vperm.xlu0 %607, %v588
      %v609 = vpop.permute.xlu0 %608
      %612 = vset.pattern.permute.xlu0 0
      %613 = vperm.xlu0 %612, %v589
      %v614 = vpop.permute.xlu0 %613
      %617 = vset.pattern.permute.xlu0 0
      %618 = vperm.xlu0 %617, %v590
      %v619 = vpop.permute.xlu0 %618
      %622 = vset.pattern.permute.xlu0 0
      %623 = vperm.xlu0 %622, %v591
      %v624 = vpop.permute.xlu0 %623
      %627 = vset.pattern.permute.xlu0 0
      %628 = vperm.xlu0 %627, %v592
      %v629 = vpop.permute.xlu0 %628
      %632 = vset.pattern.permute.xlu0 0
      %633 = vperm.xlu0 %632, %v593
      %v634 = vpop.permute.xlu0 %633
      %v636 = vperm.slane %v595, 0
      %v637 = vmul.f32 %v599, %v636
      %v638 = vmul.f32 %v604, %v636
      %v639 = vmul.f32 %v609, %v636
      %v640 = vmul.f32 %v614, %v636
      %v641 = vmul.f32 %v619, %v636
      %v642 = vmul.f32 %v624, %v636
      %v643 = vmul.f32 %v629, %v636
      %v644 = vmul.f32 %v634, %v636
      %645 = vset.pattern.permute.xlu0 1
      %646 = vperm.xlu0 %645, %v586
      %v647 = vpop.permute.xlu0 %646
      %649 = vset.pattern.permute.xlu0 1
      %650 = vperm.xlu0 %649, %v587
      %v651 = vpop.permute.xlu0 %650
      %653 = vset.pattern.permute.xlu0 1
      %654 = vperm.xlu0 %653, %v588
      %v655 = vpop.permute.xlu0 %654
      %657 = vset.pattern.permute.xlu0 1
      %658 = vperm.xlu0 %657, %v589
      %v659 = vpop.permute.xlu0 %658
      %661 = vset.pattern.permute.xlu0 1
      %662 = vperm.xlu0 %661, %v590
      %v663 = vpop.permute.xlu0 %662
      %665 = vset.pattern.permute.xlu0 1
      %666 = vperm.xlu0 %665, %v591
      %v667 = vpop.permute.xlu0 %666
      %669 = vset.pattern.permute.xlu0 1
      %670 = vperm.xlu0 %669, %v592
      %v671 = vpop.permute.xlu0 %670
      %673 = vset.pattern.permute.xlu0 1
      %674 = vperm.xlu0 %673, %v593
      %v675 = vpop.permute.xlu0 %674
      %v677 = vperm.slane %v595, 1
      %v678 = vmul.f32 %v647, %v677
      %v679 = vmul.f32 %v651, %v677
      %v680 = vmul.f32 %v655, %v677
      %v681 = vmul.f32 %v659, %v677
      %v682 = vmul.f32 %v663, %v677
      %v683 = vmul.f32 %v667, %v677
      %v684 = vmul.f32 %v671, %v677
      %v685 = vmul.f32 %v675, %v677
      %v686 = vadd.f32 %v637, %v678
      %v687 = vadd.f32 %v638, %v679
      %v688 = vadd.f32 %v639, %v680
      %v689 = vadd.f32 %v640, %v681
      %v690 = vadd.f32 %v641, %v682
      %v691 = vadd.f32 %v642, %v683
      %v692 = vadd.f32 %v643, %v684
      %v693 = vadd.f32 %v644, %v685
      %v695 = vperm.slane %v594, 0
      %v697 = vadd.f32 %v686, %v695
      %v698 = vadd.f32 %v687, %v695
      %v699 = vadd.f32 %v688, %v695
      %v700 = vadd.f32 %v689, %v695
      %v701 = vadd.f32 %v690, %v695
      %v702 = vadd.f32 %v691, %v695
      %v703 = vadd.f32 %v692, %v695
      %v704 = vadd.f32 %v693, %v695
      %v705 = vld [vmem:[%s549] sm:$0x1]
      %v707 = vperm.slane %v705, 0
      %v709 = vadd.f32 %v697, %v707
      %v710 = vadd.f32 %v698, %v707
      %v711 = vadd.f32 %v699, %v707
      %v712 = vadd.f32 %v700, %v707
      %v713 = vadd.f32 %v701, %v707
      %v714 = vadd.f32 %v702, %v707
      %v715 = vadd.f32 %v703, %v707
      %v716 = vadd.f32 %v704, %v707
      %v717 = vmax.f32 %v709, 0.0
      %v718 = vmax.f32 %v710, 0.0
      %v719 = vmax.f32 %v711, 0.0
      %v720 = vmax.f32 %v712, 0.0
      %v721 = vmax.f32 %v713, 0.0
      %v722 = vmax.f32 %v714, 0.0
      %v723 = vmax.f32 %v715, 0.0
      %v724 = vmax.f32 %v716, 0.0
      %v725 = vpack.c.bf16 %v718, %v717
      %v726 = vpack.c.bf16 %v720, %v719
      %v727 = vpack.c.bf16 %v722, %v721
      %v728 = vpack.c.bf16 %v724, %v723
      %v729 = vld [vmem:[%s554] sm:$0xf]
      %v730 = vld [vmem:[%s554 + $0x4] sm:$0xf]
      %v731 = vld [vmem:[%s554 + $0x8] sm:$0xf]
      %v732 = vld [vmem:[%s554 + $0xc] sm:$0xf]
      %v733 = vld [vmem:[%s554 + $0x10] sm:$0xf]
      %v734 = vld [vmem:[%s554 + $0x14] sm:$0xf]
      %v735 = vld [vmem:[%s554 + $0x18] sm:$0xf]
      %v736 = vld [vmem:[%s554 + $0x1c] sm:$0xf]
      %v737 = vld [vmem:[%s554 + $0x20] sm:$0xf]
      %v738 = vld [vmem:[%s554 + $0x24] sm:$0xf]
      %v739 = vld [vmem:[%s554 + $0x28] sm:$0xf]
      %v740 = vld [vmem:[%s554 + $0x2c] sm:$0xf]
      %v741 = vld [vmem:[%s554 + $0x30] sm:$0xf]
      %v742 = vld [vmem:[%s554 + $0x34] sm:$0xf]
      %v743 = vld [vmem:[%s554 + $0x38] sm:$0xf]
      %v744 = vld [vmem:[%s554 + $0x3c] sm:$0xf]
      %v745 = vld [vmem:[%s557] sm:$0x1]
      %v747 = vperm.slane %v745, 0
      %v765 = vunpack.c.l.b16 %v729
      %v766 = vunpack.c.l.b16 %v730
      %v767 = vunpack.c.l.b16 %v731
      %v768 = vunpack.c.l.b16 %v732
      %v769 = vunpack.c.l.b16 %v733
      %v770 = vunpack.c.l.b16 %v734
      %v771 = vunpack.c.l.b16 %v735
      %v772 = vunpack.c.l.b16 %v736
      %v773 = vunpack.c.l.b16 %v737
      %v774 = vunpack.c.l.b16 %v738
      %v775 = vunpack.c.l.b16 %v739
      %v776 = vunpack.c.l.b16 %v740
      %v777 = vunpack.c.l.b16 %v741
      %v778 = vunpack.c.l.b16 %v742
      %v779 = vunpack.c.l.b16 %v743
      %v780 = vunpack.c.l.b16 %v744
      %v781 = vpack.c.b16 %v766, %v765
      %v782 = vpack.c.b16 %v768, %v767
      %v783 = vpack.c.b16 %v770, %v769
      %v784 = vpack.c.b16 %v772, %v771
      %v785 = vpack.c.b16 %v774, %v773
      %v786 = vpack.c.b16 %v776, %v775
      %v787 = vpack.c.b16 %v778, %v777
      %v788 = vpack.c.b16 %v780, %v779
      %797 = vmatpush.bf16.msra.mxu0 %v788
      %798 = vmatpush.bf16.msra.mxu0 %v787
      %799 = vmatpush.bf16.msra.mxu0 %v786
      %800 = vmatpush.bf16.msra.mxu0 %v785
      %801 = vmatpush.bf16.msra.mxu0 %v784
      %802 = vmatpush.bf16.msra.mxu0 %v783
      %803 = vmatpush.bf16.msra.mxu0 %v782
      %804 = vmatpush.bf16.msra.mxu0 %v781
      %805 = vmatmul.bf16.gmra.mxu0 %v725
      %v806 = vpop.f32.mrf.mxu0
      %v807 = vadd.f32 %v747, %v806
      %v808 = vpop.f32.mrf.mxu0
      %v809 = vadd.f32 %v747, %v808
      %810 = vmatmul.bf16.gmra.mxu0 %v726
      %v811 = vpop.f32.mrf.mxu0
      %v812 = vadd.f32 %v747, %v811
      %v813 = vpop.f32.mrf.mxu0
      %v814 = vadd.f32 %v747, %v813
      %815 = vmatmul.bf16.gmra.mxu0 %v727
      %v816 = vpop.f32.mrf.mxu0
      %v817 = vadd.f32 %v747, %v816
      %v818 = vpop.f32.mrf.mxu0
      %v819 = vadd.f32 %v747, %v818
      %820 = vmatmul.bf16.gmra.mxu0 %v728
      %v821 = vpop.f32.mrf.mxu0
      %v822 = vadd.f32 %v747, %v821
      %v823 = vpop.f32.mrf.mxu0
      %v824 = vadd.f32 %v747, %v823
      %825 = vdwg.mxu0
      %v826 = vmax.f32 %v807, 0.0
      %v827 = vmax.f32 %v809, 0.0
      %v828 = vmax.f32 %v812, 0.0
      %v829 = vmax.f32 %v814, 0.0
      %v830 = vmax.f32 %v817, 0.0
      %v831 = vmax.f32 %v819, 0.0
      %v832 = vmax.f32 %v822, 0.0
      %v833 = vmax.f32 %v824, 0.0
      %v834 = vpack.c.bf16 %v827, %v826
      %v835 = vpack.c.bf16 %v829, %v828
      %v836 = vpack.c.bf16 %v831, %v830
      %v837 = vpack.c.bf16 %v833, %v832
      %v838 = vld [vmem:[%s562] sm:$0xf]
      %v839 = vld [vmem:[%s562 + $0x4] sm:$0xf]
      %v840 = vld [vmem:[%s562 + $0x8] sm:$0xf]
      %v841 = vld [vmem:[%s562 + $0xc] sm:$0xf]
      %v842 = vld [vmem:[%s562 + $0x10] sm:$0xf]
      %v843 = vld [vmem:[%s562 + $0x14] sm:$0xf]
      %v844 = vld [vmem:[%s562 + $0x18] sm:$0xf]
      %v845 = vld [vmem:[%s562 + $0x1c] sm:$0xf]
      %v846 = vld [vmem:[%s562 + $0x20] sm:$0xf]
      %v847 = vld [vmem:[%s562 + $0x24] sm:$0xf]
      %v848 = vld [vmem:[%s562 + $0x28] sm:$0xf]
      %v849 = vld [vmem:[%s562 + $0x2c] sm:$0xf]
      %v850 = vld [vmem:[%s562 + $0x30] sm:$0xf]
      %v851 = vld [vmem:[%s562 + $0x34] sm:$0xf]
      %v852 = vld [vmem:[%s562 + $0x38] sm:$0xf]
      %v853 = vld [vmem:[%s562 + $0x3c] sm:$0xf]
      %v854 = vld [vmem:[%s565] sm:$0x1]
      %v856 = vperm.slane %v854, 0
      %v874 = vunpack.c.l.b16 %v838
      %v875 = vunpack.c.l.b16 %v839
      %v876 = vunpack.c.l.b16 %v840
      %v877 = vunpack.c.l.b16 %v841
      %v878 = vunpack.c.l.b16 %v842
      %v879 = vunpack.c.l.b16 %v843
      %v880 = vunpack.c.l.b16 %v844
      %v881 = vunpack.c.l.b16 %v845
      %v882 = vunpack.c.l.b16 %v846
      %v883 = vunpack.c.l.b16 %v847
      %v884 = vunpack.c.l.b16 %v848
      %v885 = vunpack.c.l.b16 %v849
      %v886 = vunpack.c.l.b16 %v850
      %v887 = vunpack.c.l.b16 %v851
      %v888 = vunpack.c.l.b16 %v852
      %v889 = vunpack.c.l.b16 %v853
      %v890 = vpack.c.b16 %v875, %v874
      %v891 = vpack.c.b16 %v877, %v876
      %v892 = vpack.c.b16 %v879, %v878
      %v893 = vpack.c.b16 %v881, %v880
      %v894 = vpack.c.b16 %v883, %v882
      %v895 = vpack.c.b16 %v885, %v884
      %v896 = vpack.c.b16 %v887, %v886
      %v897 = vpack.c.b16 %v889, %v888
      %906 = vmatpush.bf16.msra.mxu0 %v897
      %907 = vmatpush.bf16.msra.mxu0 %v896
      %908 = vmatpush.bf16.msra.mxu0 %v895
      %909 = vmatpush.bf16.msra.mxu0 %v894
      %910 = vmatpush.bf16.msra.mxu0 %v893
      %911 = vmatpush.bf16.msra.mxu0 %v892
      %912 = vmatpush.bf16.msra.mxu0 %v891
      %913 = vmatpush.bf16.msra.mxu0 %v890
      %914 = vmatmul.bf16.gmra.mxu0 %v834
      %v915 = vpop.f32.mrf.mxu0
      %v916 = vadd.f32 %v856, %v915
      %v917 = vpop.f32.mrf.mxu0
      %v918 = vadd.f32 %v856, %v917
      %919 = vmatmul.bf16.gmra.mxu0 %v835
      %v920 = vpop.f32.mrf.mxu0
      %v921 = vadd.f32 %v856, %v920
      %v922 = vpop.f32.mrf.mxu0
      %v923 = vadd.f32 %v856, %v922
      %924 = vmatmul.bf16.gmra.mxu0 %v836
      %v925 = vpop.f32.mrf.mxu0
      %v926 = vadd.f32 %v856, %v925
      %v927 = vpop.f32.mrf.mxu0
      %v928 = vadd.f32 %v856, %v927
      %929 = vmatmul.bf16.gmra.mxu0 %v837
      %v930 = vpop.f32.mrf.mxu0
      %v931 = vadd.f32 %v856, %v930
      %v932 = vpop.f32.mrf.mxu0
      %v933 = vadd.f32 %v856, %v932
      %934 = vdwg.mxu0
      %v935 = vmax.f32 %v916, 0.0
      %v936 = vmax.f32 %v918, 0.0
      %v937 = vmax.f32 %v921, 0.0
      %v938 = vmax.f32 %v923, 0.0
      %v939 = vmax.f32 %v926, 0.0
      %v940 = vmax.f32 %v928, 0.0
      %v941 = vmax.f32 %v931, 0.0
      %v942 = vmax.f32 %v933, 0.0
      %v943 = vpack.c.bf16 %v936, %v935
      %v944 = vpack.c.bf16 %v938, %v937
      %v945 = vpack.c.bf16 %v940, %v939
      %v946 = vpack.c.bf16 %v942, %v941
      %v947 = vld [vmem:[%s570] sm:$0xf]
      %v948 = vld [vmem:[%s570 + $0x4] sm:$0xf]
      %v949 = vld [vmem:[%s570 + $0x8] sm:$0xf]
      %v950 = vld [vmem:[%s570 + $0xc] sm:$0xf]
      %v951 = vld [vmem:[%s570 + $0x10] sm:$0xf]
      %v952 = vld [vmem:[%s570 + $0x14] sm:$0xf]
      %v953 = vld [vmem:[%s570 + $0x18] sm:$0xf]
      %v954 = vld [vmem:[%s570 + $0x1c] sm:$0xf]
      %v955 = vld [vmem:[%s570 + $0x20] sm:$0xf]
      %v956 = vld [vmem:[%s570 + $0x24] sm:$0xf]
      %v957 = vld [vmem:[%s570 + $0x28] sm:$0xf]
      %v958 = vld [vmem:[%s570 + $0x2c] sm:$0xf]
      %v959 = vld [vmem:[%s570 + $0x30] sm:$0xf]
      %v960 = vld [vmem:[%s570 + $0x34] sm:$0xf]
      %v961 = vld [vmem:[%s570 + $0x38] sm:$0xf]
      %v962 = vld [vmem:[%s570 + $0x3c] sm:$0xf]
      %v963 = vld [vmem:[%s573] sm:$0x1]
      %v965 = vperm.slane %v963, 0
      %v983 = vunpack.c.l.b16 %v947
      %v984 = vunpack.c.l.b16 %v948
      %v985 = vunpack.c.l.b16 %v949
      %v986 = vunpack.c.l.b16 %v950
      %v987 = vunpack.c.l.b16 %v951
      %v988 = vunpack.c.l.b16 %v952
      %v989 = vunpack.c.l.b16 %v953
      %v990 = vunpack.c.l.b16 %v954
      %v991 = vunpack.c.l.b16 %v955
      %v992 = vunpack.c.l.b16 %v956
      %v993 = vunpack.c.l.b16 %v957
      %v994 = vunpack.c.l.b16 %v958
      %v995 = vunpack.c.l.b16 %v959
      %v996 = vunpack.c.l.b16 %v960
      %v997 = vunpack.c.l.b16 %v961
      %v998 = vunpack.c.l.b16 %v962
      %v999 = vpack.c.b16 %v984, %v983
      %v1000 = vpack.c.b16 %v986, %v985
      %v1001 = vpack.c.b16 %v988, %v987
      %v1002 = vpack.c.b16 %v990, %v989
      %v1003 = vpack.c.b16 %v992, %v991
      %v1004 = vpack.c.b16 %v994, %v993
      %v1005 = vpack.c.b16 %v996, %v995
      %v1006 = vpack.c.b16 %v998, %v997
      %1015 = vmatpush.bf16.msra.mxu0 %v1006
      %1016 = vmatpush.bf16.msra.mxu0 %v1005
      %1017 = vmatpush.bf16.msra.mxu0 %v1004
      %1018 = vmatpush.bf16.msra.mxu0 %v1003
      %1019 = vmatpush.bf16.msra.mxu0 %v1002
      %1020 = vmatpush.bf16.msra.mxu0 %v1001
      %1021 = vmatpush.bf16.msra.mxu0 %v1000
      %1022 = vmatpush.bf16.msra.mxu0 %v999
      %1023 = vmatmul.bf16.gmra.mxu0 %v943
      %v1024 = vpop.f32.mrf.mxu0
      %v1025 = vadd.f32 %v965, %v1024
      %v1026 = vpop.f32.mrf.mxu0
      %v1027 = vadd.f32 %v965, %v1026
      %1028 = vmatmul.bf16.gmra.mxu0 %v944
      %v1029 = vpop.f32.mrf.mxu0
      %v1030 = vadd.f32 %v965, %v1029
      %v1031 = vpop.f32.mrf.mxu0
      %v1032 = vadd.f32 %v965, %v1031
      %1033 = vmatmul.bf16.gmra.mxu0 %v945
      %v1034 = vpop.f32.mrf.mxu0
      %v1035 = vadd.f32 %v965, %v1034
      %v1036 = vpop.f32.mrf.mxu0
      %v1037 = vadd.f32 %v965, %v1036
      %1038 = vmatmul.bf16.gmra.mxu0 %v946
      %v1039 = vpop.f32.mrf.mxu0
      %v1040 = vadd.f32 %v965, %v1039
      %v1041 = vpop.f32.mrf.mxu0
      %v1042 = vadd.f32 %v965, %v1041
      %1043 = vdwg.mxu0
      %v1044 = vtanh.pop %v1025
      %v1045 = vtanh.pop %v1027
      %v1046 = vtanh.pop %v1030
      %v1047 = vtanh.pop %v1032
      %v1048 = vtanh.pop %v1035
      %v1049 = vtanh.pop %v1037
      %v1050 = vtanh.pop %v1040
      %v1051 = vtanh.pop %v1042
      %vm1052 = vcmask 23552
      %1053 = vst.msk [vmem:[%s583] sm:$0xff] %vm1052, %v1044
      %1054 = vst.msk [vmem:[%s583 + $0x8] sm:$0xff] %vm1052, %v1045
      %1055 = vst.msk [vmem:[%s583 + $0x10] sm:$0xff] %vm1052, %v1046
      %1056 = vst.msk [vmem:[%s583 + $0x18] sm:$0xff] %vm1052, %v1047
      %1057 = vst.msk [vmem:[%s583 + $0x20] sm:$0xff] %vm1052, %v1048
      %1058 = vst.msk [vmem:[%s583 + $0x28] sm:$0xff] %vm1052, %v1049
      %1059 = vst.msk [vmem:[%s583 + $0x30] sm:$0xff] %vm1052, %v1050
      %1060 = vst.msk [vmem:[%s583 + $0x38] sm:$0xff] %vm1052, %v1051
      %s1061 = sadd.s32 %s26, %s28
      %s1062 = smul.u32 8, %s1061
      %p1063 = scmp.lt.s32.totalorder %s27, 1
      %s1064 = scalar_select %p1063, %s27, 1
      %p1065 = scmp.lt.s32.totalorder %s1062, 15
      %s1066 = scalar_select %p1065, %s1062, 15
      %s1067 = smul.addr %s1064, 16
      %s1068 = sadd.s32 %s1066, %s1067
      %s1069 = smul.addr %s1068, 8
      %s1070 = scalar_lea.vmem %s10, %s1069
      // Predicated region
      $region61: #{_lambda_.3} parent=59 // pred_check
        %p1071 = pneg %p328
      $region62: #{_lambda_.3} parent=59 // pred_check_branch
        %1073 = sbr.rel (%p1071) target = $region64
      $region63: #{_lambda_.3} parent=59 // pred_region
        %s1074 = sadd.s32 %s26, %s28
        %s1075 = smul.u32 8, %s1074
      $region64: #{_lambda_.3} parent=59 // pred_fallthru
        _
    $region60: #{_lambda_.3} parent=5 // pred_fallthru
      _
    %p1076 = scmp.le.s32.totalorder 2, %s16
    // Predicated region
    $region65: #{_lambda_.3} parent=5 // pred_check
      %p1077 = pneg %p1076
    $region66: #{_lambda_.3} parent=5 // pred_check_branch
      %1079 = sbr.rel (%p1077) target = $region68
    $region67: #{_lambda_.3} parent=5 // pred_region
      %s1080 = ssub.s32 %s16, 2
      // Predicated region
      $region69: #{_lambda_.3} parent=67 // pred_check
        %p1081 = pneg %p334
      $region70: #{_lambda_.3} parent=67 // pred_check_branch
        %1083 = sbr.rel (%p1081) target = $region72
      $region71: #{_lambda_.3} parent=67 // pred_region
        %s1084 = sadd.s32 %s29, %s31
        %s1085 = smul.u32 8, %s1084
        %p1086 = scmp.lt.s32.totalorder %s30, 1
        %s1087 = scalar_select %p1086, %s30, 1
        %p1088 = scmp.lt.s32.totalorder %s1085, 15
        %s1089 = scalar_select %p1088, %s1085, 15
        %s1090 = smul.addr %s1087, 16
        %s1091 = sadd.s32 %s1089, %s1090
        %s1092 = smul.addr %s1091, 8
        %s1093 = scalar_lea.vmem %s10, %s1092
      $region72: #{_lambda_.3} parent=67 // pred_fallthru
        _
    $region68: #{_lambda_.3} parent=5 // pred_fallthru
      _
  $region6: #{_lambda_.3} parent=0 // loop_footer
    %s20 = sadd.s32 1, %s16
  $region7: #{_lambda_.3} parent=0 // loop_footer_branch
    %15 = sbr.rel target = $region3
  $region8: #{_lambda_.3} parent=0 // loop_exit
    _

// kernel: _lambda_.2
$region0: #{_lambda_.2}
  #allocation0 [shape = 'u32[]', space=smem, size = 0x4, offset = 0x4, fixed_abs, tag = 'smem constant byte address 0x4 - core index']
  #allocation1 [shape = 'u32[72,128]{1,0:T(1,128)}', space=vmem, size = 0x9000, scoped, tag = 'internal scratch']
  %s0 = inlined_call_operand.vmem [shape: f32[2,3,64], index: 0, kind: input, shape index: {}]
  %s1 = inlined_call_operand.hbm [shape: f32[64,3], index: 1, kind: input, shape index: {}]
  %s2 = inlined_call_operand.hbm [shape: f32[64,1], index: 2, kind: input, shape index: {}]
  %s3 = inlined_call_operand.hbm [shape: bf16[128,64], index: 3, kind: input, shape index: {}]
  %s4 = inlined_call_operand.hbm [shape: f32[128,1], index: 4, kind: input, shape index: {}]
  %s5 = inlined_call_operand.hbm [shape: bf16[1024,128], index: 5, kind: input, shape index: {}]
  %s6 = inlined_call_operand.hbm [shape: f32[1024,1], index: 6, kind: input, shape index: {}]
  %s7 = inlined_call_operand.vmem [shape: f32[1,2,1024,1], index: 7, kind: output, shape index: {}]
  %s8 = sld [smem:[#allocation0]]
  $region89: #{_lambda_.2} parent=0
    _
  %s10 = ssub.s32 1, %s8
  %s11 = scalar_select 0, %s10, %s8
  $region1: #{_lambda_.2} parent=0
    #allocation2 [shape = 'u8[32768]{0}', space=vmem, size = 0x8000, scoped, tag = 'input window, operand 1, single buffered']
    #allocation3 [shape = 's32[2]{0}', space=sflag, size = 0x8, scoped, tag = 'scoped memory for _lambda_.2']
    #allocation4 [shape = 'u8[32768]{0}', space=vmem, size = 0x8000, scoped, tag = 'input window, operand 2, single buffered']
    #allocation5 [shape = 's32[1]{0}', space=sflag, size = 0x4, scoped, tag = 'scoped memory for _lambda_.2']
    #allocation6 [shape = 'u8[32768]{0}', space=vmem, size = 0x8000, scoped, tag = 'input window, operand 3, single buffered']
    #allocation7 [shape = 'u8[65536]{0}', space=vmem, size = 0x10000, scoped, tag = 'input window, operand 4, single buffered']
    #allocation8 [shape = 's32[1]{0}', space=sflag, size = 0x4, scoped, tag = 'scoped memory for _lambda_.2']
    #allocation9 [shape = 'u8[262144]{0}', space=vmem, size = 0x40000, scoped, tag = 'input window, operand 5, single buffered']
    #allocation10 [shape = 'u8[524288]{0}', space=vmem, size = 0x80000, scoped, tag = 'input window, operand 6, single buffered']
    #allocation11 [shape = 's32[1]{0}', space=sflag, size = 0x4, scoped, tag = 'scoped memory for _lambda_.2']
    %12 = vsyncpa [#allocation3], 0
    %13 = vsyncpa [#allocation5], 0
    %14 = vsyncpa [#allocation8], 0
    %15 = vsyncpa [#allocation11], 0
    loop: start=0, step=1, limit=4
    $region2: #{_lambda_.2} parent=1 // loop_pre_header
      _
    $region3: #{_lambda_.2} parent=1 // loop_header
      %s17 = sphi 0, %s21
      %p18 = scmp.ge.s32.totalorder %s17, 4
      %s24 = sphi 0, %s43
      %s25 = sphi 0, %s39
      %s26 = sphi 0, %s35
      %s27 = sphi 0, %s24
      %s28 = sphi 0, %s25
      %s29 = sphi 0, %s26
      %s30 = sphi 0, %s27
      %s31 = sphi 0, %s28
      %s32 = sphi 0, %s29
      %s50 = sphi 0, %s52
      %s53 = sphi 0, %s50
      %s54 = sphi 0, %s53
      %s70 = sphi 0, %s54
      %s74 = sphi 0, %s74
      %s76 = sphi 0, %s74
      %s77 = sphi 0, %s76
      %s91 = sphi 0, %s77
      %s95 = sphi 0, %s95
      %s97 = sphi 0, %s95
      %s98 = sphi 0, %s97
      %s112 = sphi 0, %s98
      %s116 = sphi 0, %s116
      %s118 = sphi 0, %s116
      %s119 = sphi 0, %s118
      %s133 = sphi 0, %s119
      %s137 = sphi 0, %s137
      %s139 = sphi 0, %s137
      %s140 = sphi 0, %s139
      %s154 = sphi 0, %s140
      %s158 = sphi 0, %s158
      %s160 = sphi 0, %s158
      %s161 = sphi 0, %s160
      %s175 = sphi 0, %s161
      %s179 = sphi 0, %s179
      %s181 = sphi 0, %s179
      %s182 = sphi 0, %s181
      %s196 = sphi 0, %s182
      %s204 = sphi 0, %s206
      %s207 = sphi 0, %s204
      %s208 = sphi 0, %s207
      %s224 = sphi 0, %s208
    $region4: #{_lambda_.2} parent=1 // loop_header_branch
      %20 = sbr.rel (%p18) target = $region8
    $region5: #{_lambda_.2} parent=1 // loop_body
      %s22 = ssub.s32 %s17, 1
      %s23 = ssub.s32 %s17, 2
      %s33 = sadd.s32 1, %s26
      %p34 = scmp.ge.s32.totalorder %s33, 1
      %s35 = scalar_select %p34, 0, %s33
      %s36 = sadd.s32 1, %s25
      %s37 = scalar_select %p34, %s36, %s25
      %p38 = scmp.ge.s32.totalorder %s37, 2
      %s39 = scalar_select %p38, 0, %s37
      %s40 = sadd.s32 1, %s24
      %s41 = scalar_select %p38, %s40, %s24
      %p42 = scmp.ge.s32.totalorder %s41, 1
      %s43 = scalar_select %p42, 0, %s41
      %s44 = sadd.s32 %s24, %s26
      %s45 = sadd.s32 %s43, %s35
      %s46 = ssub.s32 %s25, %s39
      %s47 = ssub.s32 %s44, %s45
      %s48 = sor.u32 %s46, %s47
      %p49 = scmp.eq.s32.totalorder %s48, 0
      %s51 = sadd.s32 %s50, 1
      %s52 = scalar_select %p49, %s50, %s51
      %p55 = pneg %p49
      %p56 = scmp.eq.s32.totalorder %s17, 1
      %p57 = por %p55, %p56
      %p58 = scmp.ne.s32.totalorder %s50, %s53
      %p59 = scmp.eq.s32.totalorder %s17, 0
      %p60 = por %p58, %p59
      %p61 = scmp.ne.s32.totalorder %s50, %s53
      %p62 = scmp.eq.s32.totalorder %s22, 1
      %p63 = por %p61, %p62
      %p64 = scmp.ne.s32.totalorder %s53, %s54
      %p65 = scmp.eq.s32.totalorder %s22, 0
      %p66 = por %p64, %p65
      %p67 = scmp.ne.s32.totalorder %s53, %s54
      %p68 = scmp.eq.s32.totalorder %s23, 1
      %p69 = por %p67, %p68
      %p71 = scmp.ne.s32.totalorder %s54, %s70
      %p72 = scmp.eq.s32.totalorder %s23, 0
      %p73 = por %p71, %p72
      %s75 = sadd.s32 %s74, 1
      %p78 = scmp.eq.s32.totalorder %s17, 1
      %p79 = scmp.ne.s32.totalorder %s74, %s76
      %p80 = scmp.eq.s32.totalorder %s17, 0
      %p81 = por %p79, %p80
      %p82 = scmp.ne.s32.totalorder %s74, %s76
      %p83 = scmp.eq.s32.totalorder %s22, 1
      %p84 = por %p82, %p83
      %p85 = scmp.ne.s32.totalorder %s76, %s77
      %p86 = scmp.eq.s32.totalorder %s22, 0
      %p87 = por %p85, %p86
      %p88 = scmp.ne.s32.totalorder %s76, %s77
      %p89 = scmp.eq.s32.totalorder %s23, 1
      %p90 = por %p88, %p89
      %p92 = scmp.ne.s32.totalorder %s77, %s91
      %p93 = scmp.eq.s32.totalorder %s23, 0
      %p94 = por %p92, %p93
      %s96 = sadd.s32 %s95, 1
      %p99 = scmp.eq.s32.totalorder %s17, 1
      %p100 = scmp.ne.s32.totalorder %s95, %s97
      %p101 = scmp.eq.s32.totalorder %s17, 0
      %p102 = por %p100, %p101
      %p103 = scmp.ne.s32.totalorder %s95, %s97
      %p104 = scmp.eq.s32.totalorder %s22, 1
      %p105 = por %p103, %p104
      %p106 = scmp.ne.s32.totalorder %s97, %s98
      %p107 = scmp.eq.s32.totalorder %s22, 0
      %p108 = por %p106, %p107
      %p109 = scmp.ne.s32.totalorder %s97, %s98
      %p110 = scmp.eq.s32.totalorder %s23, 1
      %p111 = por %p109, %p110
      %p113 = scmp.ne.s32.totalorder %s98, %s112
      %p114 = scmp.eq.s32.totalorder %s23, 0
      %p115 = por %p113, %p114
      %s117 = sadd.s32 %s116, 1
      %p120 = scmp.eq.s32.totalorder %s17, 1
      %p121 = scmp.ne.s32.totalorder %s116, %s118
      %p122 = scmp.eq.s32.totalorder %s17, 0
      %p123 = por %p121, %p122
      %p124 = scmp.ne.s32.totalorder %s116, %s118
      %p125 = scmp.eq.s32.totalorder %s22, 1
      %p126 = por %p124, %p125
      %p127 = scmp.ne.s32.totalorder %s118, %s119
      %p128 = scmp.eq.s32.totalorder %s22, 0
      %p129 = por %p127, %p128
      %p130 = scmp.ne.s32.totalorder %s118, %s119
      %p131 = scmp.eq.s32.totalorder %s23, 1
      %p132 = por %p130, %p131
      %p134 = scmp.ne.s32.totalorder %s119, %s133
      %p135 = scmp.eq.s32.totalorder %s23, 0
      %p136 = por %p134, %p135
      %s138 = sadd.s32 %s137, 1
      %p141 = scmp.eq.s32.totalorder %s17, 1
      %p142 = scmp.ne.s32.totalorder %s137, %s139
      %p143 = scmp.eq.s32.totalorder %s17, 0
      %p144 = por %p142, %p143
      %p145 = scmp.ne.s32.totalorder %s137, %s139
      %p146 = scmp.eq.s32.totalorder %s22, 1
      %p147 = por %p145, %p146
      %p148 = scmp.ne.s32.totalorder %s139, %s140
      %p149 = scmp.eq.s32.totalorder %s22, 0
      %p150 = por %p148, %p149
      %p151 = scmp.ne.s32.totalorder %s139, %s140
      %p152 = scmp.eq.s32.totalorder %s23, 1
      %p153 = por %p151, %p152
      %p155 = scmp.ne.s32.totalorder %s140, %s154
      %p156 = scmp.eq.s32.totalorder %s23, 0
      %p157 = por %p155, %p156
      %s159 = sadd.s32 %s158, 1
      %p162 = scmp.eq.s32.totalorder %s17, 1
      %p163 = scmp.ne.s32.totalorder %s158, %s160
      %p164 = scmp.eq.s32.totalorder %s17, 0
      %p165 = por %p163, %p164
      %p166 = scmp.ne.s32.totalorder %s158, %s160
      %p167 = scmp.eq.s32.totalorder %s22, 1
      %p168 = por %p166, %p167
      %p169 = scmp.ne.s32.totalorder %s160, %s161
      %p170 = scmp.eq.s32.totalorder %s22, 0
      %p171 = por %p169, %p170
      %p172 = scmp.ne.s32.totalorder %s160, %s161
      %p173 = scmp.eq.s32.totalorder %s23, 1
      %p174 = por %p172, %p173
      %p176 = scmp.ne.s32.totalorder %s161, %s175
      %p177 = scmp.eq.s32.totalorder %s23, 0
      %p178 = por %p176, %p177
      %s180 = sadd.s32 %s179, 1
      %p183 = scmp.eq.s32.totalorder %s17, 1
      %p184 = scmp.ne.s32.totalorder %s179, %s181
      %p185 = scmp.eq.s32.totalorder %s17, 0
      %p186 = por %p184, %p185
      %p187 = scmp.ne.s32.totalorder %s179, %s181
      %p188 = scmp.eq.s32.totalorder %s22, 1
      %p189 = por %p187, %p188
      %p190 = scmp.ne.s32.totalorder %s181, %s182
      %p191 = scmp.eq.s32.totalorder %s22, 0
      %p192 = por %p190, %p191
      %p193 = scmp.ne.s32.totalorder %s181, %s182
      %p194 = scmp.eq.s32.totalorder %s23, 1
      %p195 = por %p193, %p194
      %p197 = scmp.ne.s32.totalorder %s182, %s196
      %p198 = scmp.eq.s32.totalorder %s23, 0
      %p199 = por %p197, %p198
      %s200 = ssub.s32 %s24, %s43
      %s201 = ssub.s32 %s25, %s39
      %s202 = sor.u32 %s200, %s201
      %p203 = scmp.eq.s32.totalorder %s202, 0
      %s205 = sadd.s32 %s204, 1
      %s206 = scalar_select %p203, %s204, %s205
      %p209 = pneg %p203
      %p210 = scmp.eq.s32.totalorder %s17, 1
      %p211 = por %p209, %p210
      %p212 = scmp.ne.s32.totalorder %s204, %s207
      %p213 = scmp.eq.s32.totalorder %s17, 0
      %p214 = por %p212, %p213
      %p215 = scmp.ne.s32.totalorder %s204, %s207
      %p216 = scmp.eq.s32.totalorder %s22, 1
      %p217 = por %p215, %p216
      %p218 = scmp.ne.s32.totalorder %s207, %s208
      %p219 = scmp.eq.s32.totalorder %s22, 0
      %p220 = por %p218, %p219
      %p221 = scmp.ne.s32.totalorder %s207, %s208
      %p222 = scmp.eq.s32.totalorder %s23, 1
      %p223 = por %p221, %p222
      %p225 = scmp.ne.s32.totalorder %s208, %s224
      %p226 = scmp.eq.s32.totalorder %s23, 0
      %p227 = por %p225, %p226
      %p228 = scmp.le.s32.totalorder 1, %s17
      %p229 = scmp.lt.s32.totalorder %s17, 3
      %p230 = pnand %p228, %p229
      %p231 = pneg %p230
      // Predicated region
      $region9: #{_lambda_.2} parent=5 // pred_check
        _
      $region10: #{_lambda_.2} parent=5 // pred_check_branch
        %233 = sbr.rel (%p230) target = $region12
      $region11: #{_lambda_.2} parent=5 // pred_region
        %s234 = ssub.s32 %s17, 1
        // Predicated region
        $region13: #{_lambda_.2} parent=11 // pred_check
          %p235 = pneg %p87
        $region14: #{_lambda_.2} parent=11 // pred_check_branch
          %237 = sbr.rel (%p235) target = $region16
        $region15: #{_lambda_.2} parent=11 // pred_region
          %239 = vsyncadd [#allocation3], 0
          %s240 = sshll.u32 %s1, 4
          %s241 = int_to_ptr.hbm [resolvable:$true] %s240
          %s242 = sshll.u32 [#allocation2], 4
          %s243 = int_to_ptr.vmem [resolvable:$true] %s242
          %248 = dma.hbm_to_vmem [thread:$0]  %s241, 1024, %s243, [#allocation3], 128, 128, 8
        $region16: #{_lambda_.2} parent=11 // pred_fallthru
          _
        // Predicated region
        $region17: #{_lambda_.2} parent=11 // pred_check
          %p249 = pneg %p108
        $region18: #{_lambda_.2} parent=11 // pred_check_branch
          %251 = sbr.rel (%p249) target = $region20
        $region19: #{_lambda_.2} parent=11 // pred_region
          %253 = vsyncadd [#allocation5], 0
          %s254 = sshll.u32 %s2, 4
          %s255 = int_to_ptr.hbm [resolvable:$true] %s254
          %s256 = sshll.u32 [#allocation4], 4
          %s257 = int_to_ptr.vmem [resolvable:$true] %s256
          %262 = dma.hbm_to_vmem [thread:$0]  %s255, 1024, %s257, [#allocation5], 128, 128, 8
        $region20: #{_lambda_.2} parent=11 // pred_fallthru
          _
        // Predicated region
        $region21: #{_lambda_.2} parent=11 // pred_check
          %p263 = pneg %p129
        $region22: #{_lambda_.2} parent=11 // pred_check_branch
          %265 = sbr.rel (%p263) target = $region24
        $region23: #{_lambda_.2} parent=11 // pred_region
          %267 = vsyncadd [#allocation5], 0
          %s268 = sshll.u32 %s3, 4
          %s269 = int_to_ptr.hbm [resolvable:$true] %s268
          %s270 = sshll.u32 [#allocation6], 4
          %s271 = int_to_ptr.vmem [resolvable:$true] %s270
          %276 = dma.hbm_to_vmem [thread:$0]  %s269, 1024, %s271, [#allocation5], 64, 64, 4
        $region24: #{_lambda_.2} parent=11 // pred_fallthru
          _
        // Predicated region
        $region25: #{_lambda_.2} parent=11 // pred_check
          %p277 = pneg %p150
        $region26: #{_lambda_.2} parent=11 // pred_check_branch
          %279 = sbr.rel (%p277) target = $region28
        $region27: #{_lambda_.2} parent=11 // pred_region
          %281 = vsyncadd [#allocation8], 0
          %s282 = sshll.u32 %s4, 4
          %s283 = int_to_ptr.hbm [resolvable:$true] %s282
          %s284 = sshll.u32 [#allocation7], 4
          %s285 = int_to_ptr.vmem [resolvable:$true] %s284
          %290 = dma.hbm_to_vmem [thread:$0]  %s283, 2048, %s285, [#allocation8], 128, 128, 8
        $region28: #{_lambda_.2} parent=11 // pred_fallthru
          _
        // Predicated region
        $region29: #{_lambda_.2} parent=11 // pred_check
          %p291 = pneg %p171
        $region30: #{_lambda_.2} parent=11 // pred_check_branch
          %293 = sbr.rel (%p291) target = $region32
        $region31: #{_lambda_.2} parent=11 // pred_region
          %295 = vsyncadd [#allocation8], 0
          %s296 = sshll.u32 %s5, 4
          %s297 = int_to_ptr.hbm [resolvable:$true] %s296
          %s298 = sshll.u32 [#allocation9], 4
          %s299 = int_to_ptr.vmem [resolvable:$true] %s298
          %304 = dma.hbm_to_vmem [thread:$0]  %s297, 8192, %s299, [#allocation8], 64, 64, 4
        $region32: #{_lambda_.2} parent=11 // pred_fallthru
          _
        // Predicated region
        $region33: #{_lambda_.2} parent=11 // pred_check
          %p305 = pneg %p192
        $region34: #{_lambda_.2} parent=11 // pred_check_branch
          %307 = sbr.rel (%p305) target = $region36
        $region35: #{_lambda_.2} parent=11 // pred_region
          %309 = vsyncadd [#allocation11], 0
          %s310 = sshll.u32 %s6, 4
          %s311 = int_to_ptr.hbm [resolvable:$true] %s310
          %s312 = sshll.u32 [#allocation10], 4
          %s313 = int_to_ptr.vmem [resolvable:$true] %s312
          %318 = dma.hbm_to_vmem [thread:$0]  %s311, 16384, %s313, [#allocation11], 128, 128, 8
        $region36: #{_lambda_.2} parent=11 // pred_fallthru
          _
      $region12: #{_lambda_.2} parent=5 // pred_fallthru
        _
      %p319 = scmp.lt.s32.totalorder %s17, 2
      // Predicated region
      $region37: #{_lambda_.2} parent=5 // pred_check
        %p320 = pneg %p319
      $region38: #{_lambda_.2} parent=5 // pred_check_branch
        %322 = sbr.rel (%p320) target = $region40
      $region39: #{_lambda_.2} parent=5 // pred_region
        // Predicated region
        $region41: #{_lambda_.2} parent=39 // pred_check
          %p323 = pneg %p60
        $region42: #{_lambda_.2} parent=39 // pred_check_branch
          %325 = sbr.rel (%p323) target = $region44
        $region43: #{_lambda_.2} parent=39 // pred_region
          %s326 = sadd.s32 %s24, %s26
          %p327 = scmp.lt.s32.totalorder %s25, 1
          %s328 = scalar_select %p327, %s25, 1
          %p329 = scmp.lt.s32.totalorder %s326, 0
          %s330 = scalar_select %p329, %s326, 0
          %s331 = sadd.s32 %s330, %s328
          %s332 = smul.addr %s331, 4
          %s333 = scalar_lea.vmem %s0, %s332
          %s334 = sadd.s32 %s24, %s26
        $region44: #{_lambda_.2} parent=39 // pred_fallthru
          _
      $region40: #{_lambda_.2} parent=5 // pred_fallthru
        _
      %p335 = scmp.le.s32.totalorder 1, %s17
      %p336 = scmp.lt.s32.totalorder %s17, 3
      %p337 = pnand %p335, %p336
      %p338 = pneg %p337
      // Predicated region
      $region45: #{_lambda_.2} parent=5 // pred_check
        _
      $region46: #{_lambda_.2} parent=5 // pred_check_branch
        %340 = sbr.rel (%p337) target = $region48
      $region47: #{_lambda_.2} parent=5 // pred_region
        %s341 = ssub.s32 %s17, 1
        // Predicated region
        $region49: #{_lambda_.2} parent=47 // pred_check
          %p342 = pneg %p87
        $region50: #{_lambda_.2} parent=47 // pred_check_branch
          %344 = sbr.rel (%p342) target = $region52
        $region51: #{_lambda_.2} parent=47 // pred_region
          %346 = dma.done [#allocation3], 1024
        $region52: #{_lambda_.2} parent=47 // pred_fallthru
          _
        // Predicated region
        $region53: #{_lambda_.2} parent=47 // pred_check
          %p347 = pneg %p108
        $region54: #{_lambda_.2} parent=47 // pred_check_branch
          %349 = sbr.rel (%p347) target = $region56
        $region55: #{_lambda_.2} parent=47 // pred_region
          %351 = dma.done [#allocation5], 1024
        $region56: #{_lambda_.2} parent=47 // pred_fallthru
          _
        // Predicated region
        $region57: #{_lambda_.2} parent=47 // pred_check
          %p352 = pneg %p129
        $region58: #{_lambda_.2} parent=47 // pred_check_branch
          %354 = sbr.rel (%p352) target = $region60
        $region59: #{_lambda_.2} parent=47 // pred_region
          %356 = dma.done [#allocation5], 1024
        $region60: #{_lambda_.2} parent=47 // pred_fallthru
          _
        // Predicated region
        $region61: #{_lambda_.2} parent=47 // pred_check
          %p357 = pneg %p150
        $region62: #{_lambda_.2} parent=47 // pred_check_branch
          %359 = sbr.rel (%p357) target = $region64
        $region63: #{_lambda_.2} parent=47 // pred_region
          %361 = dma.done [#allocation8], 2048
        $region64: #{_lambda_.2} parent=47 // pred_fallthru
          _
        // Predicated region
        $region65: #{_lambda_.2} parent=47 // pred_check
          %p362 = pneg %p171
        $region66: #{_lambda_.2} parent=47 // pred_check_branch
          %364 = sbr.rel (%p362) target = $region68
        $region67: #{_lambda_.2} parent=47 // pred_region
          %366 = dma.done [#allocation8], 8192
        $region68: #{_lambda_.2} parent=47 // pred_fallthru
          _
        // Predicated region
        $region69: #{_lambda_.2} parent=47 // pred_check
          %p367 = pneg %p192
        $region70: #{_lambda_.2} parent=47 // pred_check_branch
          %369 = sbr.rel (%p367) target = $region72
        $region71: #{_lambda_.2} parent=47 // pred_region
          %371 = dma.done [#allocation11], 16384
        $region72: #{_lambda_.2} parent=47 // pred_fallthru
          _
        %s372 = sadd.s32 %s27, %s29
        %p373 = scmp.lt.s32.totalorder %s28, 1
        %s374 = scalar_select %p373, %s28, 1
        %p375 = scmp.lt.s32.totalorder %s372, 0
        %s376 = scalar_select %p375, %s372, 0
        %s377 = sadd.s32 %s376, %s374
        %s378 = smul.addr %s377, 4
        %s379 = scalar_lea.vmem %s0, %s378
        %p380 = pneg %p66
        %p381 = pneg %p63
        %p382 = pneg %p87
        %p383 = pneg %p84
        %p384 = pneg %p108
        %p385 = pneg %p105
        %p386 = pneg %p129
        %p387 = pneg %p126
        %p388 = pneg %p150
        %p389 = pneg %p147
        %p390 = pneg %p171
        %p391 = pneg %p168
        %p392 = pneg %p192
        %p393 = pneg %p189
        %p394 = pneg %p220
        %p395 = pneg %p217
        %p396 = scmp.lt.s32.totalorder %s27, 0
        %s397 = scalar_select %p396, %s27, 0
        %p398 = scmp.lt.s32.totalorder %s28, 1
        %s399 = scalar_select %p398, %s28, 1
        %s400 = smul.addr %s399, 128
        %s401 = smul.addr %s397, 256
        %s402 = sadd.s32 %s400, %s401
        %s403 = smul.addr %s402, 8
        %s404 = scalar_lea.vmem %s7, %s403
        %s405 = sadd.s32 %s27, %s29
        %p406 = scmp.lt.s32.totalorder %s28, 1
        %s407 = scalar_select %p406, %s28, 1
        %p408 = scmp.lt.s32.totalorder %s405, 0
        %s409 = scalar_select %p408, %s405, 0
        %s410 = sadd.s32 %s409, %s407
        %s411 = smul.addr %s410, 4
        %s412 = scalar_lea.vmem %s0, %s411
        %s413 = sadd.s32 %s27, %s29
        %p414 = scmp.lt.s32.totalorder %s27, 0
        %s415 = scalar_select %p414, %s27, 0
        %p416 = scmp.lt.s32.totalorder %s28, 1
        %s417 = scalar_select %p416, %s28, 1
        %s418 = smul.addr %s417, 128
        %s419 = smul.addr %s415, 256
        %s420 = sadd.s32 %s418, %s419
        %s421 = smul.addr %s420, 8
        %s422 = scalar_lea.vmem %s7, %s421
        %v424 = vld [vmem:[%s412] sm:$0x7]
        %v425 = vld [vmem:[#allocation2] sm:$0xff]
        %v426 = vld [vmem:[#allocation2 + $0x8] sm:$0xff]
        %v427 = vld [vmem:[#allocation2 + $0x10] sm:$0xff]
        %v428 = vld [vmem:[#allocation2 + $0x18] sm:$0xff]
        %v429 = vld [vmem:[#allocation2 + $0x20] sm:$0xff]
        %v430 = vld [vmem:[#allocation2 + $0x28] sm:$0xff]
        %v431 = vld [vmem:[#allocation2 + $0x30] sm:$0xff]
        %v432 = vld [vmem:[#allocation2 + $0x38] sm:$0xff]
        %v433 = vld [vmem:[#allocation4] sm:$0xff]
        %v434 = vld [vmem:[#allocation4 + $0x8] sm:$0xff]
        %v435 = vld [vmem:[#allocation4 + $0x10] sm:$0xff]
        %v436 = vld [vmem:[#allocation4 + $0x18] sm:$0xff]
        %v437 = vld [vmem:[#allocation4 + $0x20] sm:$0xff]
        %v438 = vld [vmem:[#allocation4 + $0x28] sm:$0xff]
        %v439 = vld [vmem:[#allocation4 + $0x30] sm:$0xff]
        %v440 = vld [vmem:[#allocation4 + $0x38] sm:$0xff]
        %442 = vset.pattern.permute.xlu0 0
        %443 = vperm.xlu0 %442, %v433
        %v444 = vpop.permute.xlu0 %443
        %447 = vset.pattern.permute.xlu0 0
        %448 = vperm.xlu0 %447, %v434
        %v449 = vpop.permute.xlu0 %448
        %452 = vset.pattern.permute.xlu0 0
        %453 = vperm.xlu0 %452, %v435
        %v454 = vpop.permute.xlu0 %453
        %457 = vset.pattern.permute.xlu0 0
        %458 = vperm.xlu0 %457, %v436
        %v459 = vpop.permute.xlu0 %458
        %462 = vset.pattern.permute.xlu0 0
        %463 = vperm.xlu0 %462, %v437
        %v464 = vpop.permute.xlu0 %463
        %467 = vset.pattern.permute.xlu0 0
        %468 = vperm.xlu0 %467, %v438
        %v469 = vpop.permute.xlu0 %468
        %472 = vset.pattern.permute.xlu0 0
        %473 = vperm.xlu0 %472, %v439
        %v474 = vpop.permute.xlu0 %473
        %477 = vset.pattern.permute.xlu0 0
        %478 = vperm.xlu0 %477, %v440
        %v479 = vpop.permute.xlu0 %478
        %vm481 = vcmask 23552
        %v483 = vsel %vm481, %v425, 0
        %v486 = vsel %vm481, %v426, 0
        %v489 = vsel %vm481, %v427, 0
        %v492 = vsel %vm481, %v428, 0
        %v495 = vsel %vm481, %v429, 0
        %v498 = vsel %vm481, %v430, 0
        %v501 = vsel %vm481, %v431, 0
        %v504 = vsel %vm481, %v432, 0
        %vm506 = vcmask 1042432
        %v508 = vsel %vm506, %v424, 0
        %510 = vmatpush.msra.mxu0 0.0
        %511 = vmatpush.msra.mxu0 0.0
        %512 = vmatpush.msra.mxu0 0.0
        %513 = vmatpush.msra.mxu0 0.0
        %514 = vmatpush.msra.mxu0 0.0
        %515 = vmatpush.msra.mxu0 0.0
        %516 = vmatpush.msra.mxu0 0.0
        %517 = vmatpush.msra.mxu0 0.0
        %518 = vmatpush.msra.mxu0 0.0
        %519 = vmatpush.msra.mxu0 0.0
        %520 = vmatpush.msra.mxu0 0.0
        %521 = vmatpush.msra.mxu0 0.0
        %522 = vmatpush.msra.mxu0 0.0
        %523 = vmatpush.msra.mxu0 0.0
        %524 = vmatpush.msra.mxu0 0.0
        %525 = vmatpush.msra.mxu0 %v508
        %526 = vmatmul.f32.gmra.mxu0 %v483
        %v527 = vpop.f32.mrf.mxu0
        %v528 = vadd.f32 %v444, %v527
        %529 = vmatmul.f32.gmra.mxu0 %v486
        %v530 = vpop.f32.mrf.mxu0
        %v531 = vadd.f32 %v449, %v530
        %532 = vmatmul.f32.gmra.mxu0 %v489
        %v533 = vpop.f32.mrf.mxu0
        %v534 = vadd.f32 %v454, %v533
        %535 = vmatmul.f32.gmra.mxu0 %v492
        %v536 = vpop.f32.mrf.mxu0
        %v537 = vadd.f32 %v459, %v536
        %538 = vmatmul.f32.gmra.mxu0 %v495
        %v539 = vpop.f32.mrf.mxu0
        %v540 = vadd.f32 %v464, %v539
        %541 = vmatmul.f32.gmra.mxu0 %v498
        %v542 = vpop.f32.mrf.mxu0
        %v543 = vadd.f32 %v469, %v542
        %544 = vmatmul.f32.gmra.mxu0 %v501
        %v545 = vpop.f32.mrf.mxu0
        %v546 = vadd.f32 %v474, %v545
        %547 = vmatmul.f32.gmra.mxu0 %v504
        %v548 = vpop.f32.mrf.mxu0
        %v549 = vadd.f32 %v479, %v548
        %550 = vdwg.mxu0
        %v551 = vmax.f32 %v528, 0.0
        %v552 = vmax.f32 %v531, 0.0
        %v553 = vmax.f32 %v534, 0.0
        %v554 = vmax.f32 %v537, 0.0
        %v555 = vmax.f32 %v540, 0.0
        %v556 = vmax.f32 %v543, 0.0
        %v557 = vmax.f32 %v546, 0.0
        %v558 = vmax.f32 %v549, 0.0
        %v559 = vld [vmem:[#allocation6] sm:$0xf]
        %v560 = vld [vmem:[#allocation6 + $0x4] sm:$0xf]
        %v561 = vld [vmem:[#allocation6 + $0x8] sm:$0xf]
        %v562 = vld [vmem:[#allocation6 + $0xc] sm:$0xf]
        %v563 = vld [vmem:[#allocation6 + $0x10] sm:$0xf]
        %v564 = vld [vmem:[#allocation6 + $0x14] sm:$0xf]
        %v565 = vld [vmem:[#allocation6 + $0x18] sm:$0xf]
        %v566 = vld [vmem:[#allocation6 + $0x1c] sm:$0xf]
        %v567 = vld [vmem:[#allocation6 + $0x20] sm:$0xf]
        %v568 = vld [vmem:[#allocation6 + $0x24] sm:$0xf]
        %v569 = vld [vmem:[#allocation6 + $0x28] sm:$0xf]
        %v570 = vld [vmem:[#allocation6 + $0x2c] sm:$0xf]
        %v571 = vld [vmem:[#allocation6 + $0x30] sm:$0xf]
        %v572 = vld [vmem:[#allocation6 + $0x34] sm:$0xf]
        %v573 = vld [vmem:[#allocation6 + $0x38] sm:$0xf]
        %v574 = vld [vmem:[#allocation6 + $0x3c] sm:$0xf]
        %v575 = vpack.c.bf16 %v552, %v551
        %v576 = vpack.c.bf16 %v554, %v553
        %v577 = vpack.c.bf16 %v556, %v555
        %v578 = vpack.c.bf16 %v558, %v557
        %v579 = vld [vmem:[#allocation7] sm:$0xff]
        %v580 = vld [vmem:[#allocation7 + $0x8] sm:$0xff]
        %v581 = vld [vmem:[#allocation7 + $0x10] sm:$0xff]
        %v582 = vld [vmem:[#allocation7 + $0x18] sm:$0xff]
        %v583 = vld [vmem:[#allocation7 + $0x20] sm:$0xff]
        %v584 = vld [vmem:[#allocation7 + $0x28] sm:$0xff]
        %v585 = vld [vmem:[#allocation7 + $0x30] sm:$0xff]
        %v586 = vld [vmem:[#allocation7 + $0x38] sm:$0xff]
        %v587 = vld [vmem:[#allocation7 + $0x40] sm:$0xff]
        %v588 = vld [vmem:[#allocation7 + $0x48] sm:$0xff]
        %v589 = vld [vmem:[#allocation7 + $0x50] sm:$0xff]
        %v590 = vld [vmem:[#allocation7 + $0x58] sm:$0xff]
        %v591 = vld [vmem:[#allocation7 + $0x60] sm:$0xff]
        %v592 = vld [vmem:[#allocation7 + $0x68] sm:$0xff]
        %v593 = vld [vmem:[#allocation7 + $0x70] sm:$0xff]
        %v594 = vld [vmem:[#allocation7 + $0x78] sm:$0xff]
        %596 = vset.pattern.permute.xlu0 0
        %597 = vperm.xlu0 %596, %v579
        %v598 = vpop.permute.xlu0 %597
        %601 = vset.pattern.permute.xlu0 0
        %602 = vperm.xlu0 %601, %v580
        %v603 = vpop.permute.xlu0 %602
        %606 = vset.pattern.permute.xlu0 0
        %607 = vperm.xlu0 %606, %v581
        %v608 = vpop.permute.xlu0 %607
        %611 = vset.pattern.permute.xlu0 0
        %612 = vperm.xlu0 %611, %v582
        %v613 = vpop.permute.xlu0 %612
        %616 = vset.pattern.permute.xlu0 0
        %617 = vperm.xlu0 %616, %v583
        %v618 = vpop.permute.xlu0 %617
        %621 = vset.pattern.permute.xlu0 0
        %622 = vperm.xlu0 %621, %v584
        %v623 = vpop.permute.xlu0 %622
        %626 = vset.pattern.permute.xlu0 0
        %627 = vperm.xlu0 %626, %v585
        %v628 = vpop.permute.xlu0 %627
        %631 = vset.pattern.permute.xlu0 0
        %632 = vperm.xlu0 %631, %v586
        %v633 = vpop.permute.xlu0 %632
        %636 = vset.pattern.permute.xlu0 0
        %637 = vperm.xlu0 %636, %v587
        %v638 = vpop.permute.xlu0 %637
        %641 = vset.pattern.permute.xlu0 0
        %642 = vperm.xlu0 %641, %v588
        %v643 = vpop.permute.xlu0 %642
        %646 = vset.pattern.permute.xlu0 0
        %647 = vperm.xlu0 %646, %v589
        %v648 = vpop.permute.xlu0 %647
        %651 = vset.pattern.permute.xlu0 0
        %652 = vperm.xlu0 %651, %v590
        %v653 = vpop.permute.xlu0 %652
        %656 = vset.pattern.permute.xlu0 0
        %657 = vperm.xlu0 %656, %v591
        %v658 = vpop.permute.xlu0 %657
        %661 = vset.pattern.permute.xlu0 0
        %662 = vperm.xlu0 %661, %v592
        %v663 = vpop.permute.xlu0 %662
        %666 = vset.pattern.permute.xlu0 0
        %667 = vperm.xlu0 %666, %v593
        %v668 = vpop.permute.xlu0 %667
        %671 = vset.pattern.permute.xlu0 0
        %672 = vperm.xlu0 %671, %v594
        %v673 = vpop.permute.xlu0 %672
        %v691 = vunpack.c.l.b16 %v559
        %v692 = vunpack.c.l.b16 %v560
        %v693 = vunpack.c.l.b16 %v561
        %v694 = vunpack.c.l.b16 %v562
        %v695 = vunpack.c.l.b16 %v563
        %v696 = vunpack.c.l.b16 %v564
        %v697 = vunpack.c.l.b16 %v565
        %v698 = vunpack.c.l.b16 %v566
        %v699 = vunpack.c.l.b16 %v567
        %v700 = vunpack.c.l.b16 %v568
        %v701 = vunpack.c.l.b16 %v569
        %v702 = vunpack.c.l.b16 %v570
        %v703 = vunpack.c.l.b16 %v571
        %v704 = vunpack.c.l.b16 %v572
        %v705 = vunpack.c.l.b16 %v573
        %v706 = vunpack.c.l.b16 %v574
        %v707 = vpack.c.b16 %v692, %v691
        %v708 = vpack.c.b16 %v694, %v693
        %v709 = vpack.c.b16 %v696, %v695
        %v710 = vpack.c.b16 %v698, %v697
        %v711 = vpack.c.b16 %v700, %v699
        %v712 = vpack.c.b16 %v702, %v701
        %v713 = vpack.c.b16 %v704, %v703
        %v714 = vpack.c.b16 %v706, %v705
        %vm715 = vcmask 523264
        %v717 = vsel %vm715, %v707, 0
        %v720 = vsel %vm715, %v708, 0
        %v723 = vsel %vm715, %v709, 0
        %v726 = vsel %vm715, %v710, 0
        %v729 = vsel %vm715, %v711, 0
        %v732 = vsel %vm715, %v712, 0
        %v735 = vsel %vm715, %v713, 0
        %v738 = vsel %vm715, %v714, 0
        %740 = vmatpush.bf16.msra.mxu0 0
        %741 = vmatpush.bf16.msra.mxu0 0
        %742 = vmatpush.bf16.msra.mxu0 0
        %743 = vmatpush.bf16.msra.mxu0 0
        %744 = vmatpush.bf16.msra.mxu0 %v578
        %745 = vmatpush.bf16.msra.mxu0 %v577
        %746 = vmatpush.bf16.msra.mxu0 %v576
        %747 = vmatpush.bf16.msra.mxu0 %v575
        %748 = vmatmul.bf16.gmra.mxu0 %v717
        %v749 = vpop.f32.mrf.mxu0
        %v750 = vadd.f32 %v598, %v749
        %v751 = vpop.f32.mrf.mxu0
        %v752 = vadd.f32 %v603, %v751
        %753 = vmatmul.bf16.gmra.mxu0 %v720
        %v754 = vpop.f32.mrf.mxu0
        %v755 = vadd.f32 %v608, %v754
        %v756 = vpop.f32.mrf.mxu0
        %v757 = vadd.f32 %v613, %v756
        %758 = vmatmul.bf16.gmra.mxu0 %v723
        %v759 = vpop.f32.mrf.mxu0
        %v760 = vadd.f32 %v618, %v759
        %v761 = vpop.f32.mrf.mxu0
        %v762 = vadd.f32 %v623, %v761
        %763 = vmatmul.bf16.gmra.mxu0 %v726
        %v764 = vpop.f32.mrf.mxu0
        %v765 = vadd.f32 %v628, %v764
        %v766 = vpop.f32.mrf.mxu0
        %v767 = vadd.f32 %v633, %v766
        %768 = vmatmul.bf16.gmra.mxu0 %v729
        %v769 = vpop.f32.mrf.mxu0
        %v770 = vadd.f32 %v638, %v769
        %v771 = vpop.f32.mrf.mxu0
        %v772 = vadd.f32 %v643, %v771
        %773 = vmatmul.bf16.gmra.mxu0 %v732
        %v774 = vpop.f32.mrf.mxu0
        %v775 = vadd.f32 %v648, %v774
        %v776 = vpop.f32.mrf.mxu0
        %v777 = vadd.f32 %v653, %v776
        %778 = vmatmul.bf16.gmra.mxu0 %v735
        %v779 = vpop.f32.mrf.mxu0
        %v780 = vadd.f32 %v658, %v779
        %v781 = vpop.f32.mrf.mxu0
        %v782 = vadd.f32 %v663, %v781
        %783 = vmatmul.bf16.gmra.mxu0 %v738
        %v784 = vpop.f32.mrf.mxu0
        %v785 = vadd.f32 %v668, %v784
        %v786 = vpop.f32.mrf.mxu0
        %v787 = vadd.f32 %v673, %v786
        %788 = vdwg.mxu0
        %v789 = vmax.f32 %v750, 0.0
        %v790 = vmax.f32 %v752, 0.0
        %v791 = vmax.f32 %v755, 0.0
        %v792 = vmax.f32 %v757, 0.0
        %v793 = vmax.f32 %v760, 0.0
        %v794 = vmax.f32 %v762, 0.0
        %v795 = vmax.f32 %v765, 0.0
        %v796 = vmax.f32 %v767, 0.0
        %v797 = vmax.f32 %v770, 0.0
        %v798 = vmax.f32 %v772, 0.0
        %v799 = vmax.f32 %v775, 0.0
        %v800 = vmax.f32 %v777, 0.0
        %v801 = vmax.f32 %v780, 0.0
        %v802 = vmax.f32 %v782, 0.0
        %v803 = vmax.f32 %v785, 0.0
        %v804 = vmax.f32 %v787, 0.0
        %v805 = vld [vmem:[#allocation9] sm:$0xf]
        %v806 = vld [vmem:[#allocation9 + $0x4] sm:$0xf]
        %v807 = vld [vmem:[#allocation9 + $0x8] sm:$0xf]
        %v808 = vld [vmem:[#allocation9 + $0xc] sm:$0xf]
        %v809 = vld [vmem:[#allocation9 + $0x10] sm:$0xf]
        %v810 = vld [vmem:[#allocation9 + $0x14] sm:$0xf]
        %v811 = vld [vmem:[#allocation9 + $0x18] sm:$0xf]
        %v812 = vld [vmem:[#allocation9 + $0x1c] sm:$0xf]
        %v813 = vld [vmem:[#allocation9 + $0x20] sm:$0xf]
        %v814 = vld [vmem:[#allocation9 + $0x24] sm:$0xf]
        %v815 = vld [vmem:[#allocation9 + $0x28] sm:$0xf]
        %v816 = vld [vmem:[#allocation9 + $0x2c] sm:$0xf]
        %v817 = vld [vmem:[#allocation9 + $0x30] sm:$0xf]
        %v818 = vld [vmem:[#allocation9 + $0x34] sm:$0xf]
        %v819 = vld [vmem:[#allocation9 + $0x38] sm:$0xf]
        %v820 = vld [vmem:[#allocation9 + $0x3c] sm:$0xf]
        %v821 = vld [vmem:[#allocation9 + $0x40] sm:$0xf]
        %v822 = vld [vmem:[#allocation9 + $0x44] sm:$0xf]
        %v823 = vld [vmem:[#allocation9 + $0x48] sm:$0xf]
        %v824 = vld [vmem:[#allocation9 + $0x4c] sm:$0xf]
        %v825 = vld [vmem:[#allocation9 + $0x50] sm:$0xf]
        %v826 = vld [vmem:[#allocation9 + $0x54] sm:$0xf]
        %v827 = vld [vmem:[#allocation9 + $0x58] sm:$0xf]
        %v828 = vld [vmem:[#allocation9 + $0x5c] sm:$0xf]
        %v829 = vld [vmem:[#allocation9 + $0x60] sm:$0xf]
        %v830 = vld [vmem:[#allocation9 + $0x64] sm:$0xf]
        %v831 = vld [vmem:[#allocation9 + $0x68] sm:$0xf]
        %v832 = vld [vmem:[#allocation9 + $0x6c] sm:$0xf]
        %v833 = vld [vmem:[#allocation9 + $0x70] sm:$0xf]
        %v834 = vld [vmem:[#allocation9 + $0x74] sm:$0xf]
        %v835 = vld [vmem:[#allocation9 + $0x78] sm:$0xf]
        %v836 = vld [vmem:[#allocation9 + $0x7c] sm:$0xf]
        %v837 = vld [vmem:[#allocation9 + $0x80] sm:$0xf]
        %v838 = vld [vmem:[#allocation9 + $0x84] sm:$0xf]
        %v839 = vld [vmem:[#allocation9 + $0x88] sm:$0xf]
        %v840 = vld [vmem:[#allocation9 + $0x8c] sm:$0xf]
        %v841 = vld [vmem:[#allocation9 + $0x90] sm:$0xf]
        %v842 = vld [vmem:[#allocation9 + $0x94] sm:$0xf]
        %v843 = vld [vmem:[#allocation9 + $0x98] sm:$0xf]
        %v844 = vld [vmem:[#allocation9 + $0x9c] sm:$0xf]
        %v845 = vld [vmem:[#allocation9 + $0xa0] sm:$0xf]
        %v846 = vld [vmem:[#allocation9 + $0xa4] sm:$0xf]
        %v847 = vld [vmem:[#allocation9 + $0xa8] sm:$0xf]
        %v848 = vld [vmem:[#allocation9 + $0xac] sm:$0xf]
        %v849 = vld [vmem:[#allocation9 + $0xb0] sm:$0xf]
        %v850 = vld [vmem:[#allocation9 + $0xb4] sm:$0xf]
        %v851 = vld [vmem:[#allocation9 + $0xb8] sm:$0xf]
        %v852 = vld [vmem:[#allocation9 + $0xbc] sm:$0xf]
        %v853 = vld [vmem:[#allocation9 + $0xc0] sm:$0xf]
        %v854 = vld [vmem:[#allocation9 + $0xc4] sm:$0xf]
        %v855 = vld [vmem:[#allocation9 + $0xc8] sm:$0xf]
        %v856 = vld [vmem:[#allocation9 + $0xcc] sm:$0xf]
        %v857 = vld [vmem:[#allocation9 + $0xd0] sm:$0xf]
        %v858 = vld [vmem:[#allocation9 + $0xd4] sm:$0xf]
        %v859 = vld [vmem:[#allocation9 + $0xd8] sm:$0xf]
        %v860 = vld [vmem:[#allocation9 + $0xdc] sm:$0xf]
        %v861 = vld [vmem:[#allocation9 + $0xe0] sm:$0xf]
        %v862 = vld [vmem:[#allocation9 + $0xe4] sm:$0xf]
        %v863 = vld [vmem:[#allocation9 + $0xe8] sm:$0xf]
        %v864 = vld [vmem:[#allocation9 + $0xec] sm:$0xf]
        %v865 = vld [vmem:[#allocation9 + $0xf0] sm:$0xf]
        %v866 = vld [vmem:[#allocation9 + $0xf4] sm:$0xf]
        %v867 = vld [vmem:[#allocation9 + $0xf8] sm:$0xf]
        %v868 = vld [vmem:[#allocation9 + $0xfc] sm:$0xf]
        %v869 = vld [vmem:[#allocation9 + $0x100] sm:$0xf]
        %v870 = vld [vmem:[#allocation9 + $0x104] sm:$0xf]
        %v871 = vld [vmem:[#allocation9 + $0x108] sm:$0xf]
        %v872 = vld [vmem:[#allocation9 + $0x10c] sm:$0xf]
        %v873 = vld [vmem:[#allocation9 + $0x110] sm:$0xf]
        %v874 = vld [vmem:[#allocation9 + $0x114] sm:$0xf]
        %v875 = vld [vmem:[#allocation9 + $0x118] sm:$0xf]
        %v876 = vld [vmem:[#allocation9 + $0x11c] sm:$0xf]
        %v877 = vld [vmem:[#allocation9 + $0x120] sm:$0xf]
        %v878 = vld [vmem:[#allocation9 + $0x124] sm:$0xf]
        %v879 = vld [vmem:[#allocation9 + $0x128] sm:$0xf]
        %v880 = vld [vmem:[#allocation9 + $0x12c] sm:$0xf]
        %v881 = vld [vmem:[#allocation9 + $0x130] sm:$0xf]
        %v882 = vld [vmem:[#allocation9 + $0x134] sm:$0xf]
        %v883 = vld [vmem:[#allocation9 + $0x138] sm:$0xf]
        %v884 = vld [vmem:[#allocation9 + $0x13c] sm:$0xf]
        %v885 = vld [vmem:[#allocation9 + $0x140] sm:$0xf]
        %v886 = vld [vmem:[#allocation9 + $0x144] sm:$0xf]
        %v887 = vld [vmem:[#allocation9 + $0x148] sm:$0xf]
        %v888 = vld [vmem:[#allocation9 + $0x14c] sm:$0xf]
        %v889 = vld [vmem:[#allocation9 + $0x150] sm:$0xf]
        %v890 = vld [vmem:[#allocation9 + $0x154] sm:$0xf]
        %v891 = vld [vmem:[#allocation9 + $0x158] sm:$0xf]
        %v892 = vld [vmem:[#allocation9 + $0x15c] sm:$0xf]
        %v893 = vld [vmem:[#allocation9 + $0x160] sm:$0xf]
        %v894 = vld [vmem:[#allocation9 + $0x164] sm:$0xf]
        %v895 = vld [vmem:[#allocation9 + $0x168] sm:$0xf]
        %v896 = vld [vmem:[#allocation9 + $0x16c] sm:$0xf]
        %v897 = vld [vmem:[#allocation9 + $0x170] sm:$0xf]
        %v898 = vld [vmem:[#allocation9 + $0x174] sm:$0xf]
        %v899 = vld [vmem:[#allocation9 + $0x178] sm:$0xf]
        %v900 = vld [vmem:[#allocation9 + $0x17c] sm:$0xf]
        %v901 = vld [vmem:[#allocation9 + $0x180] sm:$0xf]
        %v902 = vld [vmem:[#allocation9 + $0x184] sm:$0xf]
        %v903 = vld [vmem:[#allocation9 + $0x188] sm:$0xf]
        %v904 = vld [vmem:[#allocation9 + $0x18c] sm:$0xf]
        %v905 = vld [vmem:[#allocation9 + $0x190] sm:$0xf]
        %v906 = vld [vmem:[#allocation9 + $0x194] sm:$0xf]
        %v907 = vld [vmem:[#allocation9 + $0x198] sm:$0xf]
        %v908 = vld [vmem:[#allocation9 + $0x19c] sm:$0xf]
        %v909 = vld [vmem:[#allocation9 + $0x1a0] sm:$0xf]
        %v910 = vld [vmem:[#allocation9 + $0x1a4] sm:$0xf]
        %v911 = vld [vmem:[#allocation9 + $0x1a8] sm:$0xf]
        %v912 = vld [vmem:[#allocation9 + $0x1ac] sm:$0xf]
        %v913 = vld [vmem:[#allocation9 + $0x1b0] sm:$0xf]
        %v914 = vld [vmem:[#allocation9 + $0x1b4] sm:$0xf]
        %v915 = vld [vmem:[#allocation9 + $0x1b8] sm:$0xf]
        %v916 = vld [vmem:[#allocation9 + $0x1bc] sm:$0xf]
        %v917 = vld [vmem:[#allocation9 + $0x1c0] sm:$0xf]
        %v918 = vld [vmem:[#allocation9 + $0x1c4] sm:$0xf]
        %v919 = vld [vmem:[#allocation9 + $0x1c8] sm:$0xf]
        %v920 = vld [vmem:[#allocation9 + $0x1cc] sm:$0xf]
        %v921 = vld [vmem:[#allocation9 + $0x1d0] sm:$0xf]
        %v922 = vld [vmem:[#allocation9 + $0x1d4] sm:$0xf]
        %v923 = vld [vmem:[#allocation9 + $0x1d8] sm:$0xf]
        %v924 = vld [vmem:[#allocation9 + $0x1dc] sm:$0xf]
        %v925 = vld [vmem:[#allocation9 + $0x1e0] sm:$0xf]
        %v926 = vld [vmem:[#allocation9 + $0x1e4] sm:$0xf]
        %v927 = vld [vmem:[#allocation9 + $0x1e8] sm:$0xf]
        %v928 = vld [vmem:[#allocation9 + $0x1ec] sm:$0xf]
        %v929 = vld [vmem:[#allocation9 + $0x1f0] sm:$0xf]
        %v930 = vld [vmem:[#allocation9 + $0x1f4] sm:$0xf]
        %v931 = vld [vmem:[#allocation9 + $0x1f8] sm:$0xf]
        %v932 = vld [vmem:[#allocation9 + $0x1fc] sm:$0xf]
        %v933 = vpack.c.bf16 %v790, %v789
        %v934 = vpack.c.bf16 %v792, %v791
        %v935 = vpack.c.bf16 %v794, %v793
        %v936 = vpack.c.bf16 %v796, %v795
        %v937 = vpack.c.bf16 %v798, %v797
        %v938 = vpack.c.bf16 %v800, %v799
        %v939 = vpack.c.bf16 %v802, %v801
        %v940 = vpack.c.bf16 %v804, %v803
        %v941 = vld [vmem:[#allocation10] sm:$0xff]
        %v942 = vld [vmem:[#allocation10 + $0x8] sm:$0xff]
        %v943 = vld [vmem:[#allocation10 + $0x10] sm:$0xff]
        %v944 = vld [vmem:[#allocation10 + $0x18] sm:$0xff]
        %v945 = vld [vmem:[#allocation10 + $0x20] sm:$0xff]
        %v946 = vld [vmem:[#allocation10 + $0x28] sm:$0xff]
        %v947 = vld [vmem:[#allocation10 + $0x30] sm:$0xff]
        %v948 = vld [vmem:[#allocation10 + $0x38] sm:$0xff]
        %v949 = vld [vmem:[#allocation10 + $0x40] sm:$0xff]
        %v950 = vld [vmem:[#allocation10 + $0x48] sm:$0xff]
        %v951 = vld [vmem:[#allocation10 + $0x50] sm:$0xff]
        %v952 = vld [vmem:[#allocation10 + $0x58] sm:$0xff]
        %v953 = vld [vmem:[#allocation10 + $0x60] sm:$0xff]
        %v954 = vld [vmem:[#allocation10 + $0x68] sm:$0xff]
        %v955 = vld [vmem:[#allocation10 + $0x70] sm:$0xff]
        %v956 = vld [vmem:[#allocation10 + $0x78] sm:$0xff]
        %v957 = vld [vmem:[#allocation10 + $0x80] sm:$0xff]
        %v958 = vld [vmem:[#allocation10 + $0x88] sm:$0xff]
        %v959 = vld [vmem:[#allocation10 + $0x90] sm:$0xff]
        %v960 = vld [vmem:[#allocation10 + $0x98] sm:$0xff]
        %v961 = vld [vmem:[#allocation10 + $0xa0] sm:$0xff]
        %v962 = vld [vmem:[#allocation10 + $0xa8] sm:$0xff]
        %v963 = vld [vmem:[#allocation10 + $0xb0] sm:$0xff]
        %v964 = vld [vmem:[#allocation10 + $0xb8] sm:$0xff]
        %v965 = vld [vmem:[#allocation10 + $0xc0] sm:$0xff]
        %v966 = vld [vmem:[#allocation10 + $0xc8] sm:$0xff]
        %v967 = vld [vmem:[#allocation10 + $0xd0] sm:$0xff]
        %v968 = vld [vmem:[#allocation10 + $0xd8] sm:$0xff]
        %v969 = vld [vmem:[#allocation10 + $0xe0] sm:$0xff]
        %v970 = vld [vmem:[#allocation10 + $0xe8] sm:$0xff]
        %v971 = vld [vmem:[#allocation10 + $0xf0] sm:$0xff]
        %v972 = vld [vmem:[#allocation10 + $0xf8] sm:$0xff]
        %v973 = vld [vmem:[#allocation10 + $0x100] sm:$0xff]
        %v974 = vld [vmem:[#allocation10 + $0x108] sm:$0xff]
        %v975 = vld [vmem:[#allocation10 + $0x110] sm:$0xff]
        %v976 = vld [vmem:[#allocation10 + $0x118] sm:$0xff]
        %v977 = vld [vmem:[#allocation10 + $0x120] sm:$0xff]
        %v978 = vld [vmem:[#allocation10 + $0x128] sm:$0xff]
        %v979 = vld [vmem:[#allocation10 + $0x130] sm:$0xff]
        %v980 = vld [vmem:[#allocation10 + $0x138] sm:$0xff]
        %v981 = vld [vmem:[#allocation10 + $0x140] sm:$0xff]
        %v982 = vld [vmem:[#allocation10 + $0x148] sm:$0xff]
        %v983 = vld [vmem:[#allocation10 + $0x150] sm:$0xff]
        %v984 = vld [vmem:[#allocation10 + $0x158] sm:$0xff]
        %v985 = vld [vmem:[#allocation10 + $0x160] sm:$0xff]
        %v986 = vld [vmem:[#allocation10 + $0x168] sm:$0xff]
        %v987 = vld [vmem:[#allocation10 + $0x170] sm:$0xff]
        %v988 = vld [vmem:[#allocation10 + $0x178] sm:$0xff]
        %v989 = vld [vmem:[#allocation10 + $0x180] sm:$0xff]
        %v990 = vld [vmem:[#allocation10 + $0x188] sm:$0xff]
        %v991 = vld [vmem:[#allocation10 + $0x190] sm:$0xff]
        %v992 = vld [vmem:[#allocation10 + $0x198] sm:$0xff]
        %v993 = vld [vmem:[#allocation10 + $0x1a0] sm:$0xff]
        %v994 = vld [vmem:[#allocation10 + $0x1a8] sm:$0xff]
        %v995 = vld [vmem:[#allocation10 + $0x1b0] sm:$0xff]
        %v996 = vld [vmem:[#allocation10 + $0x1b8] sm:$0xff]
        %v997 = vld [vmem:[#allocation10 + $0x1c0] sm:$0xff]
        %v998 = vld [vmem:[#allocation10 + $0x1c8] sm:$0xff]
        %v999 = vld [vmem:[#allocation10 + $0x1d0] sm:$0xff]
        %v1000 = vld [vmem:[#allocation10 + $0x1d8] sm:$0xff]
        %v1001 = vld [vmem:[#allocation10 + $0x1e0] sm:$0xff]
        %v1002 = vld [vmem:[#allocation10 + $0x1e8] sm:$0xff]
        %v1003 = vld [vmem:[#allocation10 + $0x1f0] sm:$0xff]
        %v1004 = vld [vmem:[#allocation10 + $0x1f8] sm:$0xff]
        %v1005 = vld [vmem:[#allocation10 + $0x200] sm:$0xff]
        %v1006 = vld [vmem:[#allocation10 + $0x208] sm:$0xff]
        %v1007 = vld [vmem:[#allocation10 + $0x210] sm:$0xff]
        %v1008 = vld [vmem:[#allocation10 + $0x218] sm:$0xff]
        %v1009 = vld [vmem:[#allocation10 + $0x220] sm:$0xff]
        %v1010 = vld [vmem:[#allocation10 + $0x228] sm:$0xff]
        %v1011 = vld [vmem:[#allocation10 + $0x230] sm:$0xff]
        %v1012 = vld [vmem:[#allocation10 + $0x238] sm:$0xff]
        %v1013 = vld [vmem:[#allocation10 + $0x240] sm:$0xff]
        %v1014 = vld [vmem:[#allocation10 + $0x248] sm:$0xff]
        %v1015 = vld [vmem:[#allocation10 + $0x250] sm:$0xff]
        %v1016 = vld [vmem:[#allocation10 + $0x258] sm:$0xff]
        %v1017 = vld [vmem:[#allocation10 + $0x260] sm:$0xff]
        %v1018 = vld [vmem:[#allocation10 + $0x268] sm:$0xff]
        %v1019 = vld [vmem:[#allocation10 + $0x270] sm:$0xff]
        %v1020 = vld [vmem:[#allocation10 + $0x278] sm:$0xff]
        %v1021 = vld [vmem:[#allocation10 + $0x280] sm:$0xff]
        %v1022 = vld [vmem:[#allocation10 + $0x288] sm:$0xff]
        %v1023 = vld [vmem:[#allocation10 + $0x290] sm:$0xff]
        %v1024 = vld [vmem:[#allocation10 + $0x298] sm:$0xff]
        %v1025 = vld [vmem:[#allocation10 + $0x2a0] sm:$0xff]
        %v1026 = vld [vmem:[#allocation10 + $0x2a8] sm:$0xff]
        %v1027 = vld [vmem:[#allocation10 + $0x2b0] sm:$0xff]
        %v1028 = vld [vmem:[#allocation10 + $0x2b8] sm:$0xff]
        %v1029 = vld [vmem:[#allocation10 + $0x2c0] sm:$0xff]
        %v1030 = vld [vmem:[#allocation10 + $0x2c8] sm:$0xff]
        %v1031 = vld [vmem:[#allocation10 + $0x2d0] sm:$0xff]
        %v1032 = vld [vmem:[#allocation10 + $0x2d8] sm:$0xff]
        %v1033 = vld [vmem:[#allocation10 + $0x2e0] sm:$0xff]
        %v1034 = vld [vmem:[#allocation10 + $0x2e8] sm:$0xff]
        %v1035 = vld [vmem:[#allocation10 + $0x2f0] sm:$0xff]
        %v1036 = vld [vmem:[#allocation10 + $0x2f8] sm:$0xff]
        %v1037 = vld [vmem:[#allocation10 + $0x300] sm:$0xff]
        %v1038 = vld [vmem:[#allocation10 + $0x308] sm:$0xff]
        %v1039 = vld [vmem:[#allocation10 + $0x310] sm:$0xff]
        %v1040 = vld [vmem:[#allocation10 + $0x318] sm:$0xff]
        %v1041 = vld [vmem:[#allocation10 + $0x320] sm:$0xff]
        %v1042 = vld [vmem:[#allocation10 + $0x328] sm:$0xff]
        %v1043 = vld [vmem:[#allocation10 + $0x330] sm:$0xff]
        %v1044 = vld [vmem:[#allocation10 + $0x338] sm:$0xff]
        %v1045 = vld [vmem:[#allocation10 + $0x340] sm:$0xff]
        %v1046 = vld [vmem:[#allocation10 + $0x348] sm:$0xff]
        %v1047 = vld [vmem:[#allocation10 + $0x350] sm:$0xff]
        %v1048 = vld [vmem:[#allocation10 + $0x358] sm:$0xff]
        %v1049 = vld [vmem:[#allocation10 + $0x360] sm:$0xff]
        %v1050 = vld [vmem:[#allocation10 + $0x368] sm:$0xff]
        %v1051 = vld [vmem:[#allocation10 + $0x370] sm:$0xff]
        %v1052 = vld [vmem:[#allocation10 + $0x378] sm:$0xff]
        %v1053 = vld [vmem:[#allocation10 + $0x380] sm:$0xff]
        %v1054 = vld [vmem:[#allocation10 + $0x388] sm:$0xff]
        %v1055 = vld [vmem:[#allocation10 + $0x390] sm:$0xff]
        %v1056 = vld [vmem:[#allocation10 + $0x398] sm:$0xff]
        %v1057 = vld [vmem:[#allocation10 + $0x3a0] sm:$0xff]
        %v1058 = vld [vmem:[#allocation10 + $0x3a8] sm:$0xff]
        %v1059 = vld [vmem:[#allocation10 + $0x3b0] sm:$0xff]
        %v1060 = vld [vmem:[#allocation10 + $0x3b8] sm:$0xff]
        %v1061 = vld [vmem:[#allocation10 + $0x3c0] sm:$0xff]
        %v1062 = vld [vmem:[#allocation10 + $0x3c8] sm:$0xff]
        %v1063 = vld [vmem:[#allocation10 + $0x3d0] sm:$0xff]
        %v1064 = vld [vmem:[#allocation10 + $0x3d8] sm:$0xff]
        %v1065 = vld [vmem:[#allocation10 + $0x3e0] sm:$0xff]
        %v1066 = vld [vmem:[#allocation10 + $0x3e8] sm:$0xff]
        %v1067 = vld [vmem:[#allocation10 + $0x3f0] sm:$0xff]
        %v1068 = vld [vmem:[#allocation10 + $0x3f8] sm:$0xff]
        %1070 = vset.pattern.permute.xlu0 0
        %1071 = vperm.xlu0 %1070, %v941
        %v1072 = vpop.permute.xlu0 %1071
        %1075 = vset.pattern.permute.xlu0 0
        %1076 = vperm.xlu0 %1075, %v942
        %v1077 = vpop.permute.xlu0 %1076
        %1080 = vset.pattern.permute.xlu0 0
        %1081 = vperm.xlu0 %1080, %v943
        %v1082 = vpop.permute.xlu0 %1081
        %1085 = vset.pattern.permute.xlu0 0
        %1086 = vperm.xlu0 %1085, %v944
        %v1087 = vpop.permute.xlu0 %1086
        %1090 = vset.pattern.permute.xlu0 0
        %1091 = vperm.xlu0 %1090, %v945
        %v1092 = vpop.permute.xlu0 %1091
        %1095 = vset.pattern.permute.xlu0 0
        %1096 = vperm.xlu0 %1095, %v946
        %v1097 = vpop.permute.xlu0 %1096
        %1100 = vset.pattern.permute.xlu0 0
        %1101 = vperm.xlu0 %1100, %v947
        %v1102 = vpop.permute.xlu0 %1101
        %1105 = vset.pattern.permute.xlu0 0
        %1106 = vperm.xlu0 %1105, %v948
        %v1107 = vpop.permute.xlu0 %1106
        %1110 = vset.pattern.permute.xlu0 0
        %1111 = vperm.xlu0 %1110, %v949
        %v1112 = vpop.permute.xlu0 %1111
        %1115 = vset.pattern.permute.xlu0 0
        %1116 = vperm.xlu0 %1115, %v950
        %v1117 = vpop.permute.xlu0 %1116
        %1120 = vset.pattern.permute.xlu0 0
        %1121 = vperm.xlu0 %1120, %v951
        %v1122 = vpop.permute.xlu0 %1121
        %1125 = vset.pattern.permute.xlu0 0
        %1126 = vperm.xlu0 %1125, %v952
        %v1127 = vpop.permute.xlu0 %1126
        %1130 = vset.pattern.permute.xlu0 0
        %1131 = vperm.xlu0 %1130, %v953
        %v1132 = vpop.permute.xlu0 %1131
        %1135 = vset.pattern.permute.xlu0 0
        %1136 = vperm.xlu0 %1135, %v954
        %v1137 = vpop.permute.xlu0 %1136
        %1140 = vset.pattern.permute.xlu0 0
        %1141 = vperm.xlu0 %1140, %v955
        %v1142 = vpop.permute.xlu0 %1141
        %1145 = vset.pattern.permute.xlu0 0
        %1146 = vperm.xlu0 %1145, %v956
        %v1147 = vpop.permute.xlu0 %1146
        %1150 = vset.pattern.permute.xlu0 0
        %1151 = vperm.xlu0 %1150, %v957
        %v1152 = vpop.permute.xlu0 %1151
        %1155 = vset.pattern.permute.xlu0 0
        %1156 = vperm.xlu0 %1155, %v958
        %v1157 = vpop.permute.xlu0 %1156
        %1160 = vset.pattern.permute.xlu0 0
        %1161 = vperm.xlu0 %1160, %v959
        %v1162 = vpop.permute.xlu0 %1161
        %1165 = vset.pattern.permute.xlu0 0
        %1166 = vperm.xlu0 %1165, %v960
        %v1167 = vpop.permute.xlu0 %1166
        %1170 = vset.pattern.permute.xlu0 0
        %1171 = vperm.xlu0 %1170, %v961
        %v1172 = vpop.permute.xlu0 %1171
        %1175 = vset.pattern.permute.xlu0 0
        %1176 = vperm.xlu0 %1175, %v962
        %v1177 = vpop.permute.xlu0 %1176
        %1180 = vset.pattern.permute.xlu0 0
        %1181 = vperm.xlu0 %1180, %v963
        %v1182 = vpop.permute.xlu0 %1181
        %1185 = vset.pattern.permute.xlu0 0
        %1186 = vperm.xlu0 %1185, %v964
        %v1187 = vpop.permute.xlu0 %1186
        %1190 = vset.pattern.permute.xlu0 0
        %1191 = vperm.xlu0 %1190, %v965
        %v1192 = vpop.permute.xlu0 %1191
        %1195 = vset.pattern.permute.xlu0 0
        %1196 = vperm.xlu0 %1195, %v966
        %v1197 = vpop.permute.xlu0 %1196
        %1200 = vset.pattern.permute.xlu0 0
        %1201 = vperm.xlu0 %1200, %v967
        %v1202 = vpop.permute.xlu0 %1201
        %1205 = vset.pattern.permute.xlu0 0
        %1206 = vperm.xlu0 %1205, %v968
        %v1207 = vpop.permute.xlu0 %1206
        %1210 = vset.pattern.permute.xlu0 0
        %1211 = vperm.xlu0 %1210, %v969
        %v1212 = vpop.permute.xlu0 %1211
        %1215 = vset.pattern.permute.xlu0 0
        %1216 = vperm.xlu0 %1215, %v970
        %v1217 = vpop.permute.xlu0 %1216
        %1220 = vset.pattern.permute.xlu0 0
        %1221 = vperm.xlu0 %1220, %v971
        %v1222 = vpop.permute.xlu0 %1221
        %1225 = vset.pattern.permute.xlu0 0
        %1226 = vperm.xlu0 %1225, %v972
        %v1227 = vpop.permute.xlu0 %1226
        %1230 = vset.pattern.permute.xlu0 0
        %1231 = vperm.xlu0 %1230, %v973
        %v1232 = vpop.permute.xlu0 %1231
        %1235 = vset.pattern.permute.xlu0 0
        %1236 = vperm.xlu0 %1235, %v974
        %v1237 = vpop.permute.xlu0 %1236
        %1240 = vset.pattern.permute.xlu0 0
        %1241 = vperm.xlu0 %1240, %v975
        %v1242 = vpop.permute.xlu0 %1241
        %1245 = vset.pattern.permute.xlu0 0
        %1246 = vperm.xlu0 %1245, %v976
        %v1247 = vpop.permute.xlu0 %1246
        %1250 = vset.pattern.permute.xlu0 0
        %1251 = vperm.xlu0 %1250, %v977
        %v1252 = vpop.permute.xlu0 %1251
        %1255 = vset.pattern.permute.xlu0 0
        %1256 = vperm.xlu0 %1255, %v978
        %v1257 = vpop.permute.xlu0 %1256
        %1260 = vset.pattern.permute.xlu0 0
        %1261 = vperm.xlu0 %1260, %v979
        %v1262 = vpop.permute.xlu0 %1261
        %1265 = vset.pattern.permute.xlu0 0
        %1266 = vperm.xlu0 %1265, %v980
        %v1267 = vpop.permute.xlu0 %1266
        %1270 = vset.pattern.permute.xlu0 0
        %1271 = vperm.xlu0 %1270, %v981
        %v1272 = vpop.permute.xlu0 %1271
        %1275 = vset.pattern.permute.xlu0 0
        %1276 = vperm.xlu0 %1275, %v982
        %v1277 = vpop.permute.xlu0 %1276
        %1280 = vset.pattern.permute.xlu0 0
        %1281 = vperm.xlu0 %1280, %v983
        %v1282 = vpop.permute.xlu0 %1281
        %1285 = vset.pattern.permute.xlu0 0
        %1286 = vperm.xlu0 %1285, %v984
        %v1287 = vpop.permute.xlu0 %1286
        %1290 = vset.pattern.permute.xlu0 0
        %1291 = vperm.xlu0 %1290, %v985
        %v1292 = vpop.permute.xlu0 %1291
        %1295 = vset.pattern.permute.xlu0 0
        %1296 = vperm.xlu0 %1295, %v986
        %v1297 = vpop.permute.xlu0 %1296
        %1300 = vset.pattern.permute.xlu0 0
        %1301 = vperm.xlu0 %1300, %v987
        %v1302 = vpop.permute.xlu0 %1301
        %1305 = vset.pattern.permute.xlu0 0
        %1306 = vperm.xlu0 %1305, %v988
        %v1307 = vpop.permute.xlu0 %1306
        %1310 = vset.pattern.permute.xlu0 0
        %1311 = vperm.xlu0 %1310, %v989
        %v1312 = vpop.permute.xlu0 %1311
        %1315 = vset.pattern.permute.xlu0 0
        %1316 = vperm.xlu0 %1315, %v990
        %v1317 = vpop.permute.xlu0 %1316
        %1320 = vset.pattern.permute.xlu0 0
        %1321 = vperm.xlu0 %1320, %v991
        %v1322 = vpop.permute.xlu0 %1321
        %1325 = vset.pattern.permute.xlu0 0
        %1326 = vperm.xlu0 %1325, %v992
        %v1327 = vpop.permute.xlu0 %1326
        %1330 = vset.pattern.permute.xlu0 0
        %1331 = vperm.xlu0 %1330, %v993
        %v1332 = vpop.permute.xlu0 %1331
        %1335 = vset.pattern.permute.xlu0 0
        %1336 = vperm.xlu0 %1335, %v994
        %v1337 = vpop.permute.xlu0 %1336
        %1340 = vset.pattern.permute.xlu0 0
        %1341 = vperm.xlu0 %1340, %v995
        %v1342 = vpop.permute.xlu0 %1341
        %1345 = vset.pattern.permute.xlu0 0
        %1346 = vperm.xlu0 %1345, %v996
        %v1347 = vpop.permute.xlu0 %1346
        %1350 = vset.pattern.permute.xlu0 0
        %1351 = vperm.xlu0 %1350, %v997
        %v1352 = vpop.permute.xlu0 %1351
        %1355 = vset.pattern.permute.xlu0 0
        %1356 = vperm.xlu0 %1355, %v998
        %v1357 = vpop.permute.xlu0 %1356
        %1360 = vset.pattern.permute.xlu0 0
        %1361 = vperm.xlu0 %1360, %v999
        %v1362 = vpop.permute.xlu0 %1361
        %1365 = vset.pattern.permute.xlu0 0
        %1366 = vperm.xlu0 %1365, %v1000
        %v1367 = vpop.permute.xlu0 %1366
        %1370 = vset.pattern.permute.xlu0 0
        %1371 = vperm.xlu0 %1370, %v1001
        %v1372 = vpop.permute.xlu0 %1371
        %1375 = vset.pattern.permute.xlu0 0
        %1376 = vperm.xlu0 %1375, %v1002
        %v1377 = vpop.permute.xlu0 %1376
        %1380 = vset.pattern.permute.xlu0 0
        %1381 = vperm.xlu0 %1380, %v1003
        %v1382 = vpop.permute.xlu0 %1381
        %1385 = vset.pattern.permute.xlu0 0
        %1386 = vperm.xlu0 %1385, %v1004
        %v1387 = vpop.permute.xlu0 %1386
        %1390 = vset.pattern.permute.xlu0 0
        %1391 = vperm.xlu0 %1390, %v1005
        %v1392 = vpop.permute.xlu0 %1391
        %1395 = vset.pattern.permute.xlu0 0
        %1396 = vperm.xlu0 %1395, %v1006
        %v1397 = vpop.permute.xlu0 %1396
        %1400 = vset.pattern.permute.xlu0 0
        %1401 = vperm.xlu0 %1400, %v1007
        %v1402 = vpop.permute.xlu0 %1401
        %1405 = vset.pattern.permute.xlu0 0
        %1406 = vperm.xlu0 %1405, %v1008
        %v1407 = vpop.permute.xlu0 %1406
        %1410 = vset.pattern.permute.xlu0 0
        %1411 = vperm.xlu0 %1410, %v1009
        %v1412 = vpop.permute.xlu0 %1411
        %1415 = vset.pattern.permute.xlu0 0
        %1416 = vperm.xlu0 %1415, %v1010
        %v1417 = vpop.permute.xlu0 %1416
        %1420 = vset.pattern.permute.xlu0 0
        %1421 = vperm.xlu0 %1420, %v1011
        %v1422 = vpop.permute.xlu0 %1421
        %1425 = vset.pattern.permute.xlu0 0
        %1426 = vperm.xlu0 %1425, %v1012
        %v1427 = vpop.permute.xlu0 %1426
        %1430 = vset.pattern.permute.xlu0 0
        %1431 = vperm.xlu0 %1430, %v1013
        %v1432 = vpop.permute.xlu0 %1431
        %1435 = vset.pattern.permute.xlu0 0
        %1436 = vperm.xlu0 %1435, %v1014
        %v1437 = vpop.permute.xlu0 %1436
        %1440 = vset.pattern.permute.xlu0 0
        %1441 = vperm.xlu0 %1440, %v1015
        %v1442 = vpop.permute.xlu0 %1441
        %1445 = vset.pattern.permute.xlu0 0
        %1446 = vperm.xlu0 %1445, %v1016
        %v1447 = vpop.permute.xlu0 %1446
        %1450 = vset.pattern.permute.xlu0 0
        %1451 = vperm.xlu0 %1450, %v1017
        %v1452 = vpop.permute.xlu0 %1451
        %1455 = vset.pattern.permute.xlu0 0
        %1456 = vperm.xlu0 %1455, %v1018
        %v1457 = vpop.permute.xlu0 %1456
        %1460 = vset.pattern.permute.xlu0 0
        %1461 = vperm.xlu0 %1460, %v1019
        %v1462 = vpop.permute.xlu0 %1461
        %1465 = vset.pattern.permute.xlu0 0
        %1466 = vperm.xlu0 %1465, %v1020
        %v1467 = vpop.permute.xlu0 %1466
        %1470 = vset.pattern.permute.xlu0 0
        %1471 = vperm.xlu0 %1470, %v1021
        %v1472 = vpop.permute.xlu0 %1471
        %1475 = vset.pattern.permute.xlu0 0
        %1476 = vperm.xlu0 %1475, %v1022
        %v1477 = vpop.permute.xlu0 %1476
        %1480 = vset.pattern.permute.xlu0 0
        %1481 = vperm.xlu0 %1480, %v1023
        %v1482 = vpop.permute.xlu0 %1481
        %1485 = vset.pattern.permute.xlu0 0
        %1486 = vperm.xlu0 %1485, %v1024
        %v1487 = vpop.permute.xlu0 %1486
        %1490 = vset.pattern.permute.xlu0 0
        %1491 = vperm.xlu0 %1490, %v1025
        %v1492 = vpop.permute.xlu0 %1491
        %1495 = vset.pattern.permute.xlu0 0
        %1496 = vperm.xlu0 %1495, %v1026
        %v1497 = vpop.permute.xlu0 %1496
        %1500 = vset.pattern.permute.xlu0 0
        %1501 = vperm.xlu0 %1500, %v1027
        %v1502 = vpop.permute.xlu0 %1501
        %1505 = vset.pattern.permute.xlu0 0
        %1506 = vperm.xlu0 %1505, %v1028
        %v1507 = vpop.permute.xlu0 %1506
        %1510 = vset.pattern.permute.xlu0 0
        %1511 = vperm.xlu0 %1510, %v1029
        %v1512 = vpop.permute.xlu0 %1511
        %1515 = vset.pattern.permute.xlu0 0
        %1516 = vperm.xlu0 %1515, %v1030
        %v1517 = vpop.permute.xlu0 %1516
        %1520 = vset.pattern.permute.xlu0 0
        %1521 = vperm.xlu0 %1520, %v1031
        %v1522 = vpop.permute.xlu0 %1521
        %1525 = vset.pattern.permute.xlu0 0
        %1526 = vperm.xlu0 %1525, %v1032
        %v1527 = vpop.permute.xlu0 %1526
        %1530 = vset.pattern.permute.xlu0 0
        %1531 = vperm.xlu0 %1530, %v1033
        %v1532 = vpop.permute.xlu0 %1531
        %1535 = vset.pattern.permute.xlu0 0
        %1536 = vperm.xlu0 %1535, %v1034
        %v1537 = vpop.permute.xlu0 %1536
        %1540 = vset.pattern.permute.xlu0 0
        %1541 = vperm.xlu0 %1540, %v1035
        %v1542 = vpop.permute.xlu0 %1541
        %1545 = vset.pattern.permute.xlu0 0
        %1546 = vperm.xlu0 %1545, %v1036
        %v1547 = vpop.permute.xlu0 %1546
        %1550 = vset.pattern.permute.xlu0 0
        %1551 = vperm.xlu0 %1550, %v1037
        %v1552 = vpop.permute.xlu0 %1551
        %1555 = vset.pattern.permute.xlu0 0
        %1556 = vperm.xlu0 %1555, %v1038
        %v1557 = vpop.permute.xlu0 %1556
        %1560 = vset.pattern.permute.xlu0 0
        %1561 = vperm.xlu0 %1560, %v1039
        %v1562 = vpop.permute.xlu0 %1561
        %1565 = vset.pattern.permute.xlu0 0
        %1566 = vperm.xlu0 %1565, %v1040
        %v1567 = vpop.permute.xlu0 %1566
        %1570 = vset.pattern.permute.xlu0 0
        %1571 = vperm.xlu0 %1570, %v1041
        %v1572 = vpop.permute.xlu0 %1571
        %1575 = vset.pattern.permute.xlu0 0
        %1576 = vperm.xlu0 %1575, %v1042
        %v1577 = vpop.permute.xlu0 %1576
        %1580 = vset.pattern.permute.xlu0 0
        %1581 = vperm.xlu0 %1580, %v1043
        %v1582 = vpop.permute.xlu0 %1581
        %1585 = vset.pattern.permute.xlu0 0
        %1586 = vperm.xlu0 %1585, %v1044
        %v1587 = vpop.permute.xlu0 %1586
        %1590 = vset.pattern.permute.xlu0 0
        %1591 = vperm.xlu0 %1590, %v1045
        %v1592 = vpop.permute.xlu0 %1591
        %1595 = vset.pattern.permute.xlu0 0
        %1596 = vperm.xlu0 %1595, %v1046
        %v1597 = vpop.permute.xlu0 %1596
        %1600 = vset.pattern.permute.xlu0 0
        %1601 = vperm.xlu0 %1600, %v1047
        %v1602 = vpop.permute.xlu0 %1601
        %1605 = vset.pattern.permute.xlu0 0
        %1606 = vperm.xlu0 %1605, %v1048
        %v1607 = vpop.permute.xlu0 %1606
        %1610 = vset.pattern.permute.xlu0 0
        %1611 = vperm.xlu0 %1610, %v1049
        %v1612 = vpop.permute.xlu0 %1611
        %1615 = vset.pattern.permute.xlu0 0
        %1616 = vperm.xlu0 %1615, %v1050
        %v1617 = vpop.permute.xlu0 %1616
        %1620 = vset.pattern.permute.xlu0 0
        %1621 = vperm.xlu0 %1620, %v1051
        %v1622 = vpop.permute.xlu0 %1621
        %1625 = vset.pattern.permute.xlu0 0
        %1626 = vperm.xlu0 %1625, %v1052
        %v1627 = vpop.permute.xlu0 %1626
        %1630 = vset.pattern.permute.xlu0 0
        %1631 = vperm.xlu0 %1630, %v1053
        %v1632 = vpop.permute.xlu0 %1631
        %1635 = vset.pattern.permute.xlu0 0
        %1636 = vperm.xlu0 %1635, %v1054
        %v1637 = vpop.permute.xlu0 %1636
        %1640 = vset.pattern.permute.xlu0 0
        %1641 = vperm.xlu0 %1640, %v1055
        %v1642 = vpop.permute.xlu0 %1641
        %1645 = vset.pattern.permute.xlu0 0
        %1646 = vperm.xlu0 %1645, %v1056
        %v1647 = vpop.permute.xlu0 %1646
        %1650 = vset.pattern.permute.xlu0 0
        %1651 = vperm.xlu0 %1650, %v1057
        %v1652 = vpop.permute.xlu0 %1651
        %1655 = vset.pattern.permute.xlu0 0
        %1656 = vperm.xlu0 %1655, %v1058
        %v1657 = vpop.permute.xlu0 %1656
        %1660 = vset.pattern.permute.xlu0 0
        %1661 = vperm.xlu0 %1660, %v1059
        %v1662 = vpop.permute.xlu0 %1661
        %1665 = vset.pattern.permute.xlu0 0
        %1666 = vperm.xlu0 %1665, %v1060
        %v1667 = vpop.permute.xlu0 %1666
        %1670 = vset.pattern.permute.xlu0 0
        %1671 = vperm.xlu0 %1670, %v1061
        %v1672 = vpop.permute.xlu0 %1671
        %1675 = vset.pattern.permute.xlu0 0
        %1676 = vperm.xlu0 %1675, %v1062
        %v1677 = vpop.permute.xlu0 %1676
        %1680 = vset.pattern.permute.xlu0 0
        %1681 = vperm.xlu0 %1680, %v1063
        %v1682 = vpop.permute.xlu0 %1681
        %1685 = vset.pattern.permute.xlu0 0
        %1686 = vperm.xlu0 %1685, %v1064
        %v1687 = vpop.permute.xlu0 %1686
        %1690 = vset.pattern.permute.xlu0 0
        %1691 = vperm.xlu0 %1690, %v1065
        %v1692 = vpop.permute.xlu0 %1691
        %1695 = vset.pattern.permute.xlu0 0
        %1696 = vperm.xlu0 %1695, %v1066
        %v1697 = vpop.permute.xlu0 %1696
        %1700 = vset.pattern.permute.xlu0 0
        %1701 = vperm.xlu0 %1700, %v1067
        %v1702 = vpop.permute.xlu0 %1701
        %1705 = vset.pattern.permute.xlu0 0
        %1706 = vperm.xlu0 %1705, %v1068
        %v1707 = vpop.permute.xlu0 %1706
        %v1837 = vunpack.c.l.b16 %v805
        %v1838 = vunpack.c.l.b16 %v806
        %v1839 = vunpack.c.l.b16 %v807
        %v1840 = vunpack.c.l.b16 %v808
        %v1841 = vunpack.c.l.b16 %v809
        %v1842 = vunpack.c.l.b16 %v810
        %v1843 = vunpack.c.l.b16 %v811
        %v1844 = vunpack.c.l.b16 %v812
        %v1845 = vunpack.c.l.b16 %v813
        %v1846 = vunpack.c.l.b16 %v814
        %v1847 = vunpack.c.l.b16 %v815
        %v1848 = vunpack.c.l.b16 %v816
        %v1849 = vunpack.c.l.b16 %v817
        %v1850 = vunpack.c.l.b16 %v818
        %v1851 = vunpack.c.l.b16 %v819
        %v1852 = vunpack.c.l.b16 %v820
        %v1853 = vunpack.c.l.b16 %v821
        %v1854 = vunpack.c.l.b16 %v822
        %v1855 = vunpack.c.l.b16 %v823
        %v1856 = vunpack.c.l.b16 %v824
        %v1857 = vunpack.c.l.b16 %v825
        %v1858 = vunpack.c.l.b16 %v826
        %v1859 = vunpack.c.l.b16 %v827
        %v1860 = vunpack.c.l.b16 %v828
        %v1861 = vunpack.c.l.b16 %v829
        %v1862 = vunpack.c.l.b16 %v830
        %v1863 = vunpack.c.l.b16 %v831
        %v1864 = vunpack.c.l.b16 %v832
        %v1865 = vunpack.c.l.b16 %v833
        %v1866 = vunpack.c.l.b16 %v834
        %v1867 = vunpack.c.l.b16 %v835
        %v1868 = vunpack.c.l.b16 %v836
        %v1869 = vunpack.c.l.b16 %v837
        %v1870 = vunpack.c.l.b16 %v838
        %v1871 = vunpack.c.l.b16 %v839
        %v1872 = vunpack.c.l.b16 %v840
        %v1873 = vunpack.c.l.b16 %v841
        %v1874 = vunpack.c.l.b16 %v842
        %v1875 = vunpack.c.l.b16 %v843
        %v1876 = vunpack.c.l.b16 %v844
        %v1877 = vunpack.c.l.b16 %v845
        %v1878 = vunpack.c.l.b16 %v846
        %v1879 = vunpack.c.l.b16 %v847
        %v1880 = vunpack.c.l.b16 %v848
        %v1881 = vunpack.c.l.b16 %v849
        %v1882 = vunpack.c.l.b16 %v850
        %v1883 = vunpack.c.l.b16 %v851
        %v1884 = vunpack.c.l.b16 %v852
        %v1885 = vunpack.c.l.b16 %v853
        %v1886 = vunpack.c.l.b16 %v854
        %v1887 = vunpack.c.l.b16 %v855
        %v1888 = vunpack.c.l.b16 %v856
        %v1889 = vunpack.c.l.b16 %v857
        %v1890 = vunpack.c.l.b16 %v858
        %v1891 = vunpack.c.l.b16 %v859
        %v1892 = vunpack.c.l.b16 %v860
        %v1893 = vunpack.c.l.b16 %v861
        %v1894 = vunpack.c.l.b16 %v862
        %v1895 = vunpack.c.l.b16 %v863
        %v1896 = vunpack.c.l.b16 %v864
        %v1897 = vunpack.c.l.b16 %v865
        %v1898 = vunpack.c.l.b16 %v866
        %v1899 = vunpack.c.l.b16 %v867
        %v1900 = vunpack.c.l.b16 %v868
        %v1901 = vunpack.c.l.b16 %v869
        %v1902 = vunpack.c.l.b16 %v870
        %v1903 = vunpack.c.l.b16 %v871
        %v1904 = vunpack.c.l.b16 %v872
        %v1905 = vunpack.c.l.b16 %v873
        %v1906 = vunpack.c.l.b16 %v874
        %v1907 = vunpack.c.l.b16 %v875
        %v1908 = vunpack.c.l.b16 %v876
        %v1909 = vunpack.c.l.b16 %v877
        %v1910 = vunpack.c.l.b16 %v878
        %v1911 = vunpack.c.l.b16 %v879
        %v1912 = vunpack.c.l.b16 %v880
        %v1913 = vunpack.c.l.b16 %v881
        %v1914 = vunpack.c.l.b16 %v882
        %v1915 = vunpack.c.l.b16 %v883
        %v1916 = vunpack.c.l.b16 %v884
        %v1917 = vunpack.c.l.b16 %v885
        %v1918 = vunpack.c.l.b16 %v886
        %v1919 = vunpack.c.l.b16 %v887
        %v1920 = vunpack.c.l.b16 %v888
        %v1921 = vunpack.c.l.b16 %v889
        %v1922 = vunpack.c.l.b16 %v890
        %v1923 = vunpack.c.l.b16 %v891
        %v1924 = vunpack.c.l.b16 %v892
        %v1925 = vunpack.c.l.b16 %v893
        %v1926 = vunpack.c.l.b16 %v894
        %v1927 = vunpack.c.l.b16 %v895
        %v1928 = vunpack.c.l.b16 %v896
        %v1929 = vunpack.c.l.b16 %v897
        %v1930 = vunpack.c.l.b16 %v898
        %v1931 = vunpack.c.l.b16 %v899
        %v1932 = vunpack.c.l.b16 %v900
        %v1933 = vunpack.c.l.b16 %v901
        %v1934 = vunpack.c.l.b16 %v902
        %v1935 = vunpack.c.l.b16 %v903
        %v1936 = vunpack.c.l.b16 %v904
        %v1937 = vunpack.c.l.b16 %v905
        %v1938 = vunpack.c.l.b16 %v906
        %v1939 = vunpack.c.l.b16 %v907
        %v1940 = vunpack.c.l.b16 %v908
        %v1941 = vunpack.c.l.b16 %v909
        %v1942 = vunpack.c.l.b16 %v910
        %v1943 = vunpack.c.l.b16 %v911
        %v1944 = vunpack.c.l.b16 %v912
        %v1945 = vunpack.c.l.b16 %v913
        %v1946 = vunpack.c.l.b16 %v914
        %v1947 = vunpack.c.l.b16 %v915
        %v1948 = vunpack.c.l.b16 %v916
        %v1949 = vunpack.c.l.b16 %v917
        %v1950 = vunpack.c.l.b16 %v918
        %v1951 = vunpack.c.l.b16 %v919
        %v1952 = vunpack.c.l.b16 %v920
        %v1953 = vunpack.c.l.b16 %v921
        %v1954 = vunpack.c.l.b16 %v922
        %v1955 = vunpack.c.l.b16 %v923
        %v1956 = vunpack.c.l.b16 %v924
        %v1957 = vunpack.c.l.b16 %v925
        %v1958 = vunpack.c.l.b16 %v926
        %v1959 = vunpack.c.l.b16 %v927
        %v1960 = vunpack.c.l.b16 %v928
        %v1961 = vunpack.c.l.b16 %v929
        %v1962 = vunpack.c.l.b16 %v930
        %v1963 = vunpack.c.l.b16 %v931
        %v1964 = vunpack.c.l.b16 %v932
        %v1965 = vpack.c.b16 %v1838, %v1837
        %v1966 = vpack.c.b16 %v1840, %v1839
        %v1967 = vpack.c.b16 %v1842, %v1841
        %v1968 = vpack.c.b16 %v1844, %v1843
        %v1969 = vpack.c.b16 %v1846, %v1845
        %v1970 = vpack.c.b16 %v1848, %v1847
        %v1971 = vpack.c.b16 %v1850, %v1849
        %v1972 = vpack.c.b16 %v1852, %v1851
        %v1973 = vpack.c.b16 %v1854, %v1853
        %v1974 = vpack.c.b16 %v1856, %v1855
        %v1975 = vpack.c.b16 %v1858, %v1857
        %v1976 = vpack.c.b16 %v1860, %v1859
        %v1977 = vpack.c.b16 %v1862, %v1861
        %v1978 = vpack.c.b16 %v1864, %v1863
        %v1979 = vpack.c.b16 %v1866, %v1865
        %v1980 = vpack.c.b16 %v1868, %v1867
        %v1981 = vpack.c.b16 %v1870, %v1869
        %v1982 = vpack.c.b16 %v1872, %v1871
        %v1983 = vpack.c.b16 %v1874, %v1873
        %v1984 = vpack.c.b16 %v1876, %v1875
        %v1985 = vpack.c.b16 %v1878, %v1877
        %v1986 = vpack.c.b16 %v1880, %v1879
        %v1987 = vpack.c.b16 %v1882, %v1881
        %v1988 = vpack.c.b16 %v1884, %v1883
        %v1989 = vpack.c.b16 %v1886, %v1885
        %v1990 = vpack.c.b16 %v1888, %v1887
        %v1991 = vpack.c.b16 %v1890, %v1889
        %v1992 = vpack.c.b16 %v1892, %v1891
        %v1993 = vpack.c.b16 %v1894, %v1893
        %v1994 = vpack.c.b16 %v1896, %v1895
        %v1995 = vpack.c.b16 %v1898, %v1897
        %v1996 = vpack.c.b16 %v1900, %v1899
        %v1997 = vpack.c.b16 %v1902, %v1901
        %v1998 = vpack.c.b16 %v1904, %v1903
        %v1999 = vpack.c.b16 %v1906, %v1905
        %v2000 = vpack.c.b16 %v1908, %v1907
        %v2001 = vpack.c.b16 %v1910, %v1909
        %v2002 = vpack.c.b16 %v1912, %v1911
        %v2003 = vpack.c.b16 %v1914, %v1913
        %v2004 = vpack.c.b16 %v1916, %v1915
        %v2005 = vpack.c.b16 %v1918, %v1917
        %v2006 = vpack.c.b16 %v1920, %v1919
        %v2007 = vpack.c.b16 %v1922, %v1921
        %v2008 = vpack.c.b16 %v1924, %v1923
        %v2009 = vpack.c.b16 %v1926, %v1925
        %v2010 = vpack.c.b16 %v1928, %v1927
        %v2011 = vpack.c.b16 %v1930, %v1929
        %v2012 = vpack.c.b16 %v1932, %v1931
        %v2013 = vpack.c.b16 %v1934, %v1933
        %v2014 = vpack.c.b16 %v1936, %v1935
        %v2015 = vpack.c.b16 %v1938, %v1937
        %v2016 = vpack.c.b16 %v1940, %v1939
        %v2017 = vpack.c.b16 %v1942, %v1941
        %v2018 = vpack.c.b16 %v1944, %v1943
        %v2019 = vpack.c.b16 %v1946, %v1945
        %v2020 = vpack.c.b16 %v1948, %v1947
        %v2021 = vpack.c.b16 %v1950, %v1949
        %v2022 = vpack.c.b16 %v1952, %v1951
        %v2023 = vpack.c.b16 %v1954, %v1953
        %v2024 = vpack.c.b16 %v1956, %v1955
        %v2025 = vpack.c.b16 %v1958, %v1957
        %v2026 = vpack.c.b16 %v1960, %v1959
        %v2027 = vpack.c.b16 %v1962, %v1961
        %v2028 = vpack.c.b16 %v1964, %v1963
        %2093 = vmatpush.bf16.msra.mxu0 %v940
        %2094 = vmatpush.bf16.msra.mxu0 %v939
        %2095 = vmatpush.bf16.msra.mxu0 %v938
        %2096 = vmatpush.bf16.msra.mxu0 %v937
        %2097 = vmatpush.bf16.msra.mxu0 %v936
        %2098 = vmatpush.bf16.msra.mxu0 %v935
        %2099 = vmatpush.bf16.msra.mxu0 %v934
        %2100 = vmatpush.bf16.msra.mxu0 %v933
        %2101 = vmatmul.bf16.gmra.mxu0 %v1965
        %v2102 = vpop.f32.mrf.mxu0
        %v2103 = vadd.f32 %v1072, %v2102
        %v2104 = vpop.f32.mrf.mxu0
        %v2105 = vadd.f32 %v1077, %v2104
        %2106 = vmatmul.bf16.gmra.mxu0 %v1966
        %v2107 = vpop.f32.mrf.mxu0
        %v2108 = vadd.f32 %v1082, %v2107
        %v2109 = vpop.f32.mrf.mxu0
        %v2110 = vadd.f32 %v1087, %v2109
        %2111 = vmatmul.bf16.gmra.mxu0 %v1967
        %v2112 = vpop.f32.mrf.mxu0
        %v2113 = vadd.f32 %v1092, %v2112
        %v2114 = vpop.f32.mrf.mxu0
        %v2115 = vadd.f32 %v1097, %v2114
        %2116 = vmatmul.bf16.gmra.mxu0 %v1968
        %v2117 = vpop.f32.mrf.mxu0
        %v2118 = vadd.f32 %v1102, %v2117
        %v2119 = vpop.f32.mrf.mxu0
        %v2120 = vadd.f32 %v1107, %v2119
        %2121 = vmatmul.bf16.gmra.mxu0 %v1969
        %v2122 = vpop.f32.mrf.mxu0
        %v2123 = vadd.f32 %v1112, %v2122
        %v2124 = vpop.f32.mrf.mxu0
        %v2125 = vadd.f32 %v1117, %v2124
        %2126 = vmatmul.bf16.gmra.mxu0 %v1970
        %v2127 = vpop.f32.mrf.mxu0
        %v2128 = vadd.f32 %v1122, %v2127
        %v2129 = vpop.f32.mrf.mxu0
        %v2130 = vadd.f32 %v1127, %v2129
        %2131 = vmatmul.bf16.gmra.mxu0 %v1971
        %v2132 = vpop.f32.mrf.mxu0
        %v2133 = vadd.f32 %v1132, %v2132
        %v2134 = vpop.f32.mrf.mxu0
        %v2135 = vadd.f32 %v1137, %v2134
        %2136 = vmatmul.bf16.gmra.mxu0 %v1972
        %v2137 = vpop.f32.mrf.mxu0
        %v2138 = vadd.f32 %v1142, %v2137
        %v2139 = vpop.f32.mrf.mxu0
        %v2140 = vadd.f32 %v1147, %v2139
        %2141 = vmatmul.bf16.gmra.mxu0 %v1973
        %v2142 = vpop.f32.mrf.mxu0
        %v2143 = vadd.f32 %v1152, %v2142
        %v2144 = vpop.f32.mrf.mxu0
        %v2145 = vadd.f32 %v1157, %v2144
        %2146 = vmatmul.bf16.gmra.mxu0 %v1974
        %v2147 = vpop.f32.mrf.mxu0
        %v2148 = vadd.f32 %v1162, %v2147
        %v2149 = vpop.f32.mrf.mxu0
        %v2150 = vadd.f32 %v1167, %v2149
        %2151 = vmatmul.bf16.gmra.mxu0 %v1975
        %v2152 = vpop.f32.mrf.mxu0
        %v2153 = vadd.f32 %v1172, %v2152
        %v2154 = vpop.f32.mrf.mxu0
        %v2155 = vadd.f32 %v1177, %v2154
        %2156 = vmatmul.bf16.gmra.mxu0 %v1976
        %v2157 = vpop.f32.mrf.mxu0
        %v2158 = vadd.f32 %v1182, %v2157
        %v2159 = vpop.f32.mrf.mxu0
        %v2160 = vadd.f32 %v1187, %v2159
        %2161 = vmatmul.bf16.gmra.mxu0 %v1977
        %v2162 = vpop.f32.mrf.mxu0
        %v2163 = vadd.f32 %v1192, %v2162
        %v2164 = vpop.f32.mrf.mxu0
        %v2165 = vadd.f32 %v1197, %v2164
        %2166 = vmatmul.bf16.gmra.mxu0 %v1978
        %v2167 = vpop.f32.mrf.mxu0
        %v2168 = vadd.f32 %v1202, %v2167
        %v2169 = vpop.f32.mrf.mxu0
        %v2170 = vadd.f32 %v1207, %v2169
        %2171 = vmatmul.bf16.gmra.mxu0 %v1979
        %v2172 = vpop.f32.mrf.mxu0
        %v2173 = vadd.f32 %v1212, %v2172
        %v2174 = vpop.f32.mrf.mxu0
        %v2175 = vadd.f32 %v1217, %v2174
        %2176 = vmatmul.bf16.gmra.mxu0 %v1980
        %v2177 = vpop.f32.mrf.mxu0
        %v2178 = vadd.f32 %v1222, %v2177
        %v2179 = vpop.f32.mrf.mxu0
        %v2180 = vadd.f32 %v1227, %v2179
        %2181 = vmatmul.bf16.gmra.mxu0 %v1981
        %v2182 = vpop.f32.mrf.mxu0
        %v2183 = vadd.f32 %v1232, %v2182
        %v2184 = vpop.f32.mrf.mxu0
        %v2185 = vadd.f32 %v1237, %v2184
        %2186 = vmatmul.bf16.gmra.mxu0 %v1982
        %v2187 = vpop.f32.mrf.mxu0
        %v2188 = vadd.f32 %v1242, %v2187
        %v2189 = vpop.f32.mrf.mxu0
        %v2190 = vadd.f32 %v1247, %v2189
        %2191 = vmatmul.bf16.gmra.mxu0 %v1983
        %v2192 = vpop.f32.mrf.mxu0
        %v2193 = vadd.f32 %v1252, %v2192
        %v2194 = vpop.f32.mrf.mxu0
        %v2195 = vadd.f32 %v1257, %v2194
        %2196 = vmatmul.bf16.gmra.mxu0 %v1984
        %v2197 = vpop.f32.mrf.mxu0
        %v2198 = vadd.f32 %v1262, %v2197
        %v2199 = vpop.f32.mrf.mxu0
        %v2200 = vadd.f32 %v1267, %v2199
        %2201 = vmatmul.bf16.gmra.mxu0 %v1985
        %v2202 = vpop.f32.mrf.mxu0
        %v2203 = vadd.f32 %v1272, %v2202
        %v2204 = vpop.f32.mrf.mxu0
        %v2205 = vadd.f32 %v1277, %v2204
        %2206 = vmatmul.bf16.gmra.mxu0 %v1986
        %v2207 = vpop.f32.mrf.mxu0
        %v2208 = vadd.f32 %v1282, %v2207
        %v2209 = vpop.f32.mrf.mxu0
        %v2210 = vadd.f32 %v1287, %v2209
        %2211 = vmatmul.bf16.gmra.mxu0 %v1987
        %v2212 = vpop.f32.mrf.mxu0
        %v2213 = vadd.f32 %v1292, %v2212
        %v2214 = vpop.f32.mrf.mxu0
        %v2215 = vadd.f32 %v1297, %v2214
        %2216 = vmatmul.bf16.gmra.mxu0 %v1988
        %v2217 = vpop.f32.mrf.mxu0
        %v2218 = vadd.f32 %v1302, %v2217
        %v2219 = vpop.f32.mrf.mxu0
        %v2220 = vadd.f32 %v1307, %v2219
        %2221 = vmatmul.bf16.gmra.mxu0 %v1989
        %v2222 = vpop.f32.mrf.mxu0
        %v2223 = vadd.f32 %v1312, %v2222
        %v2224 = vpop.f32.mrf.mxu0
        %v2225 = vadd.f32 %v1317, %v2224
        %2226 = vmatmul.bf16.gmra.mxu0 %v1990
        %v2227 = vpop.f32.mrf.mxu0
        %v2228 = vadd.f32 %v1322, %v2227
        %v2229 = vpop.f32.mrf.mxu0
        %v2230 = vadd.f32 %v1327, %v2229
        %2231 = vmatmul.bf16.gmra.mxu0 %v1991
        %v2232 = vpop.f32.mrf.mxu0
        %v2233 = vadd.f32 %v1332, %v2232
        %v2234 = vpop.f32.mrf.mxu0
        %v2235 = vadd.f32 %v1337, %v2234
        %2236 = vmatmul.bf16.gmra.mxu0 %v1992
        %v2237 = vpop.f32.mrf.mxu0
        %v2238 = vadd.f32 %v1342, %v2237
        %v2239 = vpop.f32.mrf.mxu0
        %v2240 = vadd.f32 %v1347, %v2239
        %2241 = vmatmul.bf16.gmra.mxu0 %v1993
        %v2242 = vpop.f32.mrf.mxu0
        %v2243 = vadd.f32 %v1352, %v2242
        %v2244 = vpop.f32.mrf.mxu0
        %v2245 = vadd.f32 %v1357, %v2244
        %2246 = vmatmul.bf16.gmra.mxu0 %v1994
        %v2247 = vpop.f32.mrf.mxu0
        %v2248 = vadd.f32 %v1362, %v2247
        %v2249 = vpop.f32.mrf.mxu0
        %v2250 = vadd.f32 %v1367, %v2249
        %2251 = vmatmul.bf16.gmra.mxu0 %v1995
        %v2252 = vpop.f32.mrf.mxu0
        %v2253 = vadd.f32 %v1372, %v2252
        %v2254 = vpop.f32.mrf.mxu0
        %v2255 = vadd.f32 %v1377, %v2254
        %2256 = vmatmul.bf16.gmra.mxu0 %v1996
        %v2257 = vpop.f32.mrf.mxu0
        %v2258 = vadd.f32 %v1382, %v2257
        %v2259 = vpop.f32.mrf.mxu0
        %v2260 = vadd.f32 %v1387, %v2259
        %2261 = vmatmul.bf16.gmra.mxu0 %v1997
        %v2262 = vpop.f32.mrf.mxu0
        %v2263 = vadd.f32 %v1392, %v2262
        %v2264 = vpop.f32.mrf.mxu0
        %v2265 = vadd.f32 %v1397, %v2264
        %2266 = vmatmul.bf16.gmra.mxu0 %v1998
        %v2267 = vpop.f32.mrf.mxu0
        %v2268 = vadd.f32 %v1402, %v2267
        %v2269 = vpop.f32.mrf.mxu0
        %v2270 = vadd.f32 %v1407, %v2269
        %2271 = vmatmul.bf16.gmra.mxu0 %v1999
        %v2272 = vpop.f32.mrf.mxu0
        %v2273 = vadd.f32 %v1412, %v2272
        %v2274 = vpop.f32.mrf.mxu0
        %v2275 = vadd.f32 %v1417, %v2274
        %2276 = vmatmul.bf16.gmra.mxu0 %v2000
        %v2277 = vpop.f32.mrf.mxu0
        %v2278 = vadd.f32 %v1422, %v2277
        %v2279 = vpop.f32.mrf.mxu0
        %v2280 = vadd.f32 %v1427, %v2279
        %2281 = vmatmul.bf16.gmra.mxu0 %v2001
        %v2282 = vpop.f32.mrf.mxu0
        %v2283 = vadd.f32 %v1432, %v2282
        %v2284 = vpop.f32.mrf.mxu0
        %v2285 = vadd.f32 %v1437, %v2284
        %2286 = vmatmul.bf16.gmra.mxu0 %v2002
        %v2287 = vpop.f32.mrf.mxu0
        %v2288 = vadd.f32 %v1442, %v2287
        %v2289 = vpop.f32.mrf.mxu0
        %v2290 = vadd.f32 %v1447, %v2289
        %2291 = vmatmul.bf16.gmra.mxu0 %v2003
        %v2292 = vpop.f32.mrf.mxu0
        %v2293 = vadd.f32 %v1452, %v2292
        %v2294 = vpop.f32.mrf.mxu0
        %v2295 = vadd.f32 %v1457, %v2294
        %2296 = vmatmul.bf16.gmra.mxu0 %v2004
        %v2297 = vpop.f32.mrf.mxu0
        %v2298 = vadd.f32 %v1462, %v2297
        %v2299 = vpop.f32.mrf.mxu0
        %v2300 = vadd.f32 %v1467, %v2299
        %2301 = vmatmul.bf16.gmra.mxu0 %v2005
        %v2302 = vpop.f32.mrf.mxu0
        %v2303 = vadd.f32 %v1472, %v2302
        %v2304 = vpop.f32.mrf.mxu0
        %v2305 = vadd.f32 %v1477, %v2304
        %2306 = vmatmul.bf16.gmra.mxu0 %v2006
        %v2307 = vpop.f32.mrf.mxu0
        %v2308 = vadd.f32 %v1482, %v2307
        %v2309 = vpop.f32.mrf.mxu0
        %v2310 = vadd.f32 %v1487, %v2309
        %2311 = vmatmul.bf16.gmra.mxu0 %v2007
        %v2312 = vpop.f32.mrf.mxu0
        %v2313 = vadd.f32 %v1492, %v2312
        %v2314 = vpop.f32.mrf.mxu0
        %v2315 = vadd.f32 %v1497, %v2314
        %2316 = vmatmul.bf16.gmra.mxu0 %v2008
        %v2317 = vpop.f32.mrf.mxu0
        %v2318 = vadd.f32 %v1502, %v2317
        %v2319 = vpop.f32.mrf.mxu0
        %v2320 = vadd.f32 %v1507, %v2319
        %2321 = vmatmul.bf16.gmra.mxu0 %v2009
        %v2322 = vpop.f32.mrf.mxu0
        %v2323 = vadd.f32 %v1512, %v2322
        %v2324 = vpop.f32.mrf.mxu0
        %v2325 = vadd.f32 %v1517, %v2324
        %2326 = vmatmul.bf16.gmra.mxu0 %v2010
        %v2327 = vpop.f32.mrf.mxu0
        %v2328 = vadd.f32 %v1522, %v2327
        %v2329 = vpop.f32.mrf.mxu0
        %v2330 = vadd.f32 %v1527, %v2329
        %2331 = vmatmul.bf16.gmra.mxu0 %v2011
        %v2332 = vpop.f32.mrf.mxu0
        %v2333 = vadd.f32 %v1532, %v2332
        %v2334 = vpop.f32.mrf.mxu0
        %v2335 = vadd.f32 %v1537, %v2334
        %2336 = vmatmul.bf16.gmra.mxu0 %v2012
        %v2337 = vpop.f32.mrf.mxu0
        %v2338 = vadd.f32 %v1542, %v2337
        %v2339 = vpop.f32.mrf.mxu0
        %v2340 = vadd.f32 %v1547, %v2339
        %2341 = vmatmul.bf16.gmra.mxu0 %v2013
        %v2342 = vpop.f32.mrf.mxu0
        %v2343 = vadd.f32 %v1552, %v2342
        %v2344 = vpop.f32.mrf.mxu0
        %v2345 = vadd.f32 %v1557, %v2344
        %2346 = vmatmul.bf16.gmra.mxu0 %v2014
        %v2347 = vpop.f32.mrf.mxu0
        %v2348 = vadd.f32 %v1562, %v2347
        %v2349 = vpop.f32.mrf.mxu0
        %v2350 = vadd.f32 %v1567, %v2349
        %2351 = vmatmul.bf16.gmra.mxu0 %v2015
        %v2352 = vpop.f32.mrf.mxu0
        %v2353 = vadd.f32 %v1572, %v2352
        %v2354 = vpop.f32.mrf.mxu0
        %v2355 = vadd.f32 %v1577, %v2354
        %2356 = vmatmul.bf16.gmra.mxu0 %v2016
        %v2357 = vpop.f32.mrf.mxu0
        %v2358 = vadd.f32 %v1582, %v2357
        %v2359 = vpop.f32.mrf.mxu0
        %v2360 = vadd.f32 %v1587, %v2359
        %2361 = vmatmul.bf16.gmra.mxu0 %v2017
        %v2362 = vpop.f32.mrf.mxu0
        %v2363 = vadd.f32 %v1592, %v2362
        %v2364 = vpop.f32.mrf.mxu0
        %v2365 = vadd.f32 %v1597, %v2364
        %2366 = vmatmul.bf16.gmra.mxu0 %v2018
        %v2367 = vpop.f32.mrf.mxu0
        %v2368 = vadd.f32 %v1602, %v2367
        %v2369 = vpop.f32.mrf.mxu0
        %v2370 = vadd.f32 %v1607, %v2369
        %2371 = vmatmul.bf16.gmra.mxu0 %v2019
        %v2372 = vpop.f32.mrf.mxu0
        %v2373 = vadd.f32 %v1612, %v2372
        %v2374 = vpop.f32.mrf.mxu0
        %v2375 = vadd.f32 %v1617, %v2374
        %2376 = vmatmul.bf16.gmra.mxu0 %v2020
        %v2377 = vpop.f32.mrf.mxu0
        %v2378 = vadd.f32 %v1622, %v2377
        %v2379 = vpop.f32.mrf.mxu0
        %v2380 = vadd.f32 %v1627, %v2379
        %2381 = vmatmul.bf16.gmra.mxu0 %v2021
        %v2382 = vpop.f32.mrf.mxu0
        %v2383 = vadd.f32 %v1632, %v2382
        %v2384 = vpop.f32.mrf.mxu0
        %v2385 = vadd.f32 %v1637, %v2384
        %2386 = vmatmul.bf16.gmra.mxu0 %v2022
        %v2387 = vpop.f32.mrf.mxu0
        %v2388 = vadd.f32 %v1642, %v2387
        %v2389 = vpop.f32.mrf.mxu0
        %v2390 = vadd.f32 %v1647, %v2389
        %2391 = vmatmul.bf16.gmra.mxu0 %v2023
        %v2392 = vpop.f32.mrf.mxu0
        %v2393 = vadd.f32 %v1652, %v2392
        %v2394 = vpop.f32.mrf.mxu0
        %v2395 = vadd.f32 %v1657, %v2394
        %2396 = vmatmul.bf16.gmra.mxu0 %v2024
        %v2397 = vpop.f32.mrf.mxu0
        %v2398 = vadd.f32 %v1662, %v2397
        %v2399 = vpop.f32.mrf.mxu0
        %v2400 = vadd.f32 %v1667, %v2399
        %2401 = vmatmul.bf16.gmra.mxu0 %v2025
        %v2402 = vpop.f32.mrf.mxu0
        %v2403 = vadd.f32 %v1672, %v2402
        %v2404 = vpop.f32.mrf.mxu0
        %v2405 = vadd.f32 %v1677, %v2404
        %2406 = vmatmul.bf16.gmra.mxu0 %v2026
        %v2407 = vpop.f32.mrf.mxu0
        %v2408 = vadd.f32 %v1682, %v2407
        %v2409 = vpop.f32.mrf.mxu0
        %v2410 = vadd.f32 %v1687, %v2409
        %2411 = vmatmul.bf16.gmra.mxu0 %v2027
        %v2412 = vpop.f32.mrf.mxu0
        %v2413 = vadd.f32 %v1692, %v2412
        %v2414 = vpop.f32.mrf.mxu0
        %v2415 = vadd.f32 %v1697, %v2414
        %2416 = vmatmul.bf16.gmra.mxu0 %v2028
        %v2417 = vpop.f32.mrf.mxu0
        %v2418 = vadd.f32 %v1702, %v2417
        %v2419 = vpop.f32.mrf.mxu0
        %v2420 = vadd.f32 %v1707, %v2419
        %2421 = vdwg.mxu0
        %v2422 = vsel %vm715, %v2103, -inf
        %2423 = vmax.xlane.f32.xlu0 %v2422
        %v2424 = vpop.xlane.xlu0 %2423
        %v2425 = vsel %vm715, %v2105, -inf
        %2426 = vmax.xlane.f32.xlu0 %v2425
        %v2427 = vpop.xlane.xlu0 %2426
        %v2428 = vsel %vm715, %v2108, -inf
        %2429 = vmax.xlane.f32.xlu0 %v2428
        %v2430 = vpop.xlane.xlu0 %2429
        %v2431 = vsel %vm715, %v2110, -inf
        %2432 = vmax.xlane.f32.xlu0 %v2431
        %v2433 = vpop.xlane.xlu0 %2432
        %v2434 = vsel %vm715, %v2113, -inf
        %2435 = vmax.xlane.f32.xlu0 %v2434
        %v2436 = vpop.xlane.xlu0 %2435
        %v2437 = vsel %vm715, %v2115, -inf
        %2438 = vmax.xlane.f32.xlu0 %v2437
        %v2439 = vpop.xlane.xlu0 %2438
        %v2440 = vsel %vm715, %v2118, -inf
        %2441 = vmax.xlane.f32.xlu0 %v2440
        %v2442 = vpop.xlane.xlu0 %2441
        %v2443 = vsel %vm715, %v2120, -inf
        %2444 = vmax.xlane.f32.xlu0 %v2443
        %v2445 = vpop.xlane.xlu0 %2444
        %v2446 = vsel %vm715, %v2123, -inf
        %2447 = vmax.xlane.f32.xlu0 %v2446
        %v2448 = vpop.xlane.xlu0 %2447
        %v2449 = vsel %vm715, %v2125, -inf
        %2450 = vmax.xlane.f32.xlu0 %v2449
        %v2451 = vpop.xlane.xlu0 %2450
        %v2452 = vsel %vm715, %v2128, -inf
        %2453 = vmax.xlane.f32.xlu0 %v2452
        %v2454 = vpop.xlane.xlu0 %2453
        %v2455 = vsel %vm715, %v2130, -inf
        %2456 = vmax.xlane.f32.xlu0 %v2455
        %v2457 = vpop.xlane.xlu0 %2456
        %v2458 = vsel %vm715, %v2133, -inf
        %2459 = vmax.xlane.f32.xlu0 %v2458
        %v2460 = vpop.xlane.xlu0 %2459
        %v2461 = vsel %vm715, %v2135, -inf
        %2462 = vmax.xlane.f32.xlu0 %v2461
        %v2463 = vpop.xlane.xlu0 %2462
        %v2464 = vsel %vm715, %v2138, -inf
        %2465 = vmax.xlane.f32.xlu0 %v2464
        %v2466 = vpop.xlane.xlu0 %2465
        %v2467 = vsel %vm715, %v2140, -inf
        %2468 = vmax.xlane.f32.xlu0 %v2467
        %v2469 = vpop.xlane.xlu0 %2468
        %v2470 = vsel %vm715, %v2143, -inf
        %2471 = vmax.xlane.f32.xlu0 %v2470
        %v2472 = vpop.xlane.xlu0 %2471
        %v2473 = vsel %vm715, %v2145, -inf
        %2474 = vmax.xlane.f32.xlu0 %v2473
        %v2475 = vpop.xlane.xlu0 %2474
        %v2476 = vsel %vm715, %v2148, -inf
        %2477 = vmax.xlane.f32.xlu0 %v2476
        %v2478 = vpop.xlane.xlu0 %2477
        %v2479 = vsel %vm715, %v2150, -inf
        %2480 = vmax.xlane.f32.xlu0 %v2479
        %v2481 = vpop.xlane.xlu0 %2480
        %v2482 = vsel %vm715, %v2153, -inf
        %2483 = vmax.xlane.f32.xlu0 %v2482
        %v2484 = vpop.xlane.xlu0 %2483
        %v2485 = vsel %vm715, %v2155, -inf
        %2486 = vmax.xlane.f32.xlu0 %v2485
        %v2487 = vpop.xlane.xlu0 %2486
        %v2488 = vsel %vm715, %v2158, -inf
        %2489 = vmax.xlane.f32.xlu0 %v2488
        %v2490 = vpop.xlane.xlu0 %2489
        %v2491 = vsel %vm715, %v2160, -inf
        %2492 = vmax.xlane.f32.xlu0 %v2491
        %v2493 = vpop.xlane.xlu0 %2492
        %v2494 = vsel %vm715, %v2163, -inf
        %2495 = vmax.xlane.f32.xlu0 %v2494
        %v2496 = vpop.xlane.xlu0 %2495
        %v2497 = vsel %vm715, %v2165, -inf
        %2498 = vmax.xlane.f32.xlu0 %v2497
        %v2499 = vpop.xlane.xlu0 %2498
        %v2500 = vsel %vm715, %v2168, -inf
        %2501 = vmax.xlane.f32.xlu0 %v2500
        %v2502 = vpop.xlane.xlu0 %2501
        %v2503 = vsel %vm715, %v2170, -inf
        %2504 = vmax.xlane.f32.xlu0 %v2503
        %v2505 = vpop.xlane.xlu0 %2504
        %v2506 = vsel %vm715, %v2173, -inf
        %2507 = vmax.xlane.f32.xlu0 %v2506
        %v2508 = vpop.xlane.xlu0 %2507
        %v2509 = vsel %vm715, %v2175, -inf
        %2510 = vmax.xlane.f32.xlu0 %v2509
        %v2511 = vpop.xlane.xlu0 %2510
        %v2512 = vsel %vm715, %v2178, -inf
        %2513 = vmax.xlane.f32.xlu0 %v2512
        %v2514 = vpop.xlane.xlu0 %2513
        %v2515 = vsel %vm715, %v2180, -inf
        %2516 = vmax.xlane.f32.xlu0 %v2515
        %v2517 = vpop.xlane.xlu0 %2516
        %v2518 = vsel %vm715, %v2183, -inf
        %2519 = vmax.xlane.f32.xlu0 %v2518
        %v2520 = vpop.xlane.xlu0 %2519
        %v2521 = vsel %vm715, %v2185, -inf
        %2522 = vmax.xlane.f32.xlu0 %v2521
        %v2523 = vpop.xlane.xlu0 %2522
        %v2524 = vsel %vm715, %v2188, -inf
        %2525 = vmax.xlane.f32.xlu0 %v2524
        %v2526 = vpop.xlane.xlu0 %2525
        %v2527 = vsel %vm715, %v2190, -inf
        %2528 = vmax.xlane.f32.xlu0 %v2527
        %v2529 = vpop.xlane.xlu0 %2528
        %v2530 = vsel %vm715, %v2193, -inf
        %2531 = vmax.xlane.f32.xlu0 %v2530
        %v2532 = vpop.xlane.xlu0 %2531
        %v2533 = vsel %vm715, %v2195, -inf
        %2534 = vmax.xlane.f32.xlu0 %v2533
        %v2535 = vpop.xlane.xlu0 %2534
        %v2536 = vsel %vm715, %v2198, -inf
        %2537 = vmax.xlane.f32.xlu0 %v2536
        %v2538 = vpop.xlane.xlu0 %2537
        %v2539 = vsel %vm715, %v2200, -inf
        %2540 = vmax.xlane.f32.xlu0 %v2539
        %v2541 = vpop.xlane.xlu0 %2540
        %v2542 = vsel %vm715, %v2203, -inf
        %2543 = vmax.xlane.f32.xlu0 %v2542
        %v2544 = vpop.xlane.xlu0 %2543
        %v2545 = vsel %vm715, %v2205, -inf
        %2546 = vmax.xlane.f32.xlu0 %v2545
        %v2547 = vpop.xlane.xlu0 %2546
        %v2548 = vsel %vm715, %v2208, -inf
        %2549 = vmax.xlane.f32.xlu0 %v2548
        %v2550 = vpop.xlane.xlu0 %2549
        %v2551 = vsel %vm715, %v2210, -inf
        %2552 = vmax.xlane.f32.xlu0 %v2551
        %v2553 = vpop.xlane.xlu0 %2552
        %v2554 = vsel %vm715, %v2213, -inf
        %2555 = vmax.xlane.f32.xlu0 %v2554
        %v2556 = vpop.xlane.xlu0 %2555
        %v2557 = vsel %vm715, %v2215, -inf
        %2558 = vmax.xlane.f32.xlu0 %v2557
        %v2559 = vpop.xlane.xlu0 %2558
        %v2560 = vsel %vm715, %v2218, -inf
        %2561 = vmax.xlane.f32.xlu0 %v2560
        %v2562 = vpop.xlane.xlu0 %2561
        %v2563 = vsel %vm715, %v2220, -inf
        %2564 = vmax.xlane.f32.xlu0 %v2563
        %v2565 = vpop.xlane.xlu0 %2564
        %v2566 = vsel %vm715, %v2223, -inf
        %2567 = vmax.xlane.f32.xlu0 %v2566
        %v2568 = vpop.xlane.xlu0 %2567
        %v2569 = vsel %vm715, %v2225, -inf
        %2570 = vmax.xlane.f32.xlu0 %v2569
        %v2571 = vpop.xlane.xlu0 %2570
        %v2572 = vsel %vm715, %v2228, -inf
        %2573 = vmax.xlane.f32.xlu0 %v2572
        %v2574 = vpop.xlane.xlu0 %2573
        %v2575 = vsel %vm715, %v2230, -inf
        %2576 = vmax.xlane.f32.xlu0 %v2575
        %v2577 = vpop.xlane.xlu0 %2576
        %v2578 = vsel %vm715, %v2233, -inf
        %2579 = vmax.xlane.f32.xlu0 %v2578
        %v2580 = vpop.xlane.xlu0 %2579
        %v2581 = vsel %vm715, %v2235, -inf
        %2582 = vmax.xlane.f32.xlu0 %v2581
        %v2583 = vpop.xlane.xlu0 %2582
        %v2584 = vsel %vm715, %v2238, -inf
        %2585 = vmax.xlane.f32.xlu0 %v2584
        %v2586 = vpop.xlane.xlu0 %2585
        %v2587 = vsel %vm715, %v2240, -inf
        %2588 = vmax.xlane.f32.xlu0 %v2587
        %v2589 = vpop.xlane.xlu0 %2588
        %v2590 = vsel %vm715, %v2243, -inf
        %2591 = vmax.xlane.f32.xlu0 %v2590
        %v2592 = vpop.xlane.xlu0 %2591
        %v2593 = vsel %vm715, %v2245, -inf
        %2594 = vmax.xlane.f32.xlu0 %v2593
        %v2595 = vpop.xlane.xlu0 %2594
        %v2596 = vsel %vm715, %v2248, -inf
        %2597 = vmax.xlane.f32.xlu0 %v2596
        %v2598 = vpop.xlane.xlu0 %2597
        %v2599 = vsel %vm715, %v2250, -inf
        %2600 = vmax.xlane.f32.xlu0 %v2599
        %v2601 = vpop.xlane.xlu0 %2600
        %v2602 = vsel %vm715, %v2253, -inf
        %2603 = vmax.xlane.f32.xlu0 %v2602
        %v2604 = vpop.xlane.xlu0 %2603
        %v2605 = vsel %vm715, %v2255, -inf
        %2606 = vmax.xlane.f32.xlu0 %v2605
        %v2607 = vpop.xlane.xlu0 %2606
        %v2608 = vsel %vm715, %v2258, -inf
        %2609 = vmax.xlane.f32.xlu0 %v2608
        %v2610 = vpop.xlane.xlu0 %2609
        %v2611 = vsel %vm715, %v2260, -inf
        %2612 = vmax.xlane.f32.xlu0 %v2611
        %v2613 = vpop.xlane.xlu0 %2612
        %v2614 = vsel %vm715, %v2263, -inf
        %2615 = vmax.xlane.f32.xlu0 %v2614
        %v2616 = vpop.xlane.xlu0 %2615
        %v2617 = vsel %vm715, %v2265, -inf
        %2618 = vmax.xlane.f32.xlu0 %v2617
        %v2619 = vpop.xlane.xlu0 %2618
        %v2620 = vsel %vm715, %v2268, -inf
        %2621 = vmax.xlane.f32.xlu0 %v2620
        %v2622 = vpop.xlane.xlu0 %2621
        %v2623 = vsel %vm715, %v2270, -inf
        %2624 = vmax.xlane.f32.xlu0 %v2623
        %v2625 = vpop.xlane.xlu0 %2624
        %v2626 = vsel %vm715, %v2273, -inf
        %2627 = vmax.xlane.f32.xlu0 %v2626
        %v2628 = vpop.xlane.xlu0 %2627
        %v2629 = vsel %vm715, %v2275, -inf
        %2630 = vmax.xlane.f32.xlu0 %v2629
        %v2631 = vpop.xlane.xlu0 %2630
        %v2632 = vsel %vm715, %v2278, -inf
        %2633 = vmax.xlane.f32.xlu0 %v2632
        %v2634 = vpop.xlane.xlu0 %2633
        %v2635 = vsel %vm715, %v2280, -inf
        %2636 = vmax.xlane.f32.xlu0 %v2635
        %v2637 = vpop.xlane.xlu0 %2636
        %v2638 = vsel %vm715, %v2283, -inf
        %2639 = vmax.xlane.f32.xlu0 %v2638
        %v2640 = vpop.xlane.xlu0 %2639
        %v2641 = vsel %vm715, %v2285, -inf
        %2642 = vmax.xlane.f32.xlu0 %v2641
        %v2643 = vpop.xlane.xlu0 %2642
        %v2644 = vsel %vm715, %v2288, -inf
        %2645 = vmax.xlane.f32.xlu0 %v2644
        %v2646 = vpop.xlane.xlu0 %2645
        %v2647 = vsel %vm715, %v2290, -inf
        %2648 = vmax.xlane.f32.xlu0 %v2647
        %v2649 = vpop.xlane.xlu0 %2648
        %v2650 = vsel %vm715, %v2293, -inf
        %2651 = vmax.xlane.f32.xlu0 %v2650
        %v2652 = vpop.xlane.xlu0 %2651
        %v2653 = vsel %vm715, %v2295, -inf
        %2654 = vmax.xlane.f32.xlu0 %v2653
        %v2655 = vpop.xlane.xlu0 %2654
        %v2656 = vsel %vm715, %v2298, -inf
        %2657 = vmax.xlane.f32.xlu0 %v2656
        %v2658 = vpop.xlane.xlu0 %2657
        %v2659 = vsel %vm715, %v2300, -inf
        %2660 = vmax.xlane.f32.xlu0 %v2659
        %v2661 = vpop.xlane.xlu0 %2660
        %v2662 = vsel %vm715, %v2303, -inf
        %2663 = vmax.xlane.f32.xlu0 %v2662
        %v2664 = vpop.xlane.xlu0 %2663
        %v2665 = vsel %vm715, %v2305, -inf
        %2666 = vmax.xlane.f32.xlu0 %v2665
        %v2667 = vpop.xlane.xlu0 %2666
        %v2668 = vsel %vm715, %v2308, -inf
        %2669 = vmax.xlane.f32.xlu0 %v2668
        %v2670 = vpop.xlane.xlu0 %2669
        %v2671 = vsel %vm715, %v2310, -inf
        %2672 = vmax.xlane.f32.xlu0 %v2671
        %v2673 = vpop.xlane.xlu0 %2672
        %v2674 = vsel %vm715, %v2313, -inf
        %2675 = vmax.xlane.f32.xlu0 %v2674
        %v2676 = vpop.xlane.xlu0 %2675
        %v2677 = vsel %vm715, %v2315, -inf
        %2678 = vmax.xlane.f32.xlu0 %v2677
        %v2679 = vpop.xlane.xlu0 %2678
        %v2680 = vsel %vm715, %v2318, -inf
        %2681 = vmax.xlane.f32.xlu0 %v2680
        %v2682 = vpop.xlane.xlu0 %2681
        %v2683 = vsel %vm715, %v2320, -inf
        %2684 = vmax.xlane.f32.xlu0 %v2683
        %v2685 = vpop.xlane.xlu0 %2684
        %v2686 = vsel %vm715, %v2323, -inf
        %2687 = vmax.xlane.f32.xlu0 %v2686
        %v2688 = vpop.xlane.xlu0 %2687
        %v2689 = vsel %vm715, %v2325, -inf
        %2690 = vmax.xlane.f32.xlu0 %v2689
        %v2691 = vpop.xlane.xlu0 %2690
        %v2692 = vsel %vm715, %v2328, -inf
        %2693 = vmax.xlane.f32.xlu0 %v2692
        %v2694 = vpop.xlane.xlu0 %2693
        %v2695 = vsel %vm715, %v2330, -inf
        %2696 = vmax.xlane.f32.xlu0 %v2695
        %v2697 = vpop.xlane.xlu0 %2696
        %v2698 = vsel %vm715, %v2333, -inf
        %2699 = vmax.xlane.f32.xlu0 %v2698
        %v2700 = vpop.xlane.xlu0 %2699
        %v2701 = vsel %vm715, %v2335, -inf
        %2702 = vmax.xlane.f32.xlu0 %v2701
        %v2703 = vpop.xlane.xlu0 %2702
        %v2704 = vsel %vm715, %v2338, -inf
        %2705 = vmax.xlane.f32.xlu0 %v2704
        %v2706 = vpop.xlane.xlu0 %2705
        %v2707 = vsel %vm715, %v2340, -inf
        %2708 = vmax.xlane.f32.xlu0 %v2707
        %v2709 = vpop.xlane.xlu0 %2708
        %v2710 = vsel %vm715, %v2343, -inf
        %2711 = vmax.xlane.f32.xlu0 %v2710
        %v2712 = vpop.xlane.xlu0 %2711
        %v2713 = vsel %vm715, %v2345, -inf
        %2714 = vmax.xlane.f32.xlu0 %v2713
        %v2715 = vpop.xlane.xlu0 %2714
        %v2716 = vsel %vm715, %v2348, -inf
        %2717 = vmax.xlane.f32.xlu0 %v2716
        %v2718 = vpop.xlane.xlu0 %2717
        %v2719 = vsel %vm715, %v2350, -inf
        %2720 = vmax.xlane.f32.xlu0 %v2719
        %v2721 = vpop.xlane.xlu0 %2720
        %v2722 = vsel %vm715, %v2353, -inf
        %2723 = vmax.xlane.f32.xlu0 %v2722
        %v2724 = vpop.xlane.xlu0 %2723
        %v2725 = vsel %vm715, %v2355, -inf
        %2726 = vmax.xlane.f32.xlu0 %v2725
        %v2727 = vpop.xlane.xlu0 %2726
        %v2728 = vsel %vm715, %v2358, -inf
        %2729 = vmax.xlane.f32.xlu0 %v2728
        %v2730 = vpop.xlane.xlu0 %2729
        %v2731 = vsel %vm715, %v2360, -inf
        %2732 = vmax.xlane.f32.xlu0 %v2731
        %v2733 = vpop.xlane.xlu0 %2732
        %v2734 = vsel %vm715, %v2363, -inf
        %2735 = vmax.xlane.f32.xlu0 %v2734
        %v2736 = vpop.xlane.xlu0 %2735
        %v2737 = vsel %vm715, %v2365, -inf
        %2738 = vmax.xlane.f32.xlu0 %v2737
        %v2739 = vpop.xlane.xlu0 %2738
        %v2740 = vsel %vm715, %v2368, -inf
        %2741 = vmax.xlane.f32.xlu0 %v2740
        %v2742 = vpop.xlane.xlu0 %2741
        %v2743 = vsel %vm715, %v2370, -inf
        %2744 = vmax.xlane.f32.xlu0 %v2743
        %v2745 = vpop.xlane.xlu0 %2744
        %v2746 = vsel %vm715, %v2373, -inf
        %2747 = vmax.xlane.f32.xlu0 %v2746
        %v2748 = vpop.xlane.xlu0 %2747
        %v2749 = vsel %vm715, %v2375, -inf
        %2750 = vmax.xlane.f32.xlu0 %v2749
        %v2751 = vpop.xlane.xlu0 %2750
        %v2752 = vsel %vm715, %v2378, -inf
        %2753 = vmax.xlane.f32.xlu0 %v2752
        %v2754 = vpop.xlane.xlu0 %2753
        %v2755 = vsel %vm715, %v2380, -inf
        %2756 = vmax.xlane.f32.xlu0 %v2755
        %v2757 = vpop.xlane.xlu0 %2756
        %v2758 = vsel %vm715, %v2383, -inf
        %2759 = vmax.xlane.f32.xlu0 %v2758
        %v2760 = vpop.xlane.xlu0 %2759
        %v2761 = vsel %vm715, %v2385, -inf
        %2762 = vmax.xlane.f32.xlu0 %v2761
        %v2763 = vpop.xlane.xlu0 %2762
        %v2764 = vsel %vm715, %v2388, -inf
        %2765 = vmax.xlane.f32.xlu0 %v2764
        %v2766 = vpop.xlane.xlu0 %2765
        %v2767 = vsel %vm715, %v2390, -inf
        %2768 = vmax.xlane.f32.xlu0 %v2767
        %v2769 = vpop.xlane.xlu0 %2768
        %v2770 = vsel %vm715, %v2393, -inf
        %2771 = vmax.xlane.f32.xlu0 %v2770
        %v2772 = vpop.xlane.xlu0 %2771
        %v2773 = vsel %vm715, %v2395, -inf
        %2774 = vmax.xlane.f32.xlu0 %v2773
        %v2775 = vpop.xlane.xlu0 %2774
        %v2776 = vsel %vm715, %v2398, -inf
        %2777 = vmax.xlane.f32.xlu0 %v2776
        %v2778 = vpop.xlane.xlu0 %2777
        %v2779 = vsel %vm715, %v2400, -inf
        %2780 = vmax.xlane.f32.xlu0 %v2779
        %v2781 = vpop.xlane.xlu0 %2780
        %v2782 = vsel %vm715, %v2403, -inf
        %2783 = vmax.xlane.f32.xlu0 %v2782
        %v2784 = vpop.xlane.xlu0 %2783
        %v2785 = vsel %vm715, %v2405, -inf
        %2786 = vmax.xlane.f32.xlu0 %v2785
        %v2787 = vpop.xlane.xlu0 %2786
        %v2788 = vsel %vm715, %v2408, -inf
        %2789 = vmax.xlane.f32.xlu0 %v2788
        %v2790 = vpop.xlane.xlu0 %2789
        %v2791 = vsel %vm715, %v2410, -inf
        %2792 = vmax.xlane.f32.xlu0 %v2791
        %v2793 = vpop.xlane.xlu0 %2792
        %v2794 = vsel %vm715, %v2413, -inf
        %2795 = vmax.xlane.f32.xlu0 %v2794
        %v2796 = vpop.xlane.xlu0 %2795
        %v2797 = vsel %vm715, %v2415, -inf
        %2798 = vmax.xlane.f32.xlu0 %v2797
        %v2799 = vpop.xlane.xlu0 %2798
        %v2800 = vsel %vm715, %v2418, -inf
        %2801 = vmax.xlane.f32.xlu0 %v2800
        %v2802 = vpop.xlane.xlu0 %2801
        %v2803 = vsel %vm715, %v2420, -inf
        %2804 = vmax.xlane.f32.xlu0 %v2803
        %v2805 = vpop.xlane.xlu0 %2804
        %p2806 = scmp.eq.s32.totalorder %s29, 0
        // Predicated region
        $region73: #{_lambda_.2} parent=47 // pred_check
          %p2807 = pneg %p2806
        $region74: #{_lambda_.2} parent=47 // pred_check_branch
          %2809 = sbr.rel (%p2807) target = $region76
        $region75: #{_lambda_.2} parent=47 // pred_region
          %vm2810 = vcmask 7168
          %2811 = vst.msk [vmem:[%s422] sm:$0xff] %vm2810, -inf
          %2812 = vst.msk [vmem:[%s422 + $0x8] sm:$0xff] %vm2810, -inf
          %2813 = vst.msk [vmem:[%s422 + $0x10] sm:$0xff] %vm2810, -inf
          %2814 = vst.msk [vmem:[%s422 + $0x18] sm:$0xff] %vm2810, -inf
          %2815 = vst.msk [vmem:[%s422 + $0x20] sm:$0xff] %vm2810, -inf
          %2816 = vst.msk [vmem:[%s422 + $0x28] sm:$0xff] %vm2810, -inf
          %2817 = vst.msk [vmem:[%s422 + $0x30] sm:$0xff] %vm2810, -inf
          %2818 = vst.msk [vmem:[%s422 + $0x38] sm:$0xff] %vm2810, -inf
          %2819 = vst.msk [vmem:[%s422 + $0x40] sm:$0xff] %vm2810, -inf
          %2820 = vst.msk [vmem:[%s422 + $0x48] sm:$0xff] %vm2810, -inf
          %2821 = vst.msk [vmem:[%s422 + $0x50] sm:$0xff] %vm2810, -inf
          %2822 = vst.msk [vmem:[%s422 + $0x58] sm:$0xff] %vm2810, -inf
          %2823 = vst.msk [vmem:[%s422 + $0x60] sm:$0xff] %vm2810, -inf
          %2824 = vst.msk [vmem:[%s422 + $0x68] sm:$0xff] %vm2810, -inf
          %2825 = vst.msk [vmem:[%s422 + $0x70] sm:$0xff] %vm2810, -inf
          %2826 = vst.msk [vmem:[%s422 + $0x78] sm:$0xff] %vm2810, -inf
          %2827 = vst.msk [vmem:[%s422 + $0x80] sm:$0xff] %vm2810, -inf
          %2828 = vst.msk [vmem:[%s422 + $0x88] sm:$0xff] %vm2810, -inf
          %2829 = vst.msk [vmem:[%s422 + $0x90] sm:$0xff] %vm2810, -inf
          %2830 = vst.msk [vmem:[%s422 + $0x98] sm:$0xff] %vm2810, -inf
          %2831 = vst.msk [vmem:[%s422 + $0xa0] sm:$0xff] %vm2810, -inf
          %2832 = vst.msk [vmem:[%s422 + $0xa8] sm:$0xff] %vm2810, -inf
          %2833 = vst.msk [vmem:[%s422 + $0xb0] sm:$0xff] %vm2810, -inf
          %2834 = vst.msk [vmem:[%s422 + $0xb8] sm:$0xff] %vm2810, -inf
          %2835 = vst.msk [vmem:[%s422 + $0xc0] sm:$0xff] %vm2810, -inf
          %2836 = vst.msk [vmem:[%s422 + $0xc8] sm:$0xff] %vm2810, -inf
          %2837 = vst.msk [vmem:[%s422 + $0xd0] sm:$0xff] %vm2810, -inf
          %2838 = vst.msk [vmem:[%s422 + $0xd8] sm:$0xff] %vm2810, -inf
          %2839 = vst.msk [vmem:[%s422 + $0xe0] sm:$0xff] %vm2810, -inf
          %2840 = vst.msk [vmem:[%s422 + $0xe8] sm:$0xff] %vm2810, -inf
          %2841 = vst.msk [vmem:[%s422 + $0xf0] sm:$0xff] %vm2810, -inf
          %2842 = vst.msk [vmem:[%s422 + $0xf8] sm:$0xff] %vm2810, -inf
          %2843 = vst.msk [vmem:[%s422 + $0x100] sm:$0xff] %vm2810, -inf
          %2844 = vst.msk [vmem:[%s422 + $0x108] sm:$0xff] %vm2810, -inf
          %2845 = vst.msk [vmem:[%s422 + $0x110] sm:$0xff] %vm2810, -inf
          %2846 = vst.msk [vmem:[%s422 + $0x118] sm:$0xff] %vm2810, -inf
          %2847 = vst.msk [vmem:[%s422 + $0x120] sm:$0xff] %vm2810, -inf
          %2848 = vst.msk [vmem:[%s422 + $0x128] sm:$0xff] %vm2810, -inf
          %2849 = vst.msk [vmem:[%s422 + $0x130] sm:$0xff] %vm2810, -inf
          %2850 = vst.msk [vmem:[%s422 + $0x138] sm:$0xff] %vm2810, -inf
          %2851 = vst.msk [vmem:[%s422 + $0x140] sm:$0xff] %vm2810, -inf
          %2852 = vst.msk [vmem:[%s422 + $0x148] sm:$0xff] %vm2810, -inf
          %2853 = vst.msk [vmem:[%s422 + $0x150] sm:$0xff] %vm2810, -inf
          %2854 = vst.msk [vmem:[%s422 + $0x158] sm:$0xff] %vm2810, -inf
          %2855 = vst.msk [vmem:[%s422 + $0x160] sm:$0xff] %vm2810, -inf
          %2856 = vst.msk [vmem:[%s422 + $0x168] sm:$0xff] %vm2810, -inf
          %2857 = vst.msk [vmem:[%s422 + $0x170] sm:$0xff] %vm2810, -inf
          %2858 = vst.msk [vmem:[%s422 + $0x178] sm:$0xff] %vm2810, -inf
          %2859 = vst.msk [vmem:[%s422 + $0x180] sm:$0xff] %vm2810, -inf
          %2860 = vst.msk [vmem:[%s422 + $0x188] sm:$0xff] %vm2810, -inf
          %2861 = vst.msk [vmem:[%s422 + $0x190] sm:$0xff] %vm2810, -inf
          %2862 = vst.msk [vmem:[%s422 + $0x198] sm:$0xff] %vm2810, -inf
          %2863 = vst.msk [vmem:[%s422 + $0x1a0] sm:$0xff] %vm2810, -inf
          %2864 = vst.msk [vmem:[%s422 + $0x1a8] sm:$0xff] %vm2810, -inf
          %2865 = vst.msk [vmem:[%s422 + $0x1b0] sm:$0xff] %vm2810, -inf
          %2866 = vst.msk [vmem:[%s422 + $0x1b8] sm:$0xff] %vm2810, -inf
          %2867 = vst.msk [vmem:[%s422 + $0x1c0] sm:$0xff] %vm2810, -inf
          %2868 = vst.msk [vmem:[%s422 + $0x1c8] sm:$0xff] %vm2810, -inf
          %2869 = vst.msk [vmem:[%s422 + $0x1d0] sm:$0xff] %vm2810, -inf
          %2870 = vst.msk [vmem:[%s422 + $0x1d8] sm:$0xff] %vm2810, -inf
          %2871 = vst.msk [vmem:[%s422 + $0x1e0] sm:$0xff] %vm2810, -inf
          %2872 = vst.msk [vmem:[%s422 + $0x1e8] sm:$0xff] %vm2810, -inf
          %2873 = vst.msk [vmem:[%s422 + $0x1f0] sm:$0xff] %vm2810, -inf
          %2874 = vst.msk [vmem:[%s422 + $0x1f8] sm:$0xff] %vm2810, -inf
          %2875 = vst.msk [vmem:[%s422 + $0x200] sm:$0xff] %vm2810, -inf
          %2876 = vst.msk [vmem:[%s422 + $0x208] sm:$0xff] %vm2810, -inf
          %2877 = vst.msk [vmem:[%s422 + $0x210] sm:$0xff] %vm2810, -inf
          %2878 = vst.msk [vmem:[%s422 + $0x218] sm:$0xff] %vm2810, -inf
          %2879 = vst.msk [vmem:[%s422 + $0x220] sm:$0xff] %vm2810, -inf
          %2880 = vst.msk [vmem:[%s422 + $0x228] sm:$0xff] %vm2810, -inf
          %2881 = vst.msk [vmem:[%s422 + $0x230] sm:$0xff] %vm2810, -inf
          %2882 = vst.msk [vmem:[%s422 + $0x238] sm:$0xff] %vm2810, -inf
          %2883 = vst.msk [vmem:[%s422 + $0x240] sm:$0xff] %vm2810, -inf
          %2884 = vst.msk [vmem:[%s422 + $0x248] sm:$0xff] %vm2810, -inf
          %2885 = vst.msk [vmem:[%s422 + $0x250] sm:$0xff] %vm2810, -inf
          %2886 = vst.msk [vmem:[%s422 + $0x258] sm:$0xff] %vm2810, -inf
          %2887 = vst.msk [vmem:[%s422 + $0x260] sm:$0xff] %vm2810, -inf
          %2888 = vst.msk [vmem:[%s422 + $0x268] sm:$0xff] %vm2810, -inf
          %2889 = vst.msk [vmem:[%s422 + $0x270] sm:$0xff] %vm2810, -inf
          %2890 = vst.msk [vmem:[%s422 + $0x278] sm:$0xff] %vm2810, -inf
          %2891 = vst.msk [vmem:[%s422 + $0x280] sm:$0xff] %vm2810, -inf
          %2892 = vst.msk [vmem:[%s422 + $0x288] sm:$0xff] %vm2810, -inf
          %2893 = vst.msk [vmem:[%s422 + $0x290] sm:$0xff] %vm2810, -inf
          %2894 = vst.msk [vmem:[%s422 + $0x298] sm:$0xff] %vm2810, -inf
          %2895 = vst.msk [vmem:[%s422 + $0x2a0] sm:$0xff] %vm2810, -inf
          %2896 = vst.msk [vmem:[%s422 + $0x2a8] sm:$0xff] %vm2810, -inf
          %2897 = vst.msk [vmem:[%s422 + $0x2b0] sm:$0xff] %vm2810, -inf
          %2898 = vst.msk [vmem:[%s422 + $0x2b8] sm:$0xff] %vm2810, -inf
          %2899 = vst.msk [vmem:[%s422 + $0x2c0] sm:$0xff] %vm2810, -inf
          %2900 = vst.msk [vmem:[%s422 + $0x2c8] sm:$0xff] %vm2810, -inf
          %2901 = vst.msk [vmem:[%s422 + $0x2d0] sm:$0xff] %vm2810, -inf
          %2902 = vst.msk [vmem:[%s422 + $0x2d8] sm:$0xff] %vm2810, -inf
          %2903 = vst.msk [vmem:[%s422 + $0x2e0] sm:$0xff] %vm2810, -inf
          %2904 = vst.msk [vmem:[%s422 + $0x2e8] sm:$0xff] %vm2810, -inf
          %2905 = vst.msk [vmem:[%s422 + $0x2f0] sm:$0xff] %vm2810, -inf
          %2906 = vst.msk [vmem:[%s422 + $0x2f8] sm:$0xff] %vm2810, -inf
          %2907 = vst.msk [vmem:[%s422 + $0x300] sm:$0xff] %vm2810, -inf
          %2908 = vst.msk [vmem:[%s422 + $0x308] sm:$0xff] %vm2810, -inf
          %2909 = vst.msk [vmem:[%s422 + $0x310] sm:$0xff] %vm2810, -inf
          %2910 = vst.msk [vmem:[%s422 + $0x318] sm:$0xff] %vm2810, -inf
          %2911 = vst.msk [vmem:[%s422 + $0x320] sm:$0xff] %vm2810, -inf
          %2912 = vst.msk [vmem:[%s422 + $0x328] sm:$0xff] %vm2810, -inf
          %2913 = vst.msk [vmem:[%s422 + $0x330] sm:$0xff] %vm2810, -inf
          %2914 = vst.msk [vmem:[%s422 + $0x338] sm:$0xff] %vm2810, -inf
          %2915 = vst.msk [vmem:[%s422 + $0x340] sm:$0xff] %vm2810, -inf
          %2916 = vst.msk [vmem:[%s422 + $0x348] sm:$0xff] %vm2810, -inf
          %2917 = vst.msk [vmem:[%s422 + $0x350] sm:$0xff] %vm2810, -inf
          %2918 = vst.msk [vmem:[%s422 + $0x358] sm:$0xff] %vm2810, -inf
          %2919 = vst.msk [vmem:[%s422 + $0x360] sm:$0xff] %vm2810, -inf
          %2920 = vst.msk [vmem:[%s422 + $0x368] sm:$0xff] %vm2810, -inf
          %2921 = vst.msk [vmem:[%s422 + $0x370] sm:$0xff] %vm2810, -inf
          %2922 = vst.msk [vmem:[%s422 + $0x378] sm:$0xff] %vm2810, -inf
          %2923 = vst.msk [vmem:[%s422 + $0x380] sm:$0xff] %vm2810, -inf
          %2924 = vst.msk [vmem:[%s422 + $0x388] sm:$0xff] %vm2810, -inf
          %2925 = vst.msk [vmem:[%s422 + $0x390] sm:$0xff] %vm2810, -inf
          %2926 = vst.msk [vmem:[%s422 + $0x398] sm:$0xff] %vm2810, -inf
          %2927 = vst.msk [vmem:[%s422 + $0x3a0] sm:$0xff] %vm2810, -inf
          %2928 = vst.msk [vmem:[%s422 + $0x3a8] sm:$0xff] %vm2810, -inf
          %2929 = vst.msk [vmem:[%s422 + $0x3b0] sm:$0xff] %vm2810, -inf
          %2930 = vst.msk [vmem:[%s422 + $0x3b8] sm:$0xff] %vm2810, -inf
          %2931 = vst.msk [vmem:[%s422 + $0x3c0] sm:$0xff] %vm2810, -inf
          %2932 = vst.msk [vmem:[%s422 + $0x3c8] sm:$0xff] %vm2810, -inf
          %2933 = vst.msk [vmem:[%s422 + $0x3d0] sm:$0xff] %vm2810, -inf
          %2934 = vst.msk [vmem:[%s422 + $0x3d8] sm:$0xff] %vm2810, -inf
          %2935 = vst.msk [vmem:[%s422 + $0x3e0] sm:$0xff] %vm2810, -inf
          %2936 = vst.msk [vmem:[%s422 + $0x3e8] sm:$0xff] %vm2810, -inf
          %2937 = vst.msk [vmem:[%s422 + $0x3f0] sm:$0xff] %vm2810, -inf
          %2938 = vst.msk [vmem:[%s422 + $0x3f8] sm:$0xff] %vm2810, -inf
        $region76: #{_lambda_.2} parent=47 // pred_fallthru
          _
        %v2939 = vld [vmem:[%s422] sm:$0xff]
        %v2940 = vld [vmem:[%s422 + $0x8] sm:$0xff]
        %v2941 = vld [vmem:[%s422 + $0x10] sm:$0xff]
        %v2942 = vld [vmem:[%s422 + $0x18] sm:$0xff]
        %v2943 = vld [vmem:[%s422 + $0x20] sm:$0xff]
        %v2944 = vld [vmem:[%s422 + $0x28] sm:$0xff]
        %v2945 = vld [vmem:[%s422 + $0x30] sm:$0xff]
        %v2946 = vld [vmem:[%s422 + $0x38] sm:$0xff]
        %v2947 = vld [vmem:[%s422 + $0x40] sm:$0xff]
        %v2948 = vld [vmem:[%s422 + $0x48] sm:$0xff]
        %v2949 = vld [vmem:[%s422 + $0x50] sm:$0xff]
        %v2950 = vld [vmem:[%s422 + $0x58] sm:$0xff]
        %v2951 = vld [vmem:[%s422 + $0x60] sm:$0xff]
        %v2952 = vld [vmem:[%s422 + $0x68] sm:$0xff]
        %v2953 = vld [vmem:[%s422 + $0x70] sm:$0xff]
        %v2954 = vld [vmem:[%s422 + $0x78] sm:$0xff]
        %v2955 = vld [vmem:[%s422 + $0x80] sm:$0xff]
        %v2956 = vld [vmem:[%s422 + $0x88] sm:$0xff]
        %v2957 = vld [vmem:[%s422 + $0x90] sm:$0xff]
        %v2958 = vld [vmem:[%s422 + $0x98] sm:$0xff]
        %v2959 = vld [vmem:[%s422 + $0xa0] sm:$0xff]
        %v2960 = vld [vmem:[%s422 + $0xa8] sm:$0xff]
        %v2961 = vld [vmem:[%s422 + $0xb0] sm:$0xff]
        %v2962 = vld [vmem:[%s422 + $0xb8] sm:$0xff]
        %v2963 = vld [vmem:[%s422 + $0xc0] sm:$0xff]
        %v2964 = vld [vmem:[%s422 + $0xc8] sm:$0xff]
        %v2965 = vld [vmem:[%s422 + $0xd0] sm:$0xff]
        %v2966 = vld [vmem:[%s422 + $0xd8] sm:$0xff]
        %v2967 = vld [vmem:[%s422 + $0xe0] sm:$0xff]
        %v2968 = vld [vmem:[%s422 + $0xe8] sm:$0xff]
        %v2969 = vld [vmem:[%s422 + $0xf0] sm:$0xff]
        %v2970 = vld [vmem:[%s422 + $0xf8] sm:$0xff]
        %v2971 = vld [vmem:[%s422 + $0x100] sm:$0xff]
        %v2972 = vld [vmem:[%s422 + $0x108] sm:$0xff]
        %v2973 = vld [vmem:[%s422 + $0x110] sm:$0xff]
        %v2974 = vld [vmem:[%s422 + $0x118] sm:$0xff]
        %v2975 = vld [vmem:[%s422 + $0x120] sm:$0xff]
        %v2976 = vld [vmem:[%s422 + $0x128] sm:$0xff]
        %v2977 = vld [vmem:[%s422 + $0x130] sm:$0xff]
        %v2978 = vld [vmem:[%s422 + $0x138] sm:$0xff]
        %v2979 = vld [vmem:[%s422 + $0x140] sm:$0xff]
        %v2980 = vld [vmem:[%s422 + $0x148] sm:$0xff]
        %v2981 = vld [vmem:[%s422 + $0x150] sm:$0xff]
        %v2982 = vld [vmem:[%s422 + $0x158] sm:$0xff]
        %v2983 = vld [vmem:[%s422 + $0x160] sm:$0xff]
        %v2984 = vld [vmem:[%s422 + $0x168] sm:$0xff]
        %v2985 = vld [vmem:[%s422 + $0x170] sm:$0xff]
        %v2986 = vld [vmem:[%s422 + $0x178] sm:$0xff]
        %v2987 = vld [vmem:[%s422 + $0x180] sm:$0xff]
        %v2988 = vld [vmem:[%s422 + $0x188] sm:$0xff]
        %v2989 = vld [vmem:[%s422 + $0x190] sm:$0xff]
        %v2990 = vld [vmem:[%s422 + $0x198] sm:$0xff]
        %v2991 = vld [vmem:[%s422 + $0x1a0] sm:$0xff]
        %v2992 = vld [vmem:[%s422 + $0x1a8] sm:$0xff]
        %v2993 = vld [vmem:[%s422 + $0x1b0] sm:$0xff]
        %v2994 = vld [vmem:[%s422 + $0x1b8] sm:$0xff]
        %v2995 = vld [vmem:[%s422 + $0x1c0] sm:$0xff]
        %v2996 = vld [vmem:[%s422 + $0x1c8] sm:$0xff]
        %v2997 = vld [vmem:[%s422 + $0x1d0] sm:$0xff]
        %v2998 = vld [vmem:[%s422 + $0x1d8] sm:$0xff]
        %v2999 = vld [vmem:[%s422 + $0x1e0] sm:$0xff]
        %v3000 = vld [vmem:[%s422 + $0x1e8] sm:$0xff]
        %v3001 = vld [vmem:[%s422 + $0x1f0] sm:$0xff]
        %v3002 = vld [vmem:[%s422 + $0x1f8] sm:$0xff]
        %v3003 = vld [vmem:[%s422 + $0x200] sm:$0xff]
        %v3004 = vld [vmem:[%s422 + $0x208] sm:$0xff]
        %v3005 = vld [vmem:[%s422 + $0x210] sm:$0xff]
        %v3006 = vld [vmem:[%s422 + $0x218] sm:$0xff]
        %v3007 = vld [vmem:[%s422 + $0x220] sm:$0xff]
        %v3008 = vld [vmem:[%s422 + $0x228] sm:$0xff]
        %v3009 = vld [vmem:[%s422 + $0x230] sm:$0xff]
        %v3010 = vld [vmem:[%s422 + $0x238] sm:$0xff]
        %v3011 = vld [vmem:[%s422 + $0x240] sm:$0xff]
        %v3012 = vld [vmem:[%s422 + $0x248] sm:$0xff]
        %v3013 = vld [vmem:[%s422 + $0x250] sm:$0xff]
        %v3014 = vld [vmem:[%s422 + $0x258] sm:$0xff]
        %v3015 = vld [vmem:[%s422 + $0x260] sm:$0xff]
        %v3016 = vld [vmem:[%s422 + $0x268] sm:$0xff]
        %v3017 = vld [vmem:[%s422 + $0x270] sm:$0xff]
        %v3018 = vld [vmem:[%s422 + $0x278] sm:$0xff]
        %v3019 = vld [vmem:[%s422 + $0x280] sm:$0xff]
        %v3020 = vld [vmem:[%s422 + $0x288] sm:$0xff]
        %v3021 = vld [vmem:[%s422 + $0x290] sm:$0xff]
        %v3022 = vld [vmem:[%s422 + $0x298] sm:$0xff]
        %v3023 = vld [vmem:[%s422 + $0x2a0] sm:$0xff]
        %v3024 = vld [vmem:[%s422 + $0x2a8] sm:$0xff]
        %v3025 = vld [vmem:[%s422 + $0x2b0] sm:$0xff]
        %v3026 = vld [vmem:[%s422 + $0x2b8] sm:$0xff]
        %v3027 = vld [vmem:[%s422 + $0x2c0] sm:$0xff]
        %v3028 = vld [vmem:[%s422 + $0x2c8] sm:$0xff]
        %v3029 = vld [vmem:[%s422 + $0x2d0] sm:$0xff]
        %v3030 = vld [vmem:[%s422 + $0x2d8] sm:$0xff]
        %v3031 = vld [vmem:[%s422 + $0x2e0] sm:$0xff]
        %v3032 = vld [vmem:[%s422 + $0x2e8] sm:$0xff]
        %v3033 = vld [vmem:[%s422 + $0x2f0] sm:$0xff]
        %v3034 = vld [vmem:[%s422 + $0x2f8] sm:$0xff]
        %v3035 = vld [vmem:[%s422 + $0x300] sm:$0xff]
        %v3036 = vld [vmem:[%s422 + $0x308] sm:$0xff]
        %v3037 = vld [vmem:[%s422 + $0x310] sm:$0xff]
        %v3038 = vld [vmem:[%s422 + $0x318] sm:$0xff]
        %v3039 = vld [vmem:[%s422 + $0x320] sm:$0xff]
        %v3040 = vld [vmem:[%s422 + $0x328] sm:$0xff]
        %v3041 = vld [vmem:[%s422 + $0x330] sm:$0xff]
        %v3042 = vld [vmem:[%s422 + $0x338] sm:$0xff]
        %v3043 = vld [vmem:[%s422 + $0x340] sm:$0xff]
        %v3044 = vld [vmem:[%s422 + $0x348] sm:$0xff]
        %v3045 = vld [vmem:[%s422 + $0x350] sm:$0xff]
        %v3046 = vld [vmem:[%s422 + $0x358] sm:$0xff]
        %v3047 = vld [vmem:[%s422 + $0x360] sm:$0xff]
        %v3048 = vld [vmem:[%s422 + $0x368] sm:$0xff]
        %v3049 = vld [vmem:[%s422 + $0x370] sm:$0xff]
        %v3050 = vld [vmem:[%s422 + $0x378] sm:$0xff]
        %v3051 = vld [vmem:[%s422 + $0x380] sm:$0xff]
        %v3052 = vld [vmem:[%s422 + $0x388] sm:$0xff]
        %v3053 = vld [vmem:[%s422 + $0x390] sm:$0xff]
        %v3054 = vld [vmem:[%s422 + $0x398] sm:$0xff]
        %v3055 = vld [vmem:[%s422 + $0x3a0] sm:$0xff]
        %v3056 = vld [vmem:[%s422 + $0x3a8] sm:$0xff]
        %v3057 = vld [vmem:[%s422 + $0x3b0] sm:$0xff]
        %v3058 = vld [vmem:[%s422 + $0x3b8] sm:$0xff]
        %v3059 = vld [vmem:[%s422 + $0x3c0] sm:$0xff]
        %v3060 = vld [vmem:[%s422 + $0x3c8] sm:$0xff]
        %v3061 = vld [vmem:[%s422 + $0x3d0] sm:$0xff]
        %v3062 = vld [vmem:[%s422 + $0x3d8] sm:$0xff]
        %v3063 = vld [vmem:[%s422 + $0x3e0] sm:$0xff]
        %v3064 = vld [vmem:[%s422 + $0x3e8] sm:$0xff]
        %v3065 = vld [vmem:[%s422 + $0x3f0] sm:$0xff]
        %v3066 = vld [vmem:[%s422 + $0x3f8] sm:$0xff]
        %v3067 = vmax.f32 %v2939, %v2424
        %v3068 = vmax.f32 %v2940, %v2427
        %v3069 = vmax.f32 %v2941, %v2430
        %v3070 = vmax.f32 %v2942, %v2433
        %v3071 = vmax.f32 %v2943, %v2436
        %v3072 = vmax.f32 %v2944, %v2439
        %v3073 = vmax.f32 %v2945, %v2442
        %v3074 = vmax.f32 %v2946, %v2445
        %v3075 = vmax.f32 %v2947, %v2448
        %v3076 = vmax.f32 %v2948, %v2451
        %v3077 = vmax.f32 %v2949, %v2454
        %v3078 = vmax.f32 %v2950, %v2457
        %v3079 = vmax.f32 %v2951, %v2460
        %v3080 = vmax.f32 %v2952, %v2463
        %v3081 = vmax.f32 %v2953, %v2466
        %v3082 = vmax.f32 %v2954, %v2469
        %v3083 = vmax.f32 %v2955, %v2472
        %v3084 = vmax.f32 %v2956, %v2475
        %v3085 = vmax.f32 %v2957, %v2478
        %v3086 = vmax.f32 %v2958, %v2481
        %v3087 = vmax.f32 %v2959, %v2484
        %v3088 = vmax.f32 %v2960, %v2487
        %v3089 = vmax.f32 %v2961, %v2490
        %v3090 = vmax.f32 %v2962, %v2493
        %v3091 = vmax.f32 %v2963, %v2496
        %v3092 = vmax.f32 %v2964, %v2499
        %v3093 = vmax.f32 %v2965, %v2502
        %v3094 = vmax.f32 %v2966, %v2505
        %v3095 = vmax.f32 %v2967, %v2508
        %v3096 = vmax.f32 %v2968, %v2511
        %v3097 = vmax.f32 %v2969, %v2514
        %v3098 = vmax.f32 %v2970, %v2517
        %v3099 = vmax.f32 %v2971, %v2520
        %v3100 = vmax.f32 %v2972, %v2523
        %v3101 = vmax.f32 %v2973, %v2526
        %v3102 = vmax.f32 %v2974, %v2529
        %v3103 = vmax.f32 %v2975, %v2532
        %v3104 = vmax.f32 %v2976, %v2535
        %v3105 = vmax.f32 %v2977, %v2538
        %v3106 = vmax.f32 %v2978, %v2541
        %v3107 = vmax.f32 %v2979, %v2544
        %v3108 = vmax.f32 %v2980, %v2547
        %v3109 = vmax.f32 %v2981, %v2550
        %v3110 = vmax.f32 %v2982, %v2553
        %v3111 = vmax.f32 %v2983, %v2556
        %v3112 = vmax.f32 %v2984, %v2559
        %v3113 = vmax.f32 %v2985, %v2562
        %v3114 = vmax.f32 %v2986, %v2565
        %v3115 = vmax.f32 %v2987, %v2568
        %v3116 = vmax.f32 %v2988, %v2571
        %v3117 = vmax.f32 %v2989, %v2574
        %v3118 = vmax.f32 %v2990, %v2577
        %v3119 = vmax.f32 %v2991, %v2580
        %v3120 = vmax.f32 %v2992, %v2583
        %v3121 = vmax.f32 %v2993, %v2586
        %v3122 = vmax.f32 %v2994, %v2589
        %v3123 = vmax.f32 %v2995, %v2592
        %v3124 = vmax.f32 %v2996, %v2595
        %v3125 = vmax.f32 %v2997, %v2598
        %v3126 = vmax.f32 %v2998, %v2601
        %v3127 = vmax.f32 %v2999, %v2604
        %v3128 = vmax.f32 %v3000, %v2607
        %v3129 = vmax.f32 %v3001, %v2610
        %v3130 = vmax.f32 %v3002, %v2613
        %v3131 = vmax.f32 %v3003, %v2616
        %v3132 = vmax.f32 %v3004, %v2619
        %v3133 = vmax.f32 %v3005, %v2622
        %v3134 = vmax.f32 %v3006, %v2625
        %v3135 = vmax.f32 %v3007, %v2628
        %v3136 = vmax.f32 %v3008, %v2631
        %v3137 = vmax.f32 %v3009, %v2634
        %v3138 = vmax.f32 %v3010, %v2637
        %v3139 = vmax.f32 %v3011, %v2640
        %v3140 = vmax.f32 %v3012, %v2643
        %v3141 = vmax.f32 %v3013, %v2646
        %v3142 = vmax.f32 %v3014, %v2649
        %v3143 = vmax.f32 %v3015, %v2652
        %v3144 = vmax.f32 %v3016, %v2655
        %v3145 = vmax.f32 %v3017, %v2658
        %v3146 = vmax.f32 %v3018, %v2661
        %v3147 = vmax.f32 %v3019, %v2664
        %v3148 = vmax.f32 %v3020, %v2667
        %v3149 = vmax.f32 %v3021, %v2670
        %v3150 = vmax.f32 %v3022, %v2673
        %v3151 = vmax.f32 %v3023, %v2676
        %v3152 = vmax.f32 %v3024, %v2679
        %v3153 = vmax.f32 %v3025, %v2682
        %v3154 = vmax.f32 %v3026, %v2685
        %v3155 = vmax.f32 %v3027, %v2688
        %v3156 = vmax.f32 %v3028, %v2691
        %v3157 = vmax.f32 %v3029, %v2694
        %v3158 = vmax.f32 %v3030, %v2697
        %v3159 = vmax.f32 %v3031, %v2700
        %v3160 = vmax.f32 %v3032, %v2703
        %v3161 = vmax.f32 %v3033, %v2706
        %v3162 = vmax.f32 %v3034, %v2709
        %v3163 = vmax.f32 %v3035, %v2712
        %v3164 = vmax.f32 %v3036, %v2715
        %v3165 = vmax.f32 %v3037, %v2718
        %v3166 = vmax.f32 %v3038, %v2721
        %v3167 = vmax.f32 %v3039, %v2724
        %v3168 = vmax.f32 %v3040, %v2727
        %v3169 = vmax.f32 %v3041, %v2730
        %v3170 = vmax.f32 %v3042, %v2733
        %v3171 = vmax.f32 %v3043, %v2736
        %v3172 = vmax.f32 %v3044, %v2739
        %v3173 = vmax.f32 %v3045, %v2742
        %v3174 = vmax.f32 %v3046, %v2745
        %v3175 = vmax.f32 %v3047, %v2748
        %v3176 = vmax.f32 %v3048, %v2751
        %v3177 = vmax.f32 %v3049, %v2754
        %v3178 = vmax.f32 %v3050, %v2757
        %v3179 = vmax.f32 %v3051, %v2760
        %v3180 = vmax.f32 %v3052, %v2763
        %v3181 = vmax.f32 %v3053, %v2766
        %v3182 = vmax.f32 %v3054, %v2769
        %v3183 = vmax.f32 %v3055, %v2772
        %v3184 = vmax.f32 %v3056, %v2775
        %v3185 = vmax.f32 %v3057, %v2778
        %v3186 = vmax.f32 %v3058, %v2781
        %v3187 = vmax.f32 %v3059, %v2784
        %v3188 = vmax.f32 %v3060, %v2787
        %v3189 = vmax.f32 %v3061, %v2790
        %v3190 = vmax.f32 %v3062, %v2793
        %v3191 = vmax.f32 %v3063, %v2796
        %v3192 = vmax.f32 %v3064, %v2799
        %v3193 = vmax.f32 %v3065, %v2802
        %v3194 = vmax.f32 %v3066, %v2805
        %vm3195 = vcmask 7168
        %3196 = vst.msk [vmem:[%s422] sm:$0xff] %vm3195, %v3067
        %3197 = vst.msk [vmem:[%s422 + $0x8] sm:$0xff] %vm3195, %v3068
        %3198 = vst.msk [vmem:[%s422 + $0x10] sm:$0xff] %vm3195, %v3069
        %3199 = vst.msk [vmem:[%s422 + $0x18] sm:$0xff] %vm3195, %v3070
        %3200 = vst.msk [vmem:[%s422 + $0x20] sm:$0xff] %vm3195, %v3071
        %3201 = vst.msk [vmem:[%s422 + $0x28] sm:$0xff] %vm3195, %v3072
        %3202 = vst.msk [vmem:[%s422 + $0x30] sm:$0xff] %vm3195, %v3073
        %3203 = vst.msk [vmem:[%s422 + $0x38] sm:$0xff] %vm3195, %v3074
        %3204 = vst.msk [vmem:[%s422 + $0x40] sm:$0xff] %vm3195, %v3075
        %3205 = vst.msk [vmem:[%s422 + $0x48] sm:$0xff] %vm3195, %v3076
        %3206 = vst.msk [vmem:[%s422 + $0x50] sm:$0xff] %vm3195, %v3077
        %3207 = vst.msk [vmem:[%s422 + $0x58] sm:$0xff] %vm3195, %v3078
        %3208 = vst.msk [vmem:[%s422 + $0x60] sm:$0xff] %vm3195, %v3079
        %3209 = vst.msk [vmem:[%s422 + $0x68] sm:$0xff] %vm3195, %v3080
        %3210 = vst.msk [vmem:[%s422 + $0x70] sm:$0xff] %vm3195, %v3081
        %3211 = vst.msk [vmem:[%s422 + $0x78] sm:$0xff] %vm3195, %v3082
        %3212 = vst.msk [vmem:[%s422 + $0x80] sm:$0xff] %vm3195, %v3083
        %3213 = vst.msk [vmem:[%s422 + $0x88] sm:$0xff] %vm3195, %v3084
        %3214 = vst.msk [vmem:[%s422 + $0x90] sm:$0xff] %vm3195, %v3085
        %3215 = vst.msk [vmem:[%s422 + $0x98] sm:$0xff] %vm3195, %v3086
        %3216 = vst.msk [vmem:[%s422 + $0xa0] sm:$0xff] %vm3195, %v3087
        %3217 = vst.msk [vmem:[%s422 + $0xa8] sm:$0xff] %vm3195, %v3088
        %3218 = vst.msk [vmem:[%s422 + $0xb0] sm:$0xff] %vm3195, %v3089
        %3219 = vst.msk [vmem:[%s422 + $0xb8] sm:$0xff] %vm3195, %v3090
        %3220 = vst.msk [vmem:[%s422 + $0xc0] sm:$0xff] %vm3195, %v3091
        %3221 = vst.msk [vmem:[%s422 + $0xc8] sm:$0xff] %vm3195, %v3092
        %3222 = vst.msk [vmem:[%s422 + $0xd0] sm:$0xff] %vm3195, %v3093
        %3223 = vst.msk [vmem:[%s422 + $0xd8] sm:$0xff] %vm3195, %v3094
        %3224 = vst.msk [vmem:[%s422 + $0xe0] sm:$0xff] %vm3195, %v3095
        %3225 = vst.msk [vmem:[%s422 + $0xe8] sm:$0xff] %vm3195, %v3096
        %3226 = vst.msk [vmem:[%s422 + $0xf0] sm:$0xff] %vm3195, %v3097
        %3227 = vst.msk [vmem:[%s422 + $0xf8] sm:$0xff] %vm3195, %v3098
        %3228 = vst.msk [vmem:[%s422 + $0x100] sm:$0xff] %vm3195, %v3099
        %3229 = vst.msk [vmem:[%s422 + $0x108] sm:$0xff] %vm3195, %v3100
        %3230 = vst.msk [vmem:[%s422 + $0x110] sm:$0xff] %vm3195, %v3101
        %3231 = vst.msk [vmem:[%s422 + $0x118] sm:$0xff] %vm3195, %v3102
        %3232 = vst.msk [vmem:[%s422 + $0x120] sm:$0xff] %vm3195, %v3103
        %3233 = vst.msk [vmem:[%s422 + $0x128] sm:$0xff] %vm3195, %v3104
        %3234 = vst.msk [vmem:[%s422 + $0x130] sm:$0xff] %vm3195, %v3105
        %3235 = vst.msk [vmem:[%s422 + $0x138] sm:$0xff] %vm3195, %v3106
        %3236 = vst.msk [vmem:[%s422 + $0x140] sm:$0xff] %vm3195, %v3107
        %3237 = vst.msk [vmem:[%s422 + $0x148] sm:$0xff] %vm3195, %v3108
        %3238 = vst.msk [vmem:[%s422 + $0x150] sm:$0xff] %vm3195, %v3109
        %3239 = vst.msk [vmem:[%s422 + $0x158] sm:$0xff] %vm3195, %v3110
        %3240 = vst.msk [vmem:[%s422 + $0x160] sm:$0xff] %vm3195, %v3111
        %3241 = vst.msk [vmem:[%s422 + $0x168] sm:$0xff] %vm3195, %v3112
        %3242 = vst.msk [vmem:[%s422 + $0x170] sm:$0xff] %vm3195, %v3113
        %3243 = vst.msk [vmem:[%s422 + $0x178] sm:$0xff] %vm3195, %v3114
        %3244 = vst.msk [vmem:[%s422 + $0x180] sm:$0xff] %vm3195, %v3115
        %3245 = vst.msk [vmem:[%s422 + $0x188] sm:$0xff] %vm3195, %v3116
        %3246 = vst.msk [vmem:[%s422 + $0x190] sm:$0xff] %vm3195, %v3117
        %3247 = vst.msk [vmem:[%s422 + $0x198] sm:$0xff] %vm3195, %v3118
        %3248 = vst.msk [vmem:[%s422 + $0x1a0] sm:$0xff] %vm3195, %v3119
        %3249 = vst.msk [vmem:[%s422 + $0x1a8] sm:$0xff] %vm3195, %v3120
        %3250 = vst.msk [vmem:[%s422 + $0x1b0] sm:$0xff] %vm3195, %v3121
        %3251 = vst.msk [vmem:[%s422 + $0x1b8] sm:$0xff] %vm3195, %v3122
        %3252 = vst.msk [vmem:[%s422 + $0x1c0] sm:$0xff] %vm3195, %v3123
        %3253 = vst.msk [vmem:[%s422 + $0x1c8] sm:$0xff] %vm3195, %v3124
        %3254 = vst.msk [vmem:[%s422 + $0x1d0] sm:$0xff] %vm3195, %v3125
        %3255 = vst.msk [vmem:[%s422 + $0x1d8] sm:$0xff] %vm3195, %v3126
        %3256 = vst.msk [vmem:[%s422 + $0x1e0] sm:$0xff] %vm3195, %v3127
        %3257 = vst.msk [vmem:[%s422 + $0x1e8] sm:$0xff] %vm3195, %v3128
        %3258 = vst.msk [vmem:[%s422 + $0x1f0] sm:$0xff] %vm3195, %v3129
        %3259 = vst.msk [vmem:[%s422 + $0x1f8] sm:$0xff] %vm3195, %v3130
        %3260 = vst.msk [vmem:[%s422 + $0x200] sm:$0xff] %vm3195, %v3131
        %3261 = vst.msk [vmem:[%s422 + $0x208] sm:$0xff] %vm3195, %v3132
        %3262 = vst.msk [vmem:[%s422 + $0x210] sm:$0xff] %vm3195, %v3133
        %3263 = vst.msk [vmem:[%s422 + $0x218] sm:$0xff] %vm3195, %v3134
        %3264 = vst.msk [vmem:[%s422 + $0x220] sm:$0xff] %vm3195, %v3135
        %3265 = vst.msk [vmem:[%s422 + $0x228] sm:$0xff] %vm3195, %v3136
        %3266 = vst.msk [vmem:[%s422 + $0x230] sm:$0xff] %vm3195, %v3137
        %3267 = vst.msk [vmem:[%s422 + $0x238] sm:$0xff] %vm3195, %v3138
        %3268 = vst.msk [vmem:[%s422 + $0x240] sm:$0xff] %vm3195, %v3139
        %3269 = vst.msk [vmem:[%s422 + $0x248] sm:$0xff] %vm3195, %v3140
        %3270 = vst.msk [vmem:[%s422 + $0x250] sm:$0xff] %vm3195, %v3141
        %3271 = vst.msk [vmem:[%s422 + $0x258] sm:$0xff] %vm3195, %v3142
        %3272 = vst.msk [vmem:[%s422 + $0x260] sm:$0xff] %vm3195, %v3143
        %3273 = vst.msk [vmem:[%s422 + $0x268] sm:$0xff] %vm3195, %v3144
        %3274 = vst.msk [vmem:[%s422 + $0x270] sm:$0xff] %vm3195, %v3145
        %3275 = vst.msk [vmem:[%s422 + $0x278] sm:$0xff] %vm3195, %v3146
        %3276 = vst.msk [vmem:[%s422 + $0x280] sm:$0xff] %vm3195, %v3147
        %3277 = vst.msk [vmem:[%s422 + $0x288] sm:$0xff] %vm3195, %v3148
        %3278 = vst.msk [vmem:[%s422 + $0x290] sm:$0xff] %vm3195, %v3149
        %3279 = vst.msk [vmem:[%s422 + $0x298] sm:$0xff] %vm3195, %v3150
        %3280 = vst.msk [vmem:[%s422 + $0x2a0] sm:$0xff] %vm3195, %v3151
        %3281 = vst.msk [vmem:[%s422 + $0x2a8] sm:$0xff] %vm3195, %v3152
        %3282 = vst.msk [vmem:[%s422 + $0x2b0] sm:$0xff] %vm3195, %v3153
        %3283 = vst.msk [vmem:[%s422 + $0x2b8] sm:$0xff] %vm3195, %v3154
        %3284 = vst.msk [vmem:[%s422 + $0x2c0] sm:$0xff] %vm3195, %v3155
        %3285 = vst.msk [vmem:[%s422 + $0x2c8] sm:$0xff] %vm3195, %v3156
        %3286 = vst.msk [vmem:[%s422 + $0x2d0] sm:$0xff] %vm3195, %v3157
        %3287 = vst.msk [vmem:[%s422 + $0x2d8] sm:$0xff] %vm3195, %v3158
        %3288 = vst.msk [vmem:[%s422 + $0x2e0] sm:$0xff] %vm3195, %v3159
        %3289 = vst.msk [vmem:[%s422 + $0x2e8] sm:$0xff] %vm3195, %v3160
        %3290 = vst.msk [vmem:[%s422 + $0x2f0] sm:$0xff] %vm3195, %v3161
        %3291 = vst.msk [vmem:[%s422 + $0x2f8] sm:$0xff] %vm3195, %v3162
        %3292 = vst.msk [vmem:[%s422 + $0x300] sm:$0xff] %vm3195, %v3163
        %3293 = vst.msk [vmem:[%s422 + $0x308] sm:$0xff] %vm3195, %v3164
        %3294 = vst.msk [vmem:[%s422 + $0x310] sm:$0xff] %vm3195, %v3165
        %3295 = vst.msk [vmem:[%s422 + $0x318] sm:$0xff] %vm3195, %v3166
        %3296 = vst.msk [vmem:[%s422 + $0x320] sm:$0xff] %vm3195, %v3167
        %3297 = vst.msk [vmem:[%s422 + $0x328] sm:$0xff] %vm3195, %v3168
        %3298 = vst.msk [vmem:[%s422 + $0x330] sm:$0xff] %vm3195, %v3169
        %3299 = vst.msk [vmem:[%s422 + $0x338] sm:$0xff] %vm3195, %v3170
        %3300 = vst.msk [vmem:[%s422 + $0x340] sm:$0xff] %vm3195, %v3171
        %3301 = vst.msk [vmem:[%s422 + $0x348] sm:$0xff] %vm3195, %v3172
        %3302 = vst.msk [vmem:[%s422 + $0x350] sm:$0xff] %vm3195, %v3173
        %3303 = vst.msk [vmem:[%s422 + $0x358] sm:$0xff] %vm3195, %v3174
        %3304 = vst.msk [vmem:[%s422 + $0x360] sm:$0xff] %vm3195, %v3175
        %3305 = vst.msk [vmem:[%s422 + $0x368] sm:$0xff] %vm3195, %v3176
        %3306 = vst.msk [vmem:[%s422 + $0x370] sm:$0xff] %vm3195, %v3177
        %3307 = vst.msk [vmem:[%s422 + $0x378] sm:$0xff] %vm3195, %v3178
        %3308 = vst.msk [vmem:[%s422 + $0x380] sm:$0xff] %vm3195, %v3179
        %3309 = vst.msk [vmem:[%s422 + $0x388] sm:$0xff] %vm3195, %v3180
        %3310 = vst.msk [vmem:[%s422 + $0x390] sm:$0xff] %vm3195, %v3181
        %3311 = vst.msk [vmem:[%s422 + $0x398] sm:$0xff] %vm3195, %v3182
        %3312 = vst.msk [vmem:[%s422 + $0x3a0] sm:$0xff] %vm3195, %v3183
        %3313 = vst.msk [vmem:[%s422 + $0x3a8] sm:$0xff] %vm3195, %v3184
        %3314 = vst.msk [vmem:[%s422 + $0x3b0] sm:$0xff] %vm3195, %v3185
        %3315 = vst.msk [vmem:[%s422 + $0x3b8] sm:$0xff] %vm3195, %v3186
        %3316 = vst.msk [vmem:[%s422 + $0x3c0] sm:$0xff] %vm3195, %v3187
        %3317 = vst.msk [vmem:[%s422 + $0x3c8] sm:$0xff] %vm3195, %v3188
        %3318 = vst.msk [vmem:[%s422 + $0x3d0] sm:$0xff] %vm3195, %v3189
        %3319 = vst.msk [vmem:[%s422 + $0x3d8] sm:$0xff] %vm3195, %v3190
        %3320 = vst.msk [vmem:[%s422 + $0x3e0] sm:$0xff] %vm3195, %v3191
        %3321 = vst.msk [vmem:[%s422 + $0x3e8] sm:$0xff] %vm3195, %v3192
        %3322 = vst.msk [vmem:[%s422 + $0x3f0] sm:$0xff] %vm3195, %v3193
        %3323 = vst.msk [vmem:[%s422 + $0x3f8] sm:$0xff] %vm3195, %v3194
        %p3324 = scmp.lt.s32.totalorder %s27, 0
        %s3325 = scalar_select %p3324, %s27, 0
        %p3326 = scmp.lt.s32.totalorder %s28, 1
        %s3327 = scalar_select %p3326, %s28, 1
        %s3328 = smul.addr %s3327, 128
        %s3329 = smul.addr %s3325, 256
        %s3330 = sadd.s32 %s3328, %s3329
        %s3331 = smul.addr %s3330, 8
        %s3332 = scalar_lea.vmem %s7, %s3331
        // Predicated region
        $region77: #{_lambda_.2} parent=47 // pred_check
          %p3333 = pneg %p217
        $region78: #{_lambda_.2} parent=47 // pred_check_branch
          %3335 = sbr.rel (%p3333) target = $region80
        $region79: #{_lambda_.2} parent=47 // pred_region
          _
        $region80: #{_lambda_.2} parent=47 // pred_fallthru
          _
      $region48: #{_lambda_.2} parent=5 // pred_fallthru
        _
      %p3336 = scmp.le.s32.totalorder 2, %s17
      // Predicated region
      $region81: #{_lambda_.2} parent=5 // pred_check
        %p3337 = pneg %p3336
      $region82: #{_lambda_.2} parent=5 // pred_check_branch
        %3339 = sbr.rel (%p3337) target = $region84
      $region83: #{_lambda_.2} parent=5 // pred_region
        %s3340 = ssub.s32 %s17, 2
        // Predicated region
        $region85: #{_lambda_.2} parent=83 // pred_check
          %p3341 = pneg %p223
        $region86: #{_lambda_.2} parent=83 // pred_check_branch
          %3343 = sbr.rel (%p3341) target = $region88
        $region87: #{_lambda_.2} parent=83 // pred_region
          %p3344 = scmp.lt.s32.totalorder %s30, 0
          %s3345 = scalar_select %p3344, %s30, 0
          %p3346 = scmp.lt.s32.totalorder %s31, 1
          %s3347 = scalar_select %p3346, %s31, 1
          %s3348 = smul.addr %s3347, 128
          %s3349 = smul.addr %s3345, 256
          %s3350 = sadd.s32 %s3348, %s3349
          %s3351 = smul.addr %s3350, 8
          %s3352 = scalar_lea.vmem %s7, %s3351
        $region88: #{_lambda_.2} parent=83 // pred_fallthru
          _
      $region84: #{_lambda_.2} parent=5 // pred_fallthru
        _
    $region6: #{_lambda_.2} parent=1 // loop_footer
      %s21 = sadd.s32 1, %s17
    $region7: #{_lambda_.2} parent=1 // loop_footer_branch
      %16 = sbr.rel target = $region3
    $region8: #{_lambda_.2} parent=1 // loop_exit
      _
    %3353 = vsyncpa [#allocation3], 1
    %s3354 = scalar_lea.sflag [#allocation3], 1
    %3355 = vsyncpa %s3354, 1
    %3356 = vsyncpa [#allocation5], 1
    %3357 = vsyncpa [#allocation8], 1
    %3358 = vsyncpa [#allocation11], 1

</llo_original>
